<compile_context>
chip_gen: v7x
topology: tpu7x:2x2x1
jax: 0.10.0
libtpu: 0.0.40
codegen_flags: <defaults>
</compile_context>

<pallas_src>
import functools

import jax
import jax.numpy as jnp
from jax import lax
from jax.experimental import pallas as pl
from jax.experimental.pallas import tpu as pltpu


def _conv_block_kernel(x_ref, w_ref, b_ref, o_ref, *, KH, KW, stride,
                       Hout, Wout, neg_slope):
    """Single invocation (no grid); all operands resident in VMEM.

    x_ref: (N, Cin, Hp, Wp)        reflect-padded input
    w_ref: (Cout, KH*KW*Cin)       weights, tap-major / channel-minor
    b_ref: (Cout, 1)               bias
    o_ref: (N, Cout, Hout*Wout)    NCHW-flat output
    """
    N = x_ref.shape[0]
    Cin = x_ref.shape[1]
    HW = Hout * Wout

    w = w_ref[...]                                    # (Cout, KH*KW*Cin)
    b = b_ref[...].astype(jnp.float32)                # (Cout, 1) -> lane broadcast

    for n in range(N):                                # static loop; N is tiny
        xn = x_ref[n]                                 # (Cin, Hp, Wp)

        # Build the im2col operand: 9 shifted slabs stacked along the K axis,
        # spatial (Hout*Wout) kept contiguous on the lane axis.
        slabs = []
        for kh in range(KH):
            for kw in range(KW):
                sl = lax.slice(
                    xn,
                    start_indices=(0, kh, kw),
                    limit_indices=(Cin,
                                   kh + (Hout - 1) * stride + 1,
                                   kw + (Wout - 1) * stride + 1),
                    strides=(1, stride, stride),
                )                                     # (Cin, Hout, Wout)
                slabs.append(sl.reshape(Cin, HW))
        patches = jnp.concatenate(slabs, axis=0)      # (KH*KW*Cin, HW)

        # Single K=KH*KW*Cin contraction; spatial axis on MXU-N / lanes.
        acc = jnp.dot(w, patches, preferred_element_type=jnp.float32)  # (Cout, HW)
        acc = acc + b
        acc = jnp.where(acc >= 0, acc, neg_slope * acc)                # LeakyReLU
        o_ref[n] = acc.astype(o_ref.dtype)


def conv_block(x_nchw, weight, bias, *, stride, padding, neg_slope=0.2):
    """Forward pass of ConvBlock. x_nchw: (N, Cin, H, W). Returns (N, Cout, Hout, Wout)."""
    N, Cin, H, W = x_nchw.shape
    Cout, Cin_w, KH, KW = weight.shape
    assert Cin_w == Cin

    # Reflect pad only (input stays NCHW -> no layout transposes feeding the kernel).
    x_pad = jnp.pad(
        x_nchw,
        ((0, 0), (0, 0), (padding, padding), (padding, padding)),
        mode="reflect",
    )
    Hp, Wp = H + 2 * padding, W + 2 * padding
    Hout = (Hp - KH) // stride + 1
    Wout = (Wp - KW) // stride + 1
    HW = Hout * Wout

    # Weights im2col'ed to (Cout, KH*KW*Cin), tap-major / channel-minor, matching
    # the order in which the kernel stacks the shifted slabs.
    w2 = jnp.transpose(weight, (0, 2, 3, 1)).reshape(Cout, KH * KW * Cin)
    b2 = bias.reshape(Cout, 1)

    kernel = functools.partial(
        _conv_block_kernel,
        KH=KH, KW=KW, stride=stride, Hout=Hout, Wout=Wout, neg_slope=neg_slope,
    )

    itemsize = jnp.dtype(x_nchw.dtype).itemsize
    cost = pl.CostEstimate(
        flops=2 * N * HW * Cin * Cout * KH * KW,
        transcendentals=0,
        bytes_accessed=(x_pad.size + w2.size + b2.size + N * Cout * HW) * itemsize,
    )

    out_flat = pl.pallas_call(
        kernel,
        out_shape=jax.ShapeDtypeStruct((N, Cout, HW), x_nchw.dtype),
        in_specs=[
            pl.BlockSpec(memory_space=pltpu.MemorySpace.VMEM),
            pl.BlockSpec(memory_space=pltpu.MemorySpace.VMEM),
            pl.BlockSpec(memory_space=pltpu.MemorySpace.VMEM),
        ],
        out_specs=pl.BlockSpec(memory_space=pltpu.MemorySpace.VMEM),
        cost_estimate=cost,
    )(x_pad, w2, b2)

    # NCHW-flat -> NCHW is a pure reshape (no transpose / HBM permute pass).
    return out_flat.reshape(N, Cout, Hout, Wout)


def _reference(x_nchw, weight, bias, *, stride, padding, neg_slope=0.2):
    """Pure-JAX reference (reflect pad + conv + leaky relu)."""
    x_pad = jnp.pad(
        x_nchw,
        ((0, 0), (0, 0), (padding, padding), (padding, padding)),
        mode="reflect",
    )
    y = lax.conv_general_dilated(
        x_pad, weight,
        window_strides=(stride, stride),
        padding="VALID",
        dimension_numbers=("NCHW", "OIHW", "NCHW"),
    ) + bias.reshape(1, -1, 1, 1)
    return jnp.where(y >= 0, y, neg_slope * y)


if __name__ == "__main__":
    # ConvBlock(in_channels=4, out_channels=8, kernel_size=3, stride=1, padding=1)
    N, Cin, H, W = 2, 4, 16, 16
    Cout, K, stride, padding = 8, 3, 1, 1

    key = jax.random.PRNGKey(0)
    kx, kw, kb = jax.random.split(key, 3)

    x = jax.random.normal(kx, (N, Cin, H, W), dtype=jnp.float32)

    # Deterministic kaiming_normal_(mode='fan_in', nonlinearity='leaky_relu'):
    # gain = sqrt(2 / (1 + a^2)) with torch default a=0.01; std = gain / sqrt(fan_in)
    fan_in = Cin * K * K
    gain = (2.0 / (1.0 + 0.01 ** 2)) ** 0.5
    std = gain / (fan_in ** 0.5)
    weight = std * jax.random.normal(kw, (Cout, Cin, K, K), dtype=jnp.float32)
    # Conv2d default bias init: U(-1/sqrt(fan_in), 1/sqrt(fan_in))
    bound = 1.0 / (fan_in ** 0.5)
    bias = jax.random.uniform(kb, (Cout,), minval=-bound, maxval=bound,
                              dtype=jnp.float32)

    out = conv_block(x, weight, bias, stride=stride, padding=padding)
    out = jax.block_until_ready(out)

    ref = _reference(x, weight, bias, stride=stride, padding=padding)
    assert out.shape == (N, Cout, H, W), out.shape
    assert jnp.allclose(out, ref, atol=1e-4, rtol=1e-4), \
        float(jnp.max(jnp.abs(out - ref)))

    print("KERNEL_OK")
</pallas_src>

<mosaic_0001>
module attributes {stable_mosaic.version = 11 : i64} {
  func.func @_conv_block_kernel(%arg0: memref<2x4x18x18xf32, #tpu.memory_space<vmem>>, %arg1: memref<8x36xf32, #tpu.memory_space<vmem>>, %arg2: memref<8x1xf32, #tpu.memory_space<vmem>>, %arg3: memref<2x8x256xf32, #tpu.memory_space<vmem>>) attributes {dimension_semantics = [], scalar_prefetch = 0 : i64, scratch_operands = 0 : i64, tpu.core_type = #tpu.core_type<tc>} {
    %c0 = arith.constant 0 : index
    %c0_0 = arith.constant 0 : index
    %0 = vector.load %arg1[%c0, %c0_0] : memref<8x36xf32, #tpu.memory_space<vmem>>, vector<8x36xf32>
    %c0_1 = arith.constant 0 : index
    %c0_2 = arith.constant 0 : index
    %1 = vector.load %arg2[%c0_1, %c0_2] : memref<8x1xf32, #tpu.memory_space<vmem>>, vector<8x1xf32>
    %c0_3 = arith.constant 0 : index
    %c0_4 = arith.constant 0 : index
    %c0_5 = arith.constant 0 : index
    %c0_6 = arith.constant 0 : index
    %2 = vector.load %arg0[%c0_3, %c0_4, %c0_5, %c0_6] : memref<2x4x18x18xf32, #tpu.memory_space<vmem>>, vector<1x4x18x18xf32>
    %3 = vector.shape_cast %2 : vector<1x4x18x18xf32> to vector<4x18x18xf32>
    %4 = vector.extract_strided_slice %3 {offsets = [0, 0, 0], sizes = [4, 16, 16], strides = [1, 1, 1]} : vector<4x18x18xf32> to vector<4x16x16xf32>
    %5 = vector.shape_cast %4 : vector<4x16x16xf32> to vector<4x256xf32>
    %6 = vector.extract_strided_slice %3 {offsets = [0, 0, 1], sizes = [4, 16, 16], strides = [1, 1, 1]} : vector<4x18x18xf32> to vector<4x16x16xf32>
    %7 = vector.shape_cast %6 : vector<4x16x16xf32> to vector<4x256xf32>
    %8 = vector.extract_strided_slice %3 {offsets = [0, 0, 2], sizes = [4, 16, 16], strides = [1, 1, 1]} : vector<4x18x18xf32> to vector<4x16x16xf32>
    %9 = vector.shape_cast %8 : vector<4x16x16xf32> to vector<4x256xf32>
    %10 = vector.extract_strided_slice %3 {offsets = [0, 1, 0], sizes = [4, 16, 16], strides = [1, 1, 1]} : vector<4x18x18xf32> to vector<4x16x16xf32>
    %11 = vector.shape_cast %10 : vector<4x16x16xf32> to vector<4x256xf32>
    %12 = vector.extract_strided_slice %3 {offsets = [0, 1, 1], sizes = [4, 16, 16], strides = [1, 1, 1]} : vector<4x18x18xf32> to vector<4x16x16xf32>
    %13 = vector.shape_cast %12 : vector<4x16x16xf32> to vector<4x256xf32>
    %14 = vector.extract_strided_slice %3 {offsets = [0, 1, 2], sizes = [4, 16, 16], strides = [1, 1, 1]} : vector<4x18x18xf32> to vector<4x16x16xf32>
    %15 = vector.shape_cast %14 : vector<4x16x16xf32> to vector<4x256xf32>
    %16 = vector.extract_strided_slice %3 {offsets = [0, 2, 0], sizes = [4, 16, 16], strides = [1, 1, 1]} : vector<4x18x18xf32> to vector<4x16x16xf32>
    %17 = vector.shape_cast %16 : vector<4x16x16xf32> to vector<4x256xf32>
    %18 = vector.extract_strided_slice %3 {offsets = [0, 2, 1], sizes = [4, 16, 16], strides = [1, 1, 1]} : vector<4x18x18xf32> to vector<4x16x16xf32>
    %19 = vector.shape_cast %18 : vector<4x16x16xf32> to vector<4x256xf32>
    %20 = vector.extract_strided_slice %3 {offsets = [0, 2, 2], sizes = [4, 16, 16], strides = [1, 1, 1]} : vector<4x18x18xf32> to vector<4x16x16xf32>
    %21 = vector.shape_cast %20 : vector<4x16x16xf32> to vector<4x256xf32>
    %22 = tpu.concatenate %5, %7, %9, %11, %13, %15, %17, %19, %21 in 0 : vector<4x256xf32>, vector<4x256xf32>, vector<4x256xf32>, vector<4x256xf32>, vector<4x256xf32>, vector<4x256xf32>, vector<4x256xf32>, vector<4x256xf32>, vector<4x256xf32> -> vector<36x256xf32>
    %cst = arith.constant dense<0.000000e+00> : vector<8x256xf32>
    %23 = tpu.matmul %0, %22, %cst {dimension_numbers = #tpu.dot_dimension_numbers<[1], [0], [0], [1], [0, 0, 1, 1], [], []>} : vector<8x36xf32>, vector<36x256xf32>, vector<8x256xf32> -> vector<8x256xf32>
    %24 = vector.broadcast %1 : vector<8x1xf32> to vector<8x256xf32>
    %25 = arith.addf %23, %24 : vector<8x256xf32>
    %cst_7 = arith.constant 0.000000e+00 : f32
    %26 = vector.broadcast %cst_7 : f32 to vector<8x256xf32>
    %27 = arith.cmpf oge, %25, %26 : vector<8x256xf32>
    %cst_8 = arith.constant 2.000000e-01 : f32
    %28 = vector.broadcast %cst_8 : f32 to vector<8x256xf32>
    %29 = arith.mulf %28, %25 : vector<8x256xf32>
    %30 = arith.select %27, %25, %29 : vector<8x256xi1>, vector<8x256xf32>
    %c0_9 = arith.constant 0 : index
    %c0_10 = arith.constant 0 : index
    %c0_11 = arith.constant 0 : index
    %31 = vector.load %arg3[%c0_9, %c0_10, %c0_11] : memref<2x8x256xf32, #tpu.memory_space<vmem>>, vector<1x8x256xf32>
    %32 = vector.shape_cast %31 : vector<1x8x256xf32> to vector<8x256xf32>
    %33 = vector.shape_cast %30 : vector<8x256xf32> to vector<1x8x256xf32>
    tpu.vector_store %arg3[%c0_9, %c0_10, %c0_11], %33 {strides = array<i32>} : memref<2x8x256xf32, #tpu.memory_space<vmem>>, vector<1x8x256xf32>,
    %c1 = arith.constant 1 : index
    %c0_12 = arith.constant 0 : index
    %c0_13 = arith.constant 0 : index
    %c0_14 = arith.constant 0 : index
    %34 = vector.load %arg0[%c1, %c0_12, %c0_13, %c0_14] : memref<2x4x18x18xf32, #tpu.memory_space<vmem>>, vector<1x4x18x18xf32>
    %35 = vector.shape_cast %34 : vector<1x4x18x18xf32> to vector<4x18x18xf32>
    %36 = vector.extract_strided_slice %35 {offsets = [0, 0, 0], sizes = [4, 16, 16], strides = [1, 1, 1]} : vector<4x18x18xf32> to vector<4x16x16xf32>
    %37 = vector.shape_cast %36 : vector<4x16x16xf32> to vector<4x256xf32>
    %38 = vector.extract_strided_slice %35 {offsets = [0, 0, 1], sizes = [4, 16, 16], strides = [1, 1, 1]} : vector<4x18x18xf32> to vector<4x16x16xf32>
    %39 = vector.shape_cast %38 : vector<4x16x16xf32> to vector<4x256xf32>
    %40 = vector.extract_strided_slice %35 {offsets = [0, 0, 2], sizes = [4, 16, 16], strides = [1, 1, 1]} : vector<4x18x18xf32> to vector<4x16x16xf32>
    %41 = vector.shape_cast %40 : vector<4x16x16xf32> to vector<4x256xf32>
    %42 = vector.extract_strided_slice %35 {offsets = [0, 1, 0], sizes = [4, 16, 16], strides = [1, 1, 1]} : vector<4x18x18xf32> to vector<4x16x16xf32>
    %43 = vector.shape_cast %42 : vector<4x16x16xf32> to vector<4x256xf32>
    %44 = vector.extract_strided_slice %35 {offsets = [0, 1, 1], sizes = [4, 16, 16], strides = [1, 1, 1]} : vector<4x18x18xf32> to vector<4x16x16xf32>
    %45 = vector.shape_cast %44 : vector<4x16x16xf32> to vector<4x256xf32>
    %46 = vector.extract_strided_slice %35 {offsets = [0, 1, 2], sizes = [4, 16, 16], strides = [1, 1, 1]} : vector<4x18x18xf32> to vector<4x16x16xf32>
    %47 = vector.shape_cast %46 : vector<4x16x16xf32> to vector<4x256xf32>
    %48 = vector.extract_strided_slice %35 {offsets = [0, 2, 0], sizes = [4, 16, 16], strides = [1, 1, 1]} : vector<4x18x18xf32> to vector<4x16x16xf32>
    %49 = vector.shape_cast %48 : vector<4x16x16xf32> to vector<4x256xf32>
    %50 = vector.extract_strided_slice %35 {offsets = [0, 2, 1], sizes = [4, 16, 16], strides = [1, 1, 1]} : vector<4x18x18xf32> to vector<4x16x16xf32>
    %51 = vector.shape_cast %50 : vector<4x16x16xf32> to vector<4x256xf32>
    %52 = vector.extract_strided_slice %35 {offsets = [0, 2, 2], sizes = [4, 16, 16], strides = [1, 1, 1]} : vector<4x18x18xf32> to vector<4x16x16xf32>
    %53 = vector.shape_cast %52 : vector<4x16x16xf32> to vector<4x256xf32>
    %54 = tpu.concatenate %37, %39, %41, %43, %45, %47, %49, %51, %53 in 0 : vector<4x256xf32>, vector<4x256xf32>, vector<4x256xf32>, vector<4x256xf32>, vector<4x256xf32>, vector<4x256xf32>, vector<4x256xf32>, vector<4x256xf32>, vector<4x256xf32> -> vector<36x256xf32>
    %cst_15 = arith.constant dense<0.000000e+00> : vector<8x256xf32>
    %55 = tpu.matmul %0, %54, %cst_15 {dimension_numbers = #tpu.dot_dimension_numbers<[1], [0], [0], [1], [0, 0, 1, 1], [], []>} : vector<8x36xf32>, vector<36x256xf32>, vector<8x256xf32> -> vector<8x256xf32>
    %56 = vector.broadcast %1 : vector<8x1xf32> to vector<8x256xf32>
    %57 = arith.addf %55, %56 : vector<8x256xf32>
    %cst_16 = arith.constant 0.000000e+00 : f32
    %58 = vector.broadcast %cst_16 : f32 to vector<8x256xf32>
    %59 = arith.cmpf oge, %57, %58 : vector<8x256xf32>
    %cst_17 = arith.constant 2.000000e-01 : f32
    %60 = vector.broadcast %cst_17 : f32 to vector<8x256xf32>
    %61 = arith.mulf %60, %57 : vector<8x256xf32>
    %62 = arith.select %59, %57, %61 : vector<8x256xi1>, vector<8x256xf32>
    %c1_18 = arith.constant 1 : index
    %c0_19 = arith.constant 0 : index
    %c0_20 = arith.constant 0 : index
    %63 = vector.load %arg3[%c1_18, %c0_19, %c0_20] : memref<2x8x256xf32, #tpu.memory_space<vmem>>, vector<1x8x256xf32>
    %64 = vector.shape_cast %63 : vector<1x8x256xf32> to vector<8x256xf32>
    %65 = vector.shape_cast %62 : vector<8x256xf32> to vector<1x8x256xf32>
    tpu.vector_store %arg3[%c1_18, %c0_19, %c0_20], %65 {strides = array<i32>} : memref<2x8x256xf32, #tpu.memory_space<vmem>>, vector<1x8x256xf32>,
    return
  }
}

</mosaic_0001>

<llo_original>
// kernel: tpu_custom_call.1
$region0: #{tpu_custom_call.1}
  #allocation0 [shape = 'u32[]', space=smem, size = 0x4, offset = 0x4, fixed_abs, tag = 'smem constant byte address 0x4 - core index']
  #allocation1 [shape = 'u32[144,128]{1,0:T(1,128)}', space=vmem, size = 0x12000, scoped, tag = 'internal scratch']
  %s0 = inlined_call_operand.vmem [shape: f32[2,4,18,18], index: 0, kind: input, shape index: {}]
  %s1 = inlined_call_operand.vmem [shape: f32[8,36], index: 1, kind: input, shape index: {}]
  %s2 = inlined_call_operand.vmem [shape: f32[8,1], index: 2, kind: input, shape index: {}]
  %s3 = inlined_call_operand.hbm [shape: f32[2,8,256], index: 3, kind: output, shape index: {}]
  %s4 = sld [smem:[#allocation0]]
  $region22: #{tpu_custom_call.1} parent=0
    _
  %s6 = ssub.s32 1, %s4
  %s7 = scalar_select 0, %s6, %s4
  $region1: #{tpu_custom_call.1} parent=0
    #allocation2 [shape = 'u8[16384]{0}', space=vmem, size = 0x4000, scoped, tag = 'output window, operand 0, single buffered']
    #allocation3 [shape = 's32[1]{0}', space=sflag, size = 0x4, scoped, tag = 'scoped memory for tpu_custom_call.1']
    %8 = vsyncpa [#allocation3], 0
    // Predicated region
    $region2: #{tpu_custom_call.1} parent=1 // pred_check
      _
    $region3: #{tpu_custom_call.1} parent=1 // pred_check_branch
      %10 = sbr.rel (0) target = $region5
    $region4: #{tpu_custom_call.1} parent=1 // pred_region
      _
    $region5: #{tpu_custom_call.1} parent=1 // pred_fallthru
      _
    // Predicated region
    $region6: #{tpu_custom_call.1} parent=1 // pred_check
      _
    $region7: #{tpu_custom_call.1} parent=1 // pred_check_branch
      %12 = sbr.rel (0) target = $region9
    $region8: #{tpu_custom_call.1} parent=1 // pred_region
      _
    $region9: #{tpu_custom_call.1} parent=1 // pred_fallthru
      _
    // Predicated region
    $region10: #{tpu_custom_call.1} parent=1 // pred_check
      _
    $region11: #{tpu_custom_call.1} parent=1 // pred_check_branch
      %14 = sbr.rel (0) target = $region13
    $region12: #{tpu_custom_call.1} parent=1 // pred_region
      _
    $region13: #{tpu_custom_call.1} parent=1 // pred_fallthru
      _
    %v15 = vld [vmem:[%s1] sm:$0xff]
    %v16 = vld [vmem:[%s2] sm:$0xff]
    %v17 = vld [vmem:[%s0] sm:$0xff]
    %v18 = vld [vmem:[%s0 + $0x8] sm:$0xff]
    %v19 = vld [vmem:[%s0 + $0x10] sm:$0x3]
    %v20 = vld [vmem:[%s0 + $0x18] sm:$0xff]
    %v21 = vld [vmem:[%s0 + $0x20] sm:$0xff]
    %v22 = vld [vmem:[%s0 + $0x28] sm:$0x3]
    %v23 = vld [vmem:[%s0 + $0x30] sm:$0xff]
    %v24 = vld [vmem:[%s0 + $0x38] sm:$0xff]
    %v25 = vld [vmem:[%s0 + $0x40] sm:$0x3]
    %v26 = vld [vmem:[%s0 + $0x48] sm:$0xff]
    %v27 = vld [vmem:[%s0 + $0x50] sm:$0xff]
    %v28 = vld [vmem:[%s0 + $0x58] sm:$0x3]
    %v29 = vcombine.low %v17, %v23
    %v30 = vcombine.high %v17, %v23
    %v32 = vunpack.c.l.s4 1983009808
    %v33 = vunpack.c.0.s8 %v32
    %v34 = vlaneseq
    %v35 = vshrl.u32 %v34, 7
    %v36 = vsub.s32 %v33, %v35
    %v37 = vrot.slane %v29, %v36
    %v39 = vunpack.c.l.s4 1983009808
    %v40 = vunpack.c.0.s8 %v39
    %v41 = vlaneseq
    %v42 = vshrl.u32 %v41, 7
    %v43 = vsub.s32 %v40, %v42
    %v44 = vrot.slane %v30, %v43
    %v45 = vcombine.low %v20, %v26
    %v46 = vcombine.high %v20, %v26
    %v48 = vunpack.c.l.s4 1983009808
    %v49 = vunpack.c.0.s8 %v48
    %v50 = vlaneseq
    %v51 = vshrl.u32 %v50, 7
    %v52 = vsub.s32 %v49, %v51
    %v53 = vrot.slane %v45, %v52
    %v55 = vunpack.c.l.s4 1983009808
    %v56 = vunpack.c.0.s8 %v55
    %v57 = vlaneseq
    %v58 = vshrl.u32 %v57, 7
    %v59 = vsub.s32 %v56, %v58
    %v60 = vrot.slane %v46, %v59
    %v61 = vcombine.low %v37, %v53
    %v62 = vcombine.high %v37, %v53
    %v64 = vunpack.c.l.s4 1934713408
    %v65 = vunpack.c.0.s8 %v64
    %v66 = vlaneseq
    %v67 = vshrl.u32 %v66, 7
    %v68 = vsub.s32 %v65, %v67
    %v69 = vrot.slane %v61, %v68
    %v71 = vunpack.c.l.s4 1934713408
    %v72 = vunpack.c.0.s8 %v71
    %v73 = vlaneseq
    %v74 = vshrl.u32 %v73, 7
    %v75 = vsub.s32 %v72, %v74
    %v76 = vrot.slane %v62, %v75
    %v77 = vcombine.low %v44, %v60
    %v78 = vcombine.high %v44, %v60
    %v80 = vunpack.c.l.s4 1934713408
    %v81 = vunpack.c.0.s8 %v80
    %v82 = vlaneseq
    %v83 = vshrl.u32 %v82, 7
    %v84 = vsub.s32 %v81, %v83
    %v85 = vrot.slane %v77, %v84
    %v87 = vunpack.c.l.s4 1934713408
    %v88 = vunpack.c.0.s8 %v87
    %v89 = vlaneseq
    %v90 = vshrl.u32 %v89, 7
    %v91 = vsub.s32 %v88, %v90
    %v92 = vrot.slane %v78, %v91
    %v93 = vcombine.high %v69, 0.0
    %v94 = vcombine.high %v76, 0.0
    %v95 = vcombine.high %v85, 0.0
    %v96 = vcombine.high %v92, 0.0
    %v97 = vcombine.low %v18, %v24
    %v98 = vcombine.high %v18, %v24
    %v100 = vunpack.c.l.s4 1983009808
    %v101 = vunpack.c.0.s8 %v100
    %v102 = vlaneseq
    %v103 = vshrl.u32 %v102, 7
    %v104 = vsub.s32 %v101, %v103
    %v105 = vrot.slane %v97, %v104
    %v107 = vunpack.c.l.s4 1983009808
    %v108 = vunpack.c.0.s8 %v107
    %v109 = vlaneseq
    %v110 = vshrl.u32 %v109, 7
    %v111 = vsub.s32 %v108, %v110
    %v112 = vrot.slane %v98, %v111
    %v113 = vcombine.low %v21, %v27
    %v114 = vcombine.high %v21, %v27
    %v116 = vunpack.c.l.s4 1983009808
    %v117 = vunpack.c.0.s8 %v116
    %v118 = vlaneseq
    %v119 = vshrl.u32 %v118, 7
    %v120 = vsub.s32 %v117, %v119
    %v121 = vrot.slane %v113, %v120
    %v123 = vunpack.c.l.s4 1983009808
    %v124 = vunpack.c.0.s8 %v123
    %v125 = vlaneseq
    %v126 = vshrl.u32 %v125, 7
    %v127 = vsub.s32 %v124, %v126
    %v128 = vrot.slane %v114, %v127
    %v129 = vcombine.low %v105, %v121
    %v130 = vcombine.high %v105, %v121
    %v132 = vunpack.c.l.s4 1934713408
    %v133 = vunpack.c.0.s8 %v132
    %v134 = vlaneseq
    %v135 = vshrl.u32 %v134, 7
    %v136 = vsub.s32 %v133, %v135
    %v137 = vrot.slane %v129, %v136
    %v139 = vunpack.c.l.s4 1934713408
    %v140 = vunpack.c.0.s8 %v139
    %v141 = vlaneseq
    %v142 = vshrl.u32 %v141, 7
    %v143 = vsub.s32 %v140, %v142
    %v144 = vrot.slane %v130, %v143
    %v145 = vcombine.low %v112, %v128
    %v146 = vcombine.high %v112, %v128
    %v148 = vunpack.c.l.s4 1934713408
    %v149 = vunpack.c.0.s8 %v148
    %v150 = vlaneseq
    %v151 = vshrl.u32 %v150, 7
    %v152 = vsub.s32 %v149, %v151
    %v153 = vrot.slane %v145, %v152
    %v155 = vunpack.c.l.s4 1934713408
    %v156 = vunpack.c.0.s8 %v155
    %v157 = vlaneseq
    %v158 = vshrl.u32 %v157, 7
    %v159 = vsub.s32 %v156, %v158
    %v160 = vrot.slane %v146, %v159
    %v161 = vcombine.high %v137, 0.0
    %v162 = vcombine.high %v144, 0.0
    %v163 = vcombine.high %v153, 0.0
    %v164 = vcombine.high %v160, 0.0
    %166 = vrot.lane.b32.xlu0 %v93, 16
    %v167 = vpop.permute.xlu0 %166
    %170 = vrot.lane.b32.xlu0 %v76, 32
    %v171 = vpop.permute.xlu0 %170
    %174 = vrot.lane.b32.xlu0 %v94, 48
    %v175 = vpop.permute.xlu0 %174
    %178 = vrot.lane.b32.xlu0 %v85, 64
    %v179 = vpop.permute.xlu0 %178
    %182 = vrot.lane.b32.xlu0 %v95, 80
    %v183 = vpop.permute.xlu0 %182
    %186 = vrot.lane.b32.xlu0 %v92, 96
    %v187 = vpop.permute.xlu0 %186
    %190 = vrot.lane.b32.xlu0 %v96, 112
    %v191 = vpop.permute.xlu0 %190
    %194 = vrot.lane.b32.xlu0 %v161, 16
    %v195 = vpop.permute.xlu0 %194
    %198 = vrot.lane.b32.xlu0 %v144, 32
    %v199 = vpop.permute.xlu0 %198
    %202 = vrot.lane.b32.xlu0 %v162, 48
    %v203 = vpop.permute.xlu0 %202
    %206 = vrot.lane.b32.xlu0 %v153, 64
    %v207 = vpop.permute.xlu0 %206
    %210 = vrot.lane.b32.xlu0 %v163, 80
    %v211 = vpop.permute.xlu0 %210
    %214 = vrot.lane.b32.xlu0 %v160, 96
    %v215 = vpop.permute.xlu0 %214
    %218 = vrot.lane.b32.xlu0 %v164, 112
    %v219 = vpop.permute.xlu0 %218
    %vm221 = vcmask 130048
    %v222 = vsel %vm221, %v69, %v167
    %vm223 = vcmask 261120
    %v224 = vsel %vm223, %v222, %v171
    %vm225 = vcmask 392192
    %v226 = vsel %vm225, %v224, %v175
    %vm227 = vcmask 523264
    %v228 = vsel %vm227, %v226, %v179
    %vm229 = vcmask 654336
    %v230 = vsel %vm229, %v228, %v183
    %vm231 = vcmask 785408
    %v232 = vsel %vm231, %v230, %v187
    %vm233 = vcmask 916480
    %v234 = vsel %vm233, %v232, %v191
    %v235 = vsel %vm221, %v137, %v195
    %v236 = vsel %vm223, %v235, %v199
    %v237 = vsel %vm225, %v236, %v203
    %v238 = vsel %vm227, %v237, %v207
    %v239 = vsel %vm229, %v238, %v211
    %v240 = vsel %vm231, %v239, %v215
    %v241 = vsel %vm233, %v240, %v219
    %250 = vrot.lane.b32.xlu0 %v17, 127
    %v251 = vpop.permute.xlu0 %250
    %252 = vrot.lane.b32.xlu0 %v18, 127
    %v253 = vpop.permute.xlu0 %252
    %254 = vrot.lane.b32.xlu0 %v20, 127
    %v255 = vpop.permute.xlu0 %254
    %256 = vrot.lane.b32.xlu0 %v21, 127
    %v257 = vpop.permute.xlu0 %256
    %258 = vrot.lane.b32.xlu0 %v23, 127
    %v259 = vpop.permute.xlu0 %258
    %260 = vrot.lane.b32.xlu0 %v24, 127
    %v261 = vpop.permute.xlu0 %260
    %262 = vrot.lane.b32.xlu0 %v26, 127
    %v263 = vpop.permute.xlu0 %262
    %264 = vrot.lane.b32.xlu0 %v27, 127
    %v265 = vpop.permute.xlu0 %264
    %v274 = vcombine.low %v251, %v259
    %v275 = vcombine.high %v251, %v259
    %v277 = vunpack.c.l.s4 1983009808
    %v278 = vunpack.c.0.s8 %v277
    %v279 = vlaneseq
    %v280 = vshrl.u32 %v279, 7
    %v281 = vsub.s32 %v278, %v280
    %v282 = vrot.slane %v274, %v281
    %v284 = vunpack.c.l.s4 1983009808
    %v285 = vunpack.c.0.s8 %v284
    %v286 = vlaneseq
    %v287 = vshrl.u32 %v286, 7
    %v288 = vsub.s32 %v285, %v287
    %v289 = vrot.slane %v275, %v288
    %v290 = vcombine.low %v255, %v263
    %v291 = vcombine.high %v255, %v263
    %v293 = vunpack.c.l.s4 1983009808
    %v294 = vunpack.c.0.s8 %v293
    %v295 = vlaneseq
    %v296 = vshrl.u32 %v295, 7
    %v297 = vsub.s32 %v294, %v296
    %v298 = vrot.slane %v290, %v297
    %v300 = vunpack.c.l.s4 1983009808
    %v301 = vunpack.c.0.s8 %v300
    %v302 = vlaneseq
    %v303 = vshrl.u32 %v302, 7
    %v304 = vsub.s32 %v301, %v303
    %v305 = vrot.slane %v291, %v304
    %v306 = vcombine.low %v282, %v298
    %v307 = vcombine.high %v282, %v298
    %v309 = vunpack.c.l.s4 1934713408
    %v310 = vunpack.c.0.s8 %v309
    %v311 = vlaneseq
    %v312 = vshrl.u32 %v311, 7
    %v313 = vsub.s32 %v310, %v312
    %v314 = vrot.slane %v306, %v313
    %v316 = vunpack.c.l.s4 1934713408
    %v317 = vunpack.c.0.s8 %v316
    %v318 = vlaneseq
    %v319 = vshrl.u32 %v318, 7
    %v320 = vsub.s32 %v317, %v319
    %v321 = vrot.slane %v307, %v320
    %v322 = vcombine.low %v289, %v305
    %v323 = vcombine.high %v289, %v305
    %v325 = vunpack.c.l.s4 1934713408
    %v326 = vunpack.c.0.s8 %v325
    %v327 = vlaneseq
    %v328 = vshrl.u32 %v327, 7
    %v329 = vsub.s32 %v326, %v328
    %v330 = vrot.slane %v322, %v329
    %v332 = vunpack.c.l.s4 1934713408
    %v333 = vunpack.c.0.s8 %v332
    %v334 = vlaneseq
    %v335 = vshrl.u32 %v334, 7
    %v336 = vsub.s32 %v333, %v335
    %v337 = vrot.slane %v323, %v336
    %v338 = vcombine.high %v314, 0.0
    %v339 = vcombine.high %v321, 0.0
    %v340 = vcombine.high %v330, 0.0
    %v341 = vcombine.high %v337, 0.0
    %v342 = vcombine.low %v253, %v261
    %v343 = vcombine.high %v253, %v261
    %v345 = vunpack.c.l.s4 1983009808
    %v346 = vunpack.c.0.s8 %v345
    %v347 = vlaneseq
    %v348 = vshrl.u32 %v347, 7
    %v349 = vsub.s32 %v346, %v348
    %v350 = vrot.slane %v342, %v349
    %v352 = vunpack.c.l.s4 1983009808
    %v353 = vunpack.c.0.s8 %v352
    %v354 = vlaneseq
    %v355 = vshrl.u32 %v354, 7
    %v356 = vsub.s32 %v353, %v355
    %v357 = vrot.slane %v343, %v356
    %v358 = vcombine.low %v257, %v265
    %v359 = vcombine.high %v257, %v265
    %v361 = vunpack.c.l.s4 1983009808
    %v362 = vunpack.c.0.s8 %v361
    %v363 = vlaneseq
    %v364 = vshrl.u32 %v363, 7
    %v365 = vsub.s32 %v362, %v364
    %v366 = vrot.slane %v358, %v365
    %v368 = vunpack.c.l.s4 1983009808
    %v369 = vunpack.c.0.s8 %v368
    %v370 = vlaneseq
    %v371 = vshrl.u32 %v370, 7
    %v372 = vsub.s32 %v369, %v371
    %v373 = vrot.slane %v359, %v372
    %v374 = vcombine.low %v350, %v366
    %v375 = vcombine.high %v350, %v366
    %v377 = vunpack.c.l.s4 1934713408
    %v378 = vunpack.c.0.s8 %v377
    %v379 = vlaneseq
    %v380 = vshrl.u32 %v379, 7
    %v381 = vsub.s32 %v378, %v380
    %v382 = vrot.slane %v374, %v381
    %v384 = vunpack.c.l.s4 1934713408
    %v385 = vunpack.c.0.s8 %v384
    %v386 = vlaneseq
    %v387 = vshrl.u32 %v386, 7
    %v388 = vsub.s32 %v385, %v387
    %v389 = vrot.slane %v375, %v388
    %v390 = vcombine.low %v357, %v373
    %v391 = vcombine.high %v357, %v373
    %v393 = vunpack.c.l.s4 1934713408
    %v394 = vunpack.c.0.s8 %v393
    %v395 = vlaneseq
    %v396 = vshrl.u32 %v395, 7
    %v397 = vsub.s32 %v394, %v396
    %v398 = vrot.slane %v390, %v397
    %v400 = vunpack.c.l.s4 1934713408
    %v401 = vunpack.c.0.s8 %v400
    %v402 = vlaneseq
    %v403 = vshrl.u32 %v402, 7
    %v404 = vsub.s32 %v401, %v403
    %v405 = vrot.slane %v391, %v404
    %v406 = vcombine.high %v382, 0.0
    %v407 = vcombine.high %v389, 0.0
    %v408 = vcombine.high %v398, 0.0
    %v409 = vcombine.high %v405, 0.0
    %411 = vrot.lane.b32.xlu0 %v338, 16
    %v412 = vpop.permute.xlu0 %411
    %415 = vrot.lane.b32.xlu0 %v321, 32
    %v416 = vpop.permute.xlu0 %415
    %419 = vrot.lane.b32.xlu0 %v339, 48
    %v420 = vpop.permute.xlu0 %419
    %423 = vrot.lane.b32.xlu0 %v330, 64
    %v424 = vpop.permute.xlu0 %423
    %427 = vrot.lane.b32.xlu0 %v340, 80
    %v428 = vpop.permute.xlu0 %427
    %431 = vrot.lane.b32.xlu0 %v337, 96
    %v432 = vpop.permute.xlu0 %431
    %435 = vrot.lane.b32.xlu0 %v341, 112
    %v436 = vpop.permute.xlu0 %435
    %439 = vrot.lane.b32.xlu0 %v406, 16
    %v440 = vpop.permute.xlu0 %439
    %443 = vrot.lane.b32.xlu0 %v389, 32
    %v444 = vpop.permute.xlu0 %443
    %447 = vrot.lane.b32.xlu0 %v407, 48
    %v448 = vpop.permute.xlu0 %447
    %451 = vrot.lane.b32.xlu0 %v398, 64
    %v452 = vpop.permute.xlu0 %451
    %455 = vrot.lane.b32.xlu0 %v408, 80
    %v456 = vpop.permute.xlu0 %455
    %459 = vrot.lane.b32.xlu0 %v405, 96
    %v460 = vpop.permute.xlu0 %459
    %463 = vrot.lane.b32.xlu0 %v409, 112
    %v464 = vpop.permute.xlu0 %463
    %v466 = vsel %vm221, %v314, %v412
    %v467 = vsel %vm223, %v466, %v416
    %v468 = vsel %vm225, %v467, %v420
    %v469 = vsel %vm227, %v468, %v424
    %v470 = vsel %vm229, %v469, %v428
    %v471 = vsel %vm231, %v470, %v432
    %v472 = vsel %vm233, %v471, %v436
    %v473 = vsel %vm221, %v382, %v440
    %v474 = vsel %vm223, %v473, %v444
    %v475 = vsel %vm225, %v474, %v448
    %v476 = vsel %vm227, %v475, %v452
    %v477 = vsel %vm229, %v476, %v456
    %v478 = vsel %vm231, %v477, %v460
    %v479 = vsel %vm233, %v478, %v464
    %480 = vrot.lane.b32.xlu0 %v17, 126
    %v481 = vpop.permute.xlu0 %480
    %482 = vrot.lane.b32.xlu0 %v18, 126
    %v483 = vpop.permute.xlu0 %482
    %484 = vrot.lane.b32.xlu0 %v20, 126
    %v485 = vpop.permute.xlu0 %484
    %486 = vrot.lane.b32.xlu0 %v21, 126
    %v487 = vpop.permute.xlu0 %486
    %488 = vrot.lane.b32.xlu0 %v23, 126
    %v489 = vpop.permute.xlu0 %488
    %490 = vrot.lane.b32.xlu0 %v24, 126
    %v491 = vpop.permute.xlu0 %490
    %492 = vrot.lane.b32.xlu0 %v26, 126
    %v493 = vpop.permute.xlu0 %492
    %494 = vrot.lane.b32.xlu0 %v27, 126
    %v495 = vpop.permute.xlu0 %494
    %v504 = vcombine.low %v481, %v489
    %v505 = vcombine.high %v481, %v489
    %v507 = vunpack.c.l.s4 1983009808
    %v508 = vunpack.c.0.s8 %v507
    %v509 = vlaneseq
    %v510 = vshrl.u32 %v509, 7
    %v511 = vsub.s32 %v508, %v510
    %v512 = vrot.slane %v504, %v511
    %v514 = vunpack.c.l.s4 1983009808
    %v515 = vunpack.c.0.s8 %v514
    %v516 = vlaneseq
    %v517 = vshrl.u32 %v516, 7
    %v518 = vsub.s32 %v515, %v517
    %v519 = vrot.slane %v505, %v518
    %v520 = vcombine.low %v485, %v493
    %v521 = vcombine.high %v485, %v493
    %v523 = vunpack.c.l.s4 1983009808
    %v524 = vunpack.c.0.s8 %v523
    %v525 = vlaneseq
    %v526 = vshrl.u32 %v525, 7
    %v527 = vsub.s32 %v524, %v526
    %v528 = vrot.slane %v520, %v527
    %v530 = vunpack.c.l.s4 1983009808
    %v531 = vunpack.c.0.s8 %v530
    %v532 = vlaneseq
    %v533 = vshrl.u32 %v532, 7
    %v534 = vsub.s32 %v531, %v533
    %v535 = vrot.slane %v521, %v534
    %v536 = vcombine.low %v512, %v528
    %v537 = vcombine.high %v512, %v528
    %v539 = vunpack.c.l.s4 1934713408
    %v540 = vunpack.c.0.s8 %v539
    %v541 = vlaneseq
    %v542 = vshrl.u32 %v541, 7
    %v543 = vsub.s32 %v540, %v542
    %v544 = vrot.slane %v536, %v543
    %v546 = vunpack.c.l.s4 1934713408
    %v547 = vunpack.c.0.s8 %v546
    %v548 = vlaneseq
    %v549 = vshrl.u32 %v548, 7
    %v550 = vsub.s32 %v547, %v549
    %v551 = vrot.slane %v537, %v550
    %v552 = vcombine.low %v519, %v535
    %v553 = vcombine.high %v519, %v535
    %v555 = vunpack.c.l.s4 1934713408
    %v556 = vunpack.c.0.s8 %v555
    %v557 = vlaneseq
    %v558 = vshrl.u32 %v557, 7
    %v559 = vsub.s32 %v556, %v558
    %v560 = vrot.slane %v552, %v559
    %v562 = vunpack.c.l.s4 1934713408
    %v563 = vunpack.c.0.s8 %v562
    %v564 = vlaneseq
    %v565 = vshrl.u32 %v564, 7
    %v566 = vsub.s32 %v563, %v565
    %v567 = vrot.slane %v553, %v566
    %v568 = vcombine.high %v544, 0.0
    %v569 = vcombine.high %v551, 0.0
    %v570 = vcombine.high %v560, 0.0
    %v571 = vcombine.high %v567, 0.0
    %v572 = vcombine.low %v483, %v491
    %v573 = vcombine.high %v483, %v491
    %v575 = vunpack.c.l.s4 1983009808
    %v576 = vunpack.c.0.s8 %v575
    %v577 = vlaneseq
    %v578 = vshrl.u32 %v577, 7
    %v579 = vsub.s32 %v576, %v578
    %v580 = vrot.slane %v572, %v579
    %v582 = vunpack.c.l.s4 1983009808
    %v583 = vunpack.c.0.s8 %v582
    %v584 = vlaneseq
    %v585 = vshrl.u32 %v584, 7
    %v586 = vsub.s32 %v583, %v585
    %v587 = vrot.slane %v573, %v586
    %v588 = vcombine.low %v487, %v495
    %v589 = vcombine.high %v487, %v495
    %v591 = vunpack.c.l.s4 1983009808
    %v592 = vunpack.c.0.s8 %v591
    %v593 = vlaneseq
    %v594 = vshrl.u32 %v593, 7
    %v595 = vsub.s32 %v592, %v594
    %v596 = vrot.slane %v588, %v595
    %v598 = vunpack.c.l.s4 1983009808
    %v599 = vunpack.c.0.s8 %v598
    %v600 = vlaneseq
    %v601 = vshrl.u32 %v600, 7
    %v602 = vsub.s32 %v599, %v601
    %v603 = vrot.slane %v589, %v602
    %v604 = vcombine.low %v580, %v596
    %v605 = vcombine.high %v580, %v596
    %v607 = vunpack.c.l.s4 1934713408
    %v608 = vunpack.c.0.s8 %v607
    %v609 = vlaneseq
    %v610 = vshrl.u32 %v609, 7
    %v611 = vsub.s32 %v608, %v610
    %v612 = vrot.slane %v604, %v611
    %v614 = vunpack.c.l.s4 1934713408
    %v615 = vunpack.c.0.s8 %v614
    %v616 = vlaneseq
    %v617 = vshrl.u32 %v616, 7
    %v618 = vsub.s32 %v615, %v617
    %v619 = vrot.slane %v605, %v618
    %v620 = vcombine.low %v587, %v603
    %v621 = vcombine.high %v587, %v603
    %v623 = vunpack.c.l.s4 1934713408
    %v624 = vunpack.c.0.s8 %v623
    %v625 = vlaneseq
    %v626 = vshrl.u32 %v625, 7
    %v627 = vsub.s32 %v624, %v626
    %v628 = vrot.slane %v620, %v627
    %v630 = vunpack.c.l.s4 1934713408
    %v631 = vunpack.c.0.s8 %v630
    %v632 = vlaneseq
    %v633 = vshrl.u32 %v632, 7
    %v634 = vsub.s32 %v631, %v633
    %v635 = vrot.slane %v621, %v634
    %v636 = vcombine.high %v612, 0.0
    %v637 = vcombine.high %v619, 0.0
    %v638 = vcombine.high %v628, 0.0
    %v639 = vcombine.high %v635, 0.0
    %641 = vrot.lane.b32.xlu0 %v568, 16
    %v642 = vpop.permute.xlu0 %641
    %645 = vrot.lane.b32.xlu0 %v551, 32
    %v646 = vpop.permute.xlu0 %645
    %649 = vrot.lane.b32.xlu0 %v569, 48
    %v650 = vpop.permute.xlu0 %649
    %653 = vrot.lane.b32.xlu0 %v560, 64
    %v654 = vpop.permute.xlu0 %653
    %657 = vrot.lane.b32.xlu0 %v570, 80
    %v658 = vpop.permute.xlu0 %657
    %661 = vrot.lane.b32.xlu0 %v567, 96
    %v662 = vpop.permute.xlu0 %661
    %665 = vrot.lane.b32.xlu0 %v571, 112
    %v666 = vpop.permute.xlu0 %665
    %669 = vrot.lane.b32.xlu0 %v636, 16
    %v670 = vpop.permute.xlu0 %669
    %673 = vrot.lane.b32.xlu0 %v619, 32
    %v674 = vpop.permute.xlu0 %673
    %677 = vrot.lane.b32.xlu0 %v637, 48
    %v678 = vpop.permute.xlu0 %677
    %681 = vrot.lane.b32.xlu0 %v628, 64
    %v682 = vpop.permute.xlu0 %681
    %685 = vrot.lane.b32.xlu0 %v638, 80
    %v686 = vpop.permute.xlu0 %685
    %689 = vrot.lane.b32.xlu0 %v635, 96
    %v690 = vpop.permute.xlu0 %689
    %693 = vrot.lane.b32.xlu0 %v639, 112
    %v694 = vpop.permute.xlu0 %693
    %v696 = vsel %vm221, %v544, %v642
    %v697 = vsel %vm223, %v696, %v646
    %v698 = vsel %vm225, %v697, %v650
    %v699 = vsel %vm227, %v698, %v654
    %v700 = vsel %vm229, %v699, %v658
    %v701 = vsel %vm231, %v700, %v662
    %v702 = vsel %vm233, %v701, %v666
    %v703 = vsel %vm221, %v612, %v670
    %v704 = vsel %vm223, %v703, %v674
    %v705 = vsel %vm225, %v704, %v678
    %v706 = vsel %vm227, %v705, %v682
    %v707 = vsel %vm229, %v706, %v686
    %v708 = vsel %vm231, %v707, %v690
    %v709 = vsel %vm233, %v708, %v694
    %vm714 = vcmask 1046528
    %v715 = vrot.slane %v17, 1
    %v716 = vrot.slane %v18, 1
    %v717 = vsel %vm714, %v715, %v716
    %v718 = vrot.slane %v19, 1
    %v719 = vsel %vm714, %v716, %v718
    %v720 = vrot.slane %v20, 1
    %v721 = vrot.slane %v21, 1
    %v722 = vsel %vm714, %v720, %v721
    %v723 = vrot.slane %v22, 1
    %v724 = vsel %vm714, %v721, %v723
    %v725 = vrot.slane %v23, 1
    %v726 = vrot.slane %v24, 1
    %v727 = vsel %vm714, %v725, %v726
    %v728 = vrot.slane %v25, 1
    %v729 = vsel %vm714, %v726, %v728
    %v730 = vrot.slane %v26, 1
    %v731 = vrot.slane %v27, 1
    %v732 = vsel %vm714, %v730, %v731
    %v733 = vrot.slane %v28, 1
    %v734 = vsel %vm714, %v731, %v733
    %v743 = vcombine.low %v717, %v727
    %v744 = vcombine.high %v717, %v727
    %v746 = vunpack.c.l.s4 1983009808
    %v747 = vunpack.c.0.s8 %v746
    %v748 = vlaneseq
    %v749 = vshrl.u32 %v748, 7
    %v750 = vsub.s32 %v747, %v749
    %v751 = vrot.slane %v743, %v750
    %v753 = vunpack.c.l.s4 1983009808
    %v754 = vunpack.c.0.s8 %v753
    %v755 = vlaneseq
    %v756 = vshrl.u32 %v755, 7
    %v757 = vsub.s32 %v754, %v756
    %v758 = vrot.slane %v744, %v757
    %v759 = vcombine.low %v722, %v732
    %v760 = vcombine.high %v722, %v732
    %v762 = vunpack.c.l.s4 1983009808
    %v763 = vunpack.c.0.s8 %v762
    %v764 = vlaneseq
    %v765 = vshrl.u32 %v764, 7
    %v766 = vsub.s32 %v763, %v765
    %v767 = vrot.slane %v759, %v766
    %v769 = vunpack.c.l.s4 1983009808
    %v770 = vunpack.c.0.s8 %v769
    %v771 = vlaneseq
    %v772 = vshrl.u32 %v771, 7
    %v773 = vsub.s32 %v770, %v772
    %v774 = vrot.slane %v760, %v773
    %v775 = vcombine.low %v751, %v767
    %v776 = vcombine.high %v751, %v767
    %v778 = vunpack.c.l.s4 1934713408
    %v779 = vunpack.c.0.s8 %v778
    %v780 = vlaneseq
    %v781 = vshrl.u32 %v780, 7
    %v782 = vsub.s32 %v779, %v781
    %v783 = vrot.slane %v775, %v782
    %v785 = vunpack.c.l.s4 1934713408
    %v786 = vunpack.c.0.s8 %v785
    %v787 = vlaneseq
    %v788 = vshrl.u32 %v787, 7
    %v789 = vsub.s32 %v786, %v788
    %v790 = vrot.slane %v776, %v789
    %v791 = vcombine.low %v758, %v774
    %v792 = vcombine.high %v758, %v774
    %v794 = vunpack.c.l.s4 1934713408
    %v795 = vunpack.c.0.s8 %v794
    %v796 = vlaneseq
    %v797 = vshrl.u32 %v796, 7
    %v798 = vsub.s32 %v795, %v797
    %v799 = vrot.slane %v791, %v798
    %v801 = vunpack.c.l.s4 1934713408
    %v802 = vunpack.c.0.s8 %v801
    %v803 = vlaneseq
    %v804 = vshrl.u32 %v803, 7
    %v805 = vsub.s32 %v802, %v804
    %v806 = vrot.slane %v792, %v805
    %v807 = vcombine.high %v783, 0.0
    %v808 = vcombine.high %v790, 0.0
    %v809 = vcombine.high %v799, 0.0
    %v810 = vcombine.high %v806, 0.0
    %v811 = vcombine.low %v719, %v729
    %v812 = vcombine.high %v719, %v729
    %v814 = vunpack.c.l.s4 1983009808
    %v815 = vunpack.c.0.s8 %v814
    %v816 = vlaneseq
    %v817 = vshrl.u32 %v816, 7
    %v818 = vsub.s32 %v815, %v817
    %v819 = vrot.slane %v811, %v818
    %v821 = vunpack.c.l.s4 1983009808
    %v822 = vunpack.c.0.s8 %v821
    %v823 = vlaneseq
    %v824 = vshrl.u32 %v823, 7
    %v825 = vsub.s32 %v822, %v824
    %v826 = vrot.slane %v812, %v825
    %v827 = vcombine.low %v724, %v734
    %v828 = vcombine.high %v724, %v734
    %v830 = vunpack.c.l.s4 1983009808
    %v831 = vunpack.c.0.s8 %v830
    %v832 = vlaneseq
    %v833 = vshrl.u32 %v832, 7
    %v834 = vsub.s32 %v831, %v833
    %v835 = vrot.slane %v827, %v834
    %v837 = vunpack.c.l.s4 1983009808
    %v838 = vunpack.c.0.s8 %v837
    %v839 = vlaneseq
    %v840 = vshrl.u32 %v839, 7
    %v841 = vsub.s32 %v838, %v840
    %v842 = vrot.slane %v828, %v841
    %v843 = vcombine.low %v819, %v835
    %v844 = vcombine.high %v819, %v835
    %v846 = vunpack.c.l.s4 1934713408
    %v847 = vunpack.c.0.s8 %v846
    %v848 = vlaneseq
    %v849 = vshrl.u32 %v848, 7
    %v850 = vsub.s32 %v847, %v849
    %v851 = vrot.slane %v843, %v850
    %v853 = vunpack.c.l.s4 1934713408
    %v854 = vunpack.c.0.s8 %v853
    %v855 = vlaneseq
    %v856 = vshrl.u32 %v855, 7
    %v857 = vsub.s32 %v854, %v856
    %v858 = vrot.slane %v844, %v857
    %v859 = vcombine.low %v826, %v842
    %v860 = vcombine.high %v826, %v842
    %v862 = vunpack.c.l.s4 1934713408
    %v863 = vunpack.c.0.s8 %v862
    %v864 = vlaneseq
    %v865 = vshrl.u32 %v864, 7
    %v866 = vsub.s32 %v863, %v865
    %v867 = vrot.slane %v859, %v866
    %v869 = vunpack.c.l.s4 1934713408
    %v870 = vunpack.c.0.s8 %v869
    %v871 = vlaneseq
    %v872 = vshrl.u32 %v871, 7
    %v873 = vsub.s32 %v870, %v872
    %v874 = vrot.slane %v860, %v873
    %v875 = vcombine.high %v851, 0.0
    %v876 = vcombine.high %v858, 0.0
    %v877 = vcombine.high %v867, 0.0
    %v878 = vcombine.high %v874, 0.0
    %880 = vrot.lane.b32.xlu0 %v807, 16
    %v881 = vpop.permute.xlu0 %880
    %884 = vrot.lane.b32.xlu0 %v790, 32
    %v885 = vpop.permute.xlu0 %884
    %888 = vrot.lane.b32.xlu0 %v808, 48
    %v889 = vpop.permute.xlu0 %888
    %892 = vrot.lane.b32.xlu0 %v799, 64
    %v893 = vpop.permute.xlu0 %892
    %896 = vrot.lane.b32.xlu0 %v809, 80
    %v897 = vpop.permute.xlu0 %896
    %900 = vrot.lane.b32.xlu0 %v806, 96
    %v901 = vpop.permute.xlu0 %900
    %904 = vrot.lane.b32.xlu0 %v810, 112
    %v905 = vpop.permute.xlu0 %904
    %908 = vrot.lane.b32.xlu0 %v875, 16
    %v909 = vpop.permute.xlu0 %908
    %912 = vrot.lane.b32.xlu0 %v858, 32
    %v913 = vpop.permute.xlu0 %912
    %916 = vrot.lane.b32.xlu0 %v876, 48
    %v917 = vpop.permute.xlu0 %916
    %920 = vrot.lane.b32.xlu0 %v867, 64
    %v921 = vpop.permute.xlu0 %920
    %924 = vrot.lane.b32.xlu0 %v877, 80
    %v925 = vpop.permute.xlu0 %924
    %928 = vrot.lane.b32.xlu0 %v874, 96
    %v929 = vpop.permute.xlu0 %928
    %932 = vrot.lane.b32.xlu0 %v878, 112
    %v933 = vpop.permute.xlu0 %932
    %v935 = vsel %vm221, %v783, %v881
    %v936 = vsel %vm223, %v935, %v885
    %v937 = vsel %vm225, %v936, %v889
    %v938 = vsel %vm227, %v937, %v893
    %v939 = vsel %vm229, %v938, %v897
    %v940 = vsel %vm231, %v939, %v901
    %v941 = vsel %vm233, %v940, %v905
    %v942 = vsel %vm221, %v851, %v909
    %v943 = vsel %vm223, %v942, %v913
    %v944 = vsel %vm225, %v943, %v917
    %v945 = vsel %vm227, %v944, %v921
    %v946 = vsel %vm229, %v945, %v925
    %v947 = vsel %vm231, %v946, %v929
    %v948 = vsel %vm233, %v947, %v933
    %949 = vrot.lane.b32.xlu0 %v717, 127
    %v950 = vpop.permute.xlu0 %949
    %951 = vrot.lane.b32.xlu0 %v719, 127
    %v952 = vpop.permute.xlu0 %951
    %953 = vrot.lane.b32.xlu0 %v722, 127
    %v954 = vpop.permute.xlu0 %953
    %955 = vrot.lane.b32.xlu0 %v724, 127
    %v956 = vpop.permute.xlu0 %955
    %957 = vrot.lane.b32.xlu0 %v727, 127
    %v958 = vpop.permute.xlu0 %957
    %959 = vrot.lane.b32.xlu0 %v729, 127
    %v960 = vpop.permute.xlu0 %959
    %961 = vrot.lane.b32.xlu0 %v732, 127
    %v962 = vpop.permute.xlu0 %961
    %963 = vrot.lane.b32.xlu0 %v734, 127
    %v964 = vpop.permute.xlu0 %963
    %v973 = vcombine.low %v950, %v958
    %v974 = vcombine.high %v950, %v958
    %v976 = vunpack.c.l.s4 1983009808
    %v977 = vunpack.c.0.s8 %v976
    %v978 = vlaneseq
    %v979 = vshrl.u32 %v978, 7
    %v980 = vsub.s32 %v977, %v979
    %v981 = vrot.slane %v973, %v980
    %v983 = vunpack.c.l.s4 1983009808
    %v984 = vunpack.c.0.s8 %v983
    %v985 = vlaneseq
    %v986 = vshrl.u32 %v985, 7
    %v987 = vsub.s32 %v984, %v986
    %v988 = vrot.slane %v974, %v987
    %v989 = vcombine.low %v954, %v962
    %v990 = vcombine.high %v954, %v962
    %v992 = vunpack.c.l.s4 1983009808
    %v993 = vunpack.c.0.s8 %v992
    %v994 = vlaneseq
    %v995 = vshrl.u32 %v994, 7
    %v996 = vsub.s32 %v993, %v995
    %v997 = vrot.slane %v989, %v996
    %v999 = vunpack.c.l.s4 1983009808
    %v1000 = vunpack.c.0.s8 %v999
    %v1001 = vlaneseq
    %v1002 = vshrl.u32 %v1001, 7
    %v1003 = vsub.s32 %v1000, %v1002
    %v1004 = vrot.slane %v990, %v1003
    %v1005 = vcombine.low %v981, %v997
    %v1006 = vcombine.high %v981, %v997
    %v1008 = vunpack.c.l.s4 1934713408
    %v1009 = vunpack.c.0.s8 %v1008
    %v1010 = vlaneseq
    %v1011 = vshrl.u32 %v1010, 7
    %v1012 = vsub.s32 %v1009, %v1011
    %v1013 = vrot.slane %v1005, %v1012
    %v1015 = vunpack.c.l.s4 1934713408
    %v1016 = vunpack.c.0.s8 %v1015
    %v1017 = vlaneseq
    %v1018 = vshrl.u32 %v1017, 7
    %v1019 = vsub.s32 %v1016, %v1018
    %v1020 = vrot.slane %v1006, %v1019
    %v1021 = vcombine.low %v988, %v1004
    %v1022 = vcombine.high %v988, %v1004
    %v1024 = vunpack.c.l.s4 1934713408
    %v1025 = vunpack.c.0.s8 %v1024
    %v1026 = vlaneseq
    %v1027 = vshrl.u32 %v1026, 7
    %v1028 = vsub.s32 %v1025, %v1027
    %v1029 = vrot.slane %v1021, %v1028
    %v1031 = vunpack.c.l.s4 1934713408
    %v1032 = vunpack.c.0.s8 %v1031
    %v1033 = vlaneseq
    %v1034 = vshrl.u32 %v1033, 7
    %v1035 = vsub.s32 %v1032, %v1034
    %v1036 = vrot.slane %v1022, %v1035
    %v1037 = vcombine.high %v1013, 0.0
    %v1038 = vcombine.high %v1020, 0.0
    %v1039 = vcombine.high %v1029, 0.0
    %v1040 = vcombine.high %v1036, 0.0
    %v1041 = vcombine.low %v952, %v960
    %v1042 = vcombine.high %v952, %v960
    %v1044 = vunpack.c.l.s4 1983009808
    %v1045 = vunpack.c.0.s8 %v1044
    %v1046 = vlaneseq
    %v1047 = vshrl.u32 %v1046, 7
    %v1048 = vsub.s32 %v1045, %v1047
    %v1049 = vrot.slane %v1041, %v1048
    %v1051 = vunpack.c.l.s4 1983009808
    %v1052 = vunpack.c.0.s8 %v1051
    %v1053 = vlaneseq
    %v1054 = vshrl.u32 %v1053, 7
    %v1055 = vsub.s32 %v1052, %v1054
    %v1056 = vrot.slane %v1042, %v1055
    %v1057 = vcombine.low %v956, %v964
    %v1058 = vcombine.high %v956, %v964
    %v1060 = vunpack.c.l.s4 1983009808
    %v1061 = vunpack.c.0.s8 %v1060
    %v1062 = vlaneseq
    %v1063 = vshrl.u32 %v1062, 7
    %v1064 = vsub.s32 %v1061, %v1063
    %v1065 = vrot.slane %v1057, %v1064
    %v1067 = vunpack.c.l.s4 1983009808
    %v1068 = vunpack.c.0.s8 %v1067
    %v1069 = vlaneseq
    %v1070 = vshrl.u32 %v1069, 7
    %v1071 = vsub.s32 %v1068, %v1070
    %v1072 = vrot.slane %v1058, %v1071
    %v1073 = vcombine.low %v1049, %v1065
    %v1074 = vcombine.high %v1049, %v1065
    %v1076 = vunpack.c.l.s4 1934713408
    %v1077 = vunpack.c.0.s8 %v1076
    %v1078 = vlaneseq
    %v1079 = vshrl.u32 %v1078, 7
    %v1080 = vsub.s32 %v1077, %v1079
    %v1081 = vrot.slane %v1073, %v1080
    %v1083 = vunpack.c.l.s4 1934713408
    %v1084 = vunpack.c.0.s8 %v1083
    %v1085 = vlaneseq
    %v1086 = vshrl.u32 %v1085, 7
    %v1087 = vsub.s32 %v1084, %v1086
    %v1088 = vrot.slane %v1074, %v1087
    %v1089 = vcombine.low %v1056, %v1072
    %v1090 = vcombine.high %v1056, %v1072
    %v1092 = vunpack.c.l.s4 1934713408
    %v1093 = vunpack.c.0.s8 %v1092
    %v1094 = vlaneseq
    %v1095 = vshrl.u32 %v1094, 7
    %v1096 = vsub.s32 %v1093, %v1095
    %v1097 = vrot.slane %v1089, %v1096
    %v1099 = vunpack.c.l.s4 1934713408
    %v1100 = vunpack.c.0.s8 %v1099
    %v1101 = vlaneseq
    %v1102 = vshrl.u32 %v1101, 7
    %v1103 = vsub.s32 %v1100, %v1102
    %v1104 = vrot.slane %v1090, %v1103
    %v1105 = vcombine.high %v1081, 0.0
    %v1106 = vcombine.high %v1088, 0.0
    %v1107 = vcombine.high %v1097, 0.0
    %v1108 = vcombine.high %v1104, 0.0
    %1110 = vrot.lane.b32.xlu0 %v1037, 16
    %v1111 = vpop.permute.xlu0 %1110
    %1114 = vrot.lane.b32.xlu0 %v1020, 32
    %v1115 = vpop.permute.xlu0 %1114
    %1118 = vrot.lane.b32.xlu0 %v1038, 48
    %v1119 = vpop.permute.xlu0 %1118
    %1122 = vrot.lane.b32.xlu0 %v1029, 64
    %v1123 = vpop.permute.xlu0 %1122
    %1126 = vrot.lane.b32.xlu0 %v1039, 80
    %v1127 = vpop.permute.xlu0 %1126
    %1130 = vrot.lane.b32.xlu0 %v1036, 96
    %v1131 = vpop.permute.xlu0 %1130
    %1134 = vrot.lane.b32.xlu0 %v1040, 112
    %v1135 = vpop.permute.xlu0 %1134
    %1138 = vrot.lane.b32.xlu0 %v1105, 16
    %v1139 = vpop.permute.xlu0 %1138
    %1142 = vrot.lane.b32.xlu0 %v1088, 32
    %v1143 = vpop.permute.xlu0 %1142
    %1146 = vrot.lane.b32.xlu0 %v1106, 48
    %v1147 = vpop.permute.xlu0 %1146
    %1150 = vrot.lane.b32.xlu0 %v1097, 64
    %v1151 = vpop.permute.xlu0 %1150
    %1154 = vrot.lane.b32.xlu0 %v1107, 80
    %v1155 = vpop.permute.xlu0 %1154
    %1158 = vrot.lane.b32.xlu0 %v1104, 96
    %v1159 = vpop.permute.xlu0 %1158
    %1162 = vrot.lane.b32.xlu0 %v1108, 112
    %v1163 = vpop.permute.xlu0 %1162
    %v1165 = vsel %vm221, %v1013, %v1111
    %v1166 = vsel %vm223, %v1165, %v1115
    %v1167 = vsel %vm225, %v1166, %v1119
    %v1168 = vsel %vm227, %v1167, %v1123
    %v1169 = vsel %vm229, %v1168, %v1127
    %v1170 = vsel %vm231, %v1169, %v1131
    %v1171 = vsel %vm233, %v1170, %v1135
    %v1172 = vsel %vm221, %v1081, %v1139
    %v1173 = vsel %vm223, %v1172, %v1143
    %v1174 = vsel %vm225, %v1173, %v1147
    %v1175 = vsel %vm227, %v1174, %v1151
    %v1176 = vsel %vm229, %v1175, %v1155
    %v1177 = vsel %vm231, %v1176, %v1159
    %v1178 = vsel %vm233, %v1177, %v1163
    %1179 = vrot.lane.b32.xlu0 %v717, 126
    %v1180 = vpop.permute.xlu0 %1179
    %1181 = vrot.lane.b32.xlu0 %v719, 126
    %v1182 = vpop.permute.xlu0 %1181
    %1183 = vrot.lane.b32.xlu0 %v722, 126
    %v1184 = vpop.permute.xlu0 %1183
    %1185 = vrot.lane.b32.xlu0 %v724, 126
    %v1186 = vpop.permute.xlu0 %1185
    %1187 = vrot.lane.b32.xlu0 %v727, 126
    %v1188 = vpop.permute.xlu0 %1187
    %1189 = vrot.lane.b32.xlu0 %v729, 126
    %v1190 = vpop.permute.xlu0 %1189
    %1191 = vrot.lane.b32.xlu0 %v732, 126
    %v1192 = vpop.permute.xlu0 %1191
    %1193 = vrot.lane.b32.xlu0 %v734, 126
    %v1194 = vpop.permute.xlu0 %1193
    %v1203 = vcombine.low %v1180, %v1188
    %v1204 = vcombine.high %v1180, %v1188
    %v1206 = vunpack.c.l.s4 1983009808
    %v1207 = vunpack.c.0.s8 %v1206
    %v1208 = vlaneseq
    %v1209 = vshrl.u32 %v1208, 7
    %v1210 = vsub.s32 %v1207, %v1209
    %v1211 = vrot.slane %v1203, %v1210
    %v1213 = vunpack.c.l.s4 1983009808
    %v1214 = vunpack.c.0.s8 %v1213
    %v1215 = vlaneseq
    %v1216 = vshrl.u32 %v1215, 7
    %v1217 = vsub.s32 %v1214, %v1216
    %v1218 = vrot.slane %v1204, %v1217
    %v1219 = vcombine.low %v1184, %v1192
    %v1220 = vcombine.high %v1184, %v1192
    %v1222 = vunpack.c.l.s4 1983009808
    %v1223 = vunpack.c.0.s8 %v1222
    %v1224 = vlaneseq
    %v1225 = vshrl.u32 %v1224, 7
    %v1226 = vsub.s32 %v1223, %v1225
    %v1227 = vrot.slane %v1219, %v1226
    %v1229 = vunpack.c.l.s4 1983009808
    %v1230 = vunpack.c.0.s8 %v1229
    %v1231 = vlaneseq
    %v1232 = vshrl.u32 %v1231, 7
    %v1233 = vsub.s32 %v1230, %v1232
    %v1234 = vrot.slane %v1220, %v1233
    %v1235 = vcombine.low %v1211, %v1227
    %v1236 = vcombine.high %v1211, %v1227
    %v1238 = vunpack.c.l.s4 1934713408
    %v1239 = vunpack.c.0.s8 %v1238
    %v1240 = vlaneseq
    %v1241 = vshrl.u32 %v1240, 7
    %v1242 = vsub.s32 %v1239, %v1241
    %v1243 = vrot.slane %v1235, %v1242
    %v1245 = vunpack.c.l.s4 1934713408
    %v1246 = vunpack.c.0.s8 %v1245
    %v1247 = vlaneseq
    %v1248 = vshrl.u32 %v1247, 7
    %v1249 = vsub.s32 %v1246, %v1248
    %v1250 = vrot.slane %v1236, %v1249
    %v1251 = vcombine.low %v1218, %v1234
    %v1252 = vcombine.high %v1218, %v1234
    %v1254 = vunpack.c.l.s4 1934713408
    %v1255 = vunpack.c.0.s8 %v1254
    %v1256 = vlaneseq
    %v1257 = vshrl.u32 %v1256, 7
    %v1258 = vsub.s32 %v1255, %v1257
    %v1259 = vrot.slane %v1251, %v1258
    %v1261 = vunpack.c.l.s4 1934713408
    %v1262 = vunpack.c.0.s8 %v1261
    %v1263 = vlaneseq
    %v1264 = vshrl.u32 %v1263, 7
    %v1265 = vsub.s32 %v1262, %v1264
    %v1266 = vrot.slane %v1252, %v1265
    %v1267 = vcombine.high %v1243, 0.0
    %v1268 = vcombine.high %v1250, 0.0
    %v1269 = vcombine.high %v1259, 0.0
    %v1270 = vcombine.high %v1266, 0.0
    %v1271 = vcombine.low %v1182, %v1190
    %v1272 = vcombine.high %v1182, %v1190
    %v1274 = vunpack.c.l.s4 1983009808
    %v1275 = vunpack.c.0.s8 %v1274
    %v1276 = vlaneseq
    %v1277 = vshrl.u32 %v1276, 7
    %v1278 = vsub.s32 %v1275, %v1277
    %v1279 = vrot.slane %v1271, %v1278
    %v1281 = vunpack.c.l.s4 1983009808
    %v1282 = vunpack.c.0.s8 %v1281
    %v1283 = vlaneseq
    %v1284 = vshrl.u32 %v1283, 7
    %v1285 = vsub.s32 %v1282, %v1284
    %v1286 = vrot.slane %v1272, %v1285
    %v1287 = vcombine.low %v1186, %v1194
    %v1288 = vcombine.high %v1186, %v1194
    %v1290 = vunpack.c.l.s4 1983009808
    %v1291 = vunpack.c.0.s8 %v1290
    %v1292 = vlaneseq
    %v1293 = vshrl.u32 %v1292, 7
    %v1294 = vsub.s32 %v1291, %v1293
    %v1295 = vrot.slane %v1287, %v1294
    %v1297 = vunpack.c.l.s4 1983009808
    %v1298 = vunpack.c.0.s8 %v1297
    %v1299 = vlaneseq
    %v1300 = vshrl.u32 %v1299, 7
    %v1301 = vsub.s32 %v1298, %v1300
    %v1302 = vrot.slane %v1288, %v1301
    %v1303 = vcombine.low %v1279, %v1295
    %v1304 = vcombine.high %v1279, %v1295
    %v1306 = vunpack.c.l.s4 1934713408
    %v1307 = vunpack.c.0.s8 %v1306
    %v1308 = vlaneseq
    %v1309 = vshrl.u32 %v1308, 7
    %v1310 = vsub.s32 %v1307, %v1309
    %v1311 = vrot.slane %v1303, %v1310
    %v1313 = vunpack.c.l.s4 1934713408
    %v1314 = vunpack.c.0.s8 %v1313
    %v1315 = vlaneseq
    %v1316 = vshrl.u32 %v1315, 7
    %v1317 = vsub.s32 %v1314, %v1316
    %v1318 = vrot.slane %v1304, %v1317
    %v1319 = vcombine.low %v1286, %v1302
    %v1320 = vcombine.high %v1286, %v1302
    %v1322 = vunpack.c.l.s4 1934713408
    %v1323 = vunpack.c.0.s8 %v1322
    %v1324 = vlaneseq
    %v1325 = vshrl.u32 %v1324, 7
    %v1326 = vsub.s32 %v1323, %v1325
    %v1327 = vrot.slane %v1319, %v1326
    %v1329 = vunpack.c.l.s4 1934713408
    %v1330 = vunpack.c.0.s8 %v1329
    %v1331 = vlaneseq
    %v1332 = vshrl.u32 %v1331, 7
    %v1333 = vsub.s32 %v1330, %v1332
    %v1334 = vrot.slane %v1320, %v1333
    %v1335 = vcombine.high %v1311, 0.0
    %v1336 = vcombine.high %v1318, 0.0
    %v1337 = vcombine.high %v1327, 0.0
    %v1338 = vcombine.high %v1334, 0.0
    %1340 = vrot.lane.b32.xlu0 %v1267, 16
    %v1341 = vpop.permute.xlu0 %1340
    %1344 = vrot.lane.b32.xlu0 %v1250, 32
    %v1345 = vpop.permute.xlu0 %1344
    %1348 = vrot.lane.b32.xlu0 %v1268, 48
    %v1349 = vpop.permute.xlu0 %1348
    %1352 = vrot.lane.b32.xlu0 %v1259, 64
    %v1353 = vpop.permute.xlu0 %1352
    %1356 = vrot.lane.b32.xlu0 %v1269, 80
    %v1357 = vpop.permute.xlu0 %1356
    %1360 = vrot.lane.b32.xlu0 %v1266, 96
    %v1361 = vpop.permute.xlu0 %1360
    %1364 = vrot.lane.b32.xlu0 %v1270, 112
    %v1365 = vpop.permute.xlu0 %1364
    %1368 = vrot.lane.b32.xlu0 %v1335, 16
    %v1369 = vpop.permute.xlu0 %1368
    %1372 = vrot.lane.b32.xlu0 %v1318, 32
    %v1373 = vpop.permute.xlu0 %1372
    %1376 = vrot.lane.b32.xlu0 %v1336, 48
    %v1377 = vpop.permute.xlu0 %1376
    %1380 = vrot.lane.b32.xlu0 %v1327, 64
    %v1381 = vpop.permute.xlu0 %1380
    %1384 = vrot.lane.b32.xlu0 %v1337, 80
    %v1385 = vpop.permute.xlu0 %1384
    %1388 = vrot.lane.b32.xlu0 %v1334, 96
    %v1389 = vpop.permute.xlu0 %1388
    %1392 = vrot.lane.b32.xlu0 %v1338, 112
    %v1393 = vpop.permute.xlu0 %1392
    %v1395 = vsel %vm221, %v1243, %v1341
    %v1396 = vsel %vm223, %v1395, %v1345
    %v1397 = vsel %vm225, %v1396, %v1349
    %v1398 = vsel %vm227, %v1397, %v1353
    %v1399 = vsel %vm229, %v1398, %v1357
    %v1400 = vsel %vm231, %v1399, %v1361
    %v1401 = vsel %vm233, %v1400, %v1365
    %v1402 = vsel %vm221, %v1311, %v1369
    %v1403 = vsel %vm223, %v1402, %v1373
    %v1404 = vsel %vm225, %v1403, %v1377
    %v1405 = vsel %vm227, %v1404, %v1381
    %v1406 = vsel %vm229, %v1405, %v1385
    %v1407 = vsel %vm231, %v1406, %v1389
    %v1408 = vsel %vm233, %v1407, %v1393
    %vm1409 = vcmask 1045504
    %v1410 = vrot.slane %v17, 2
    %v1411 = vrot.slane %v18, 2
    %v1412 = vsel %vm1409, %v1410, %v1411
    %v1413 = vrot.slane %v19, 2
    %v1414 = vsel %vm1409, %v1411, %v1413
    %v1415 = vrot.slane %v20, 2
    %v1416 = vrot.slane %v21, 2
    %v1417 = vsel %vm1409, %v1415, %v1416
    %v1418 = vrot.slane %v22, 2
    %v1419 = vsel %vm1409, %v1416, %v1418
    %v1420 = vrot.slane %v23, 2
    %v1421 = vrot.slane %v24, 2
    %v1422 = vsel %vm1409, %v1420, %v1421
    %v1423 = vrot.slane %v25, 2
    %v1424 = vsel %vm1409, %v1421, %v1423
    %v1425 = vrot.slane %v26, 2
    %v1426 = vrot.slane %v27, 2
    %v1427 = vsel %vm1409, %v1425, %v1426
    %v1428 = vrot.slane %v28, 2
    %v1429 = vsel %vm1409, %v1426, %v1428
    %v1438 = vcombine.low %v1412, %v1422
    %v1439 = vcombine.high %v1412, %v1422
    %v1441 = vunpack.c.l.s4 1983009808
    %v1442 = vunpack.c.0.s8 %v1441
    %v1443 = vlaneseq
    %v1444 = vshrl.u32 %v1443, 7
    %v1445 = vsub.s32 %v1442, %v1444
    %v1446 = vrot.slane %v1438, %v1445
    %v1448 = vunpack.c.l.s4 1983009808
    %v1449 = vunpack.c.0.s8 %v1448
    %v1450 = vlaneseq
    %v1451 = vshrl.u32 %v1450, 7
    %v1452 = vsub.s32 %v1449, %v1451
    %v1453 = vrot.slane %v1439, %v1452
    %v1454 = vcombine.low %v1417, %v1427
    %v1455 = vcombine.high %v1417, %v1427
    %v1457 = vunpack.c.l.s4 1983009808
    %v1458 = vunpack.c.0.s8 %v1457
    %v1459 = vlaneseq
    %v1460 = vshrl.u32 %v1459, 7
    %v1461 = vsub.s32 %v1458, %v1460
    %v1462 = vrot.slane %v1454, %v1461
    %v1464 = vunpack.c.l.s4 1983009808
    %v1465 = vunpack.c.0.s8 %v1464
    %v1466 = vlaneseq
    %v1467 = vshrl.u32 %v1466, 7
    %v1468 = vsub.s32 %v1465, %v1467
    %v1469 = vrot.slane %v1455, %v1468
    %v1470 = vcombine.low %v1446, %v1462
    %v1471 = vcombine.high %v1446, %v1462
    %v1473 = vunpack.c.l.s4 1934713408
    %v1474 = vunpack.c.0.s8 %v1473
    %v1475 = vlaneseq
    %v1476 = vshrl.u32 %v1475, 7
    %v1477 = vsub.s32 %v1474, %v1476
    %v1478 = vrot.slane %v1470, %v1477
    %v1480 = vunpack.c.l.s4 1934713408
    %v1481 = vunpack.c.0.s8 %v1480
    %v1482 = vlaneseq
    %v1483 = vshrl.u32 %v1482, 7
    %v1484 = vsub.s32 %v1481, %v1483
    %v1485 = vrot.slane %v1471, %v1484
    %v1486 = vcombine.low %v1453, %v1469
    %v1487 = vcombine.high %v1453, %v1469
    %v1489 = vunpack.c.l.s4 1934713408
    %v1490 = vunpack.c.0.s8 %v1489
    %v1491 = vlaneseq
    %v1492 = vshrl.u32 %v1491, 7
    %v1493 = vsub.s32 %v1490, %v1492
    %v1494 = vrot.slane %v1486, %v1493
    %v1496 = vunpack.c.l.s4 1934713408
    %v1497 = vunpack.c.0.s8 %v1496
    %v1498 = vlaneseq
    %v1499 = vshrl.u32 %v1498, 7
    %v1500 = vsub.s32 %v1497, %v1499
    %v1501 = vrot.slane %v1487, %v1500
    %v1502 = vcombine.high %v1478, 0.0
    %v1503 = vcombine.high %v1485, 0.0
    %v1504 = vcombine.high %v1494, 0.0
    %v1505 = vcombine.high %v1501, 0.0
    %v1506 = vcombine.low %v1414, %v1424
    %v1507 = vcombine.high %v1414, %v1424
    %v1509 = vunpack.c.l.s4 1983009808
    %v1510 = vunpack.c.0.s8 %v1509
    %v1511 = vlaneseq
    %v1512 = vshrl.u32 %v1511, 7
    %v1513 = vsub.s32 %v1510, %v1512
    %v1514 = vrot.slane %v1506, %v1513
    %v1516 = vunpack.c.l.s4 1983009808
    %v1517 = vunpack.c.0.s8 %v1516
    %v1518 = vlaneseq
    %v1519 = vshrl.u32 %v1518, 7
    %v1520 = vsub.s32 %v1517, %v1519
    %v1521 = vrot.slane %v1507, %v1520
    %v1522 = vcombine.low %v1419, %v1429
    %v1523 = vcombine.high %v1419, %v1429
    %v1525 = vunpack.c.l.s4 1983009808
    %v1526 = vunpack.c.0.s8 %v1525
    %v1527 = vlaneseq
    %v1528 = vshrl.u32 %v1527, 7
    %v1529 = vsub.s32 %v1526, %v1528
    %v1530 = vrot.slane %v1522, %v1529
    %v1532 = vunpack.c.l.s4 1983009808
    %v1533 = vunpack.c.0.s8 %v1532
    %v1534 = vlaneseq
    %v1535 = vshrl.u32 %v1534, 7
    %v1536 = vsub.s32 %v1533, %v1535
    %v1537 = vrot.slane %v1523, %v1536
    %v1538 = vcombine.low %v1514, %v1530
    %v1539 = vcombine.high %v1514, %v1530
    %v1541 = vunpack.c.l.s4 1934713408
    %v1542 = vunpack.c.0.s8 %v1541
    %v1543 = vlaneseq
    %v1544 = vshrl.u32 %v1543, 7
    %v1545 = vsub.s32 %v1542, %v1544
    %v1546 = vrot.slane %v1538, %v1545
    %v1548 = vunpack.c.l.s4 1934713408
    %v1549 = vunpack.c.0.s8 %v1548
    %v1550 = vlaneseq
    %v1551 = vshrl.u32 %v1550, 7
    %v1552 = vsub.s32 %v1549, %v1551
    %v1553 = vrot.slane %v1539, %v1552
    %v1554 = vcombine.low %v1521, %v1537
    %v1555 = vcombine.high %v1521, %v1537
    %v1557 = vunpack.c.l.s4 1934713408
    %v1558 = vunpack.c.0.s8 %v1557
    %v1559 = vlaneseq
    %v1560 = vshrl.u32 %v1559, 7
    %v1561 = vsub.s32 %v1558, %v1560
    %v1562 = vrot.slane %v1554, %v1561
    %v1564 = vunpack.c.l.s4 1934713408
    %v1565 = vunpack.c.0.s8 %v1564
    %v1566 = vlaneseq
    %v1567 = vshrl.u32 %v1566, 7
    %v1568 = vsub.s32 %v1565, %v1567
    %v1569 = vrot.slane %v1555, %v1568
    %v1570 = vcombine.high %v1546, 0.0
    %v1571 = vcombine.high %v1553, 0.0
    %v1572 = vcombine.high %v1562, 0.0
    %v1573 = vcombine.high %v1569, 0.0
    %1575 = vrot.lane.b32.xlu0 %v1502, 16
    %v1576 = vpop.permute.xlu0 %1575
    %1579 = vrot.lane.b32.xlu0 %v1485, 32
    %v1580 = vpop.permute.xlu0 %1579
    %1583 = vrot.lane.b32.xlu0 %v1503, 48
    %v1584 = vpop.permute.xlu0 %1583
    %1587 = vrot.lane.b32.xlu0 %v1494, 64
    %v1588 = vpop.permute.xlu0 %1587
    %1591 = vrot.lane.b32.xlu0 %v1504, 80
    %v1592 = vpop.permute.xlu0 %1591
    %1595 = vrot.lane.b32.xlu0 %v1501, 96
    %v1596 = vpop.permute.xlu0 %1595
    %1599 = vrot.lane.b32.xlu0 %v1505, 112
    %v1600 = vpop.permute.xlu0 %1599
    %1603 = vrot.lane.b32.xlu0 %v1570, 16
    %v1604 = vpop.permute.xlu0 %1603
    %1607 = vrot.lane.b32.xlu0 %v1553, 32
    %v1608 = vpop.permute.xlu0 %1607
    %1611 = vrot.lane.b32.xlu0 %v1571, 48
    %v1612 = vpop.permute.xlu0 %1611
    %1615 = vrot.lane.b32.xlu0 %v1562, 64
    %v1616 = vpop.permute.xlu0 %1615
    %1619 = vrot.lane.b32.xlu0 %v1572, 80
    %v1620 = vpop.permute.xlu0 %1619
    %1623 = vrot.lane.b32.xlu0 %v1569, 96
    %v1624 = vpop.permute.xlu0 %1623
    %1627 = vrot.lane.b32.xlu0 %v1573, 112
    %v1628 = vpop.permute.xlu0 %1627
    %v1630 = vsel %vm221, %v1478, %v1576
    %v1631 = vsel %vm223, %v1630, %v1580
    %v1632 = vsel %vm225, %v1631, %v1584
    %v1633 = vsel %vm227, %v1632, %v1588
    %v1634 = vsel %vm229, %v1633, %v1592
    %v1635 = vsel %vm231, %v1634, %v1596
    %v1636 = vsel %vm233, %v1635, %v1600
    %v1637 = vsel %vm221, %v1546, %v1604
    %v1638 = vsel %vm223, %v1637, %v1608
    %v1639 = vsel %vm225, %v1638, %v1612
    %v1640 = vsel %vm227, %v1639, %v1616
    %v1641 = vsel %vm229, %v1640, %v1620
    %v1642 = vsel %vm231, %v1641, %v1624
    %v1643 = vsel %vm233, %v1642, %v1628
    %1644 = vrot.lane.b32.xlu0 %v1412, 127
    %v1645 = vpop.permute.xlu0 %1644
    %1646 = vrot.lane.b32.xlu0 %v1414, 127
    %v1647 = vpop.permute.xlu0 %1646
    %1648 = vrot.lane.b32.xlu0 %v1417, 127
    %v1649 = vpop.permute.xlu0 %1648
    %1650 = vrot.lane.b32.xlu0 %v1419, 127
    %v1651 = vpop.permute.xlu0 %1650
    %1652 = vrot.lane.b32.xlu0 %v1422, 127
    %v1653 = vpop.permute.xlu0 %1652
    %1654 = vrot.lane.b32.xlu0 %v1424, 127
    %v1655 = vpop.permute.xlu0 %1654
    %1656 = vrot.lane.b32.xlu0 %v1427, 127
    %v1657 = vpop.permute.xlu0 %1656
    %1658 = vrot.lane.b32.xlu0 %v1429, 127
    %v1659 = vpop.permute.xlu0 %1658
    %v1668 = vcombine.low %v1645, %v1653
    %v1669 = vcombine.high %v1645, %v1653
    %v1671 = vunpack.c.l.s4 1983009808
    %v1672 = vunpack.c.0.s8 %v1671
    %v1673 = vlaneseq
    %v1674 = vshrl.u32 %v1673, 7
    %v1675 = vsub.s32 %v1672, %v1674
    %v1676 = vrot.slane %v1668, %v1675
    %v1678 = vunpack.c.l.s4 1983009808
    %v1679 = vunpack.c.0.s8 %v1678
    %v1680 = vlaneseq
    %v1681 = vshrl.u32 %v1680, 7
    %v1682 = vsub.s32 %v1679, %v1681
    %v1683 = vrot.slane %v1669, %v1682
    %v1684 = vcombine.low %v1649, %v1657
    %v1685 = vcombine.high %v1649, %v1657
    %v1687 = vunpack.c.l.s4 1983009808
    %v1688 = vunpack.c.0.s8 %v1687
    %v1689 = vlaneseq
    %v1690 = vshrl.u32 %v1689, 7
    %v1691 = vsub.s32 %v1688, %v1690
    %v1692 = vrot.slane %v1684, %v1691
    %v1694 = vunpack.c.l.s4 1983009808
    %v1695 = vunpack.c.0.s8 %v1694
    %v1696 = vlaneseq
    %v1697 = vshrl.u32 %v1696, 7
    %v1698 = vsub.s32 %v1695, %v1697
    %v1699 = vrot.slane %v1685, %v1698
    %v1700 = vcombine.low %v1676, %v1692
    %v1701 = vcombine.high %v1676, %v1692
    %v1703 = vunpack.c.l.s4 1934713408
    %v1704 = vunpack.c.0.s8 %v1703
    %v1705 = vlaneseq
    %v1706 = vshrl.u32 %v1705, 7
    %v1707 = vsub.s32 %v1704, %v1706
    %v1708 = vrot.slane %v1700, %v1707
    %v1710 = vunpack.c.l.s4 1934713408
    %v1711 = vunpack.c.0.s8 %v1710
    %v1712 = vlaneseq
    %v1713 = vshrl.u32 %v1712, 7
    %v1714 = vsub.s32 %v1711, %v1713
    %v1715 = vrot.slane %v1701, %v1714
    %v1716 = vcombine.low %v1683, %v1699
    %v1717 = vcombine.high %v1683, %v1699
    %v1719 = vunpack.c.l.s4 1934713408
    %v1720 = vunpack.c.0.s8 %v1719
    %v1721 = vlaneseq
    %v1722 = vshrl.u32 %v1721, 7
    %v1723 = vsub.s32 %v1720, %v1722
    %v1724 = vrot.slane %v1716, %v1723
    %v1726 = vunpack.c.l.s4 1934713408
    %v1727 = vunpack.c.0.s8 %v1726
    %v1728 = vlaneseq
    %v1729 = vshrl.u32 %v1728, 7
    %v1730 = vsub.s32 %v1727, %v1729
    %v1731 = vrot.slane %v1717, %v1730
    %v1732 = vcombine.high %v1708, 0.0
    %v1733 = vcombine.high %v1715, 0.0
    %v1734 = vcombine.high %v1724, 0.0
    %v1735 = vcombine.high %v1731, 0.0
    %v1736 = vcombine.low %v1647, %v1655
    %v1737 = vcombine.high %v1647, %v1655
    %v1739 = vunpack.c.l.s4 1983009808
    %v1740 = vunpack.c.0.s8 %v1739
    %v1741 = vlaneseq
    %v1742 = vshrl.u32 %v1741, 7
    %v1743 = vsub.s32 %v1740, %v1742
    %v1744 = vrot.slane %v1736, %v1743
    %v1746 = vunpack.c.l.s4 1983009808
    %v1747 = vunpack.c.0.s8 %v1746
    %v1748 = vlaneseq
    %v1749 = vshrl.u32 %v1748, 7
    %v1750 = vsub.s32 %v1747, %v1749
    %v1751 = vrot.slane %v1737, %v1750
    %v1752 = vcombine.low %v1651, %v1659
    %v1753 = vcombine.high %v1651, %v1659
    %v1755 = vunpack.c.l.s4 1983009808
    %v1756 = vunpack.c.0.s8 %v1755
    %v1757 = vlaneseq
    %v1758 = vshrl.u32 %v1757, 7
    %v1759 = vsub.s32 %v1756, %v1758
    %v1760 = vrot.slane %v1752, %v1759
    %v1762 = vunpack.c.l.s4 1983009808
    %v1763 = vunpack.c.0.s8 %v1762
    %v1764 = vlaneseq
    %v1765 = vshrl.u32 %v1764, 7
    %v1766 = vsub.s32 %v1763, %v1765
    %v1767 = vrot.slane %v1753, %v1766
    %v1768 = vcombine.low %v1744, %v1760
    %v1769 = vcombine.high %v1744, %v1760
    %v1771 = vunpack.c.l.s4 1934713408
    %v1772 = vunpack.c.0.s8 %v1771
    %v1773 = vlaneseq
    %v1774 = vshrl.u32 %v1773, 7
    %v1775 = vsub.s32 %v1772, %v1774
    %v1776 = vrot.slane %v1768, %v1775
    %v1778 = vunpack.c.l.s4 1934713408
    %v1779 = vunpack.c.0.s8 %v1778
    %v1780 = vlaneseq
    %v1781 = vshrl.u32 %v1780, 7
    %v1782 = vsub.s32 %v1779, %v1781
    %v1783 = vrot.slane %v1769, %v1782
    %v1784 = vcombine.low %v1751, %v1767
    %v1785 = vcombine.high %v1751, %v1767
    %v1787 = vunpack.c.l.s4 1934713408
    %v1788 = vunpack.c.0.s8 %v1787
    %v1789 = vlaneseq
    %v1790 = vshrl.u32 %v1789, 7
    %v1791 = vsub.s32 %v1788, %v1790
    %v1792 = vrot.slane %v1784, %v1791
    %v1794 = vunpack.c.l.s4 1934713408
    %v1795 = vunpack.c.0.s8 %v1794
    %v1796 = vlaneseq
    %v1797 = vshrl.u32 %v1796, 7
    %v1798 = vsub.s32 %v1795, %v1797
    %v1799 = vrot.slane %v1785, %v1798
    %v1800 = vcombine.high %v1776, 0.0
    %v1801 = vcombine.high %v1783, 0.0
    %v1802 = vcombine.high %v1792, 0.0
    %v1803 = vcombine.high %v1799, 0.0
    %1805 = vrot.lane.b32.xlu0 %v1732, 16
    %v1806 = vpop.permute.xlu0 %1805
    %1809 = vrot.lane.b32.xlu0 %v1715, 32
    %v1810 = vpop.permute.xlu0 %1809
    %1813 = vrot.lane.b32.xlu0 %v1733, 48
    %v1814 = vpop.permute.xlu0 %1813
    %1817 = vrot.lane.b32.xlu0 %v1724, 64
    %v1818 = vpop.permute.xlu0 %1817
    %1821 = vrot.lane.b32.xlu0 %v1734, 80
    %v1822 = vpop.permute.xlu0 %1821
    %1825 = vrot.lane.b32.xlu0 %v1731, 96
    %v1826 = vpop.permute.xlu0 %1825
    %1829 = vrot.lane.b32.xlu0 %v1735, 112
    %v1830 = vpop.permute.xlu0 %1829
    %1833 = vrot.lane.b32.xlu0 %v1800, 16
    %v1834 = vpop.permute.xlu0 %1833
    %1837 = vrot.lane.b32.xlu0 %v1783, 32
    %v1838 = vpop.permute.xlu0 %1837
    %1841 = vrot.lane.b32.xlu0 %v1801, 48
    %v1842 = vpop.permute.xlu0 %1841
    %1845 = vrot.lane.b32.xlu0 %v1792, 64
    %v1846 = vpop.permute.xlu0 %1845
    %1849 = vrot.lane.b32.xlu0 %v1802, 80
    %v1850 = vpop.permute.xlu0 %1849
    %1853 = vrot.lane.b32.xlu0 %v1799, 96
    %v1854 = vpop.permute.xlu0 %1853
    %1857 = vrot.lane.b32.xlu0 %v1803, 112
    %v1858 = vpop.permute.xlu0 %1857
    %v1860 = vsel %vm221, %v1708, %v1806
    %v1861 = vsel %vm223, %v1860, %v1810
    %v1862 = vsel %vm225, %v1861, %v1814
    %v1863 = vsel %vm227, %v1862, %v1818
    %v1864 = vsel %vm229, %v1863, %v1822
    %v1865 = vsel %vm231, %v1864, %v1826
    %v1866 = vsel %vm233, %v1865, %v1830
    %v1867 = vsel %vm221, %v1776, %v1834
    %v1868 = vsel %vm223, %v1867, %v1838
    %v1869 = vsel %vm225, %v1868, %v1842
    %v1870 = vsel %vm227, %v1869, %v1846
    %v1871 = vsel %vm229, %v1870, %v1850
    %v1872 = vsel %vm231, %v1871, %v1854
    %v1873 = vsel %vm233, %v1872, %v1858
    %1874 = vrot.lane.b32.xlu0 %v1412, 126
    %v1875 = vpop.permute.xlu0 %1874
    %1876 = vrot.lane.b32.xlu0 %v1414, 126
    %v1877 = vpop.permute.xlu0 %1876
    %1878 = vrot.lane.b32.xlu0 %v1417, 126
    %v1879 = vpop.permute.xlu0 %1878
    %1880 = vrot.lane.b32.xlu0 %v1419, 126
    %v1881 = vpop.permute.xlu0 %1880
    %1882 = vrot.lane.b32.xlu0 %v1422, 126
    %v1883 = vpop.permute.xlu0 %1882
    %1884 = vrot.lane.b32.xlu0 %v1424, 126
    %v1885 = vpop.permute.xlu0 %1884
    %1886 = vrot.lane.b32.xlu0 %v1427, 126
    %v1887 = vpop.permute.xlu0 %1886
    %1888 = vrot.lane.b32.xlu0 %v1429, 126
    %v1889 = vpop.permute.xlu0 %1888
    %v1898 = vcombine.low %v1875, %v1883
    %v1899 = vcombine.high %v1875, %v1883
    %v1901 = vunpack.c.l.s4 1983009808
    %v1902 = vunpack.c.0.s8 %v1901
    %v1903 = vlaneseq
    %v1904 = vshrl.u32 %v1903, 7
    %v1905 = vsub.s32 %v1902, %v1904
    %v1906 = vrot.slane %v1898, %v1905
    %v1908 = vunpack.c.l.s4 1983009808
    %v1909 = vunpack.c.0.s8 %v1908
    %v1910 = vlaneseq
    %v1911 = vshrl.u32 %v1910, 7
    %v1912 = vsub.s32 %v1909, %v1911
    %v1913 = vrot.slane %v1899, %v1912
    %v1914 = vcombine.low %v1879, %v1887
    %v1915 = vcombine.high %v1879, %v1887
    %v1917 = vunpack.c.l.s4 1983009808
    %v1918 = vunpack.c.0.s8 %v1917
    %v1919 = vlaneseq
    %v1920 = vshrl.u32 %v1919, 7
    %v1921 = vsub.s32 %v1918, %v1920
    %v1922 = vrot.slane %v1914, %v1921
    %v1924 = vunpack.c.l.s4 1983009808
    %v1925 = vunpack.c.0.s8 %v1924
    %v1926 = vlaneseq
    %v1927 = vshrl.u32 %v1926, 7
    %v1928 = vsub.s32 %v1925, %v1927
    %v1929 = vrot.slane %v1915, %v1928
    %v1930 = vcombine.low %v1906, %v1922
    %v1931 = vcombine.high %v1906, %v1922
    %v1933 = vunpack.c.l.s4 1934713408
    %v1934 = vunpack.c.0.s8 %v1933
    %v1935 = vlaneseq
    %v1936 = vshrl.u32 %v1935, 7
    %v1937 = vsub.s32 %v1934, %v1936
    %v1938 = vrot.slane %v1930, %v1937
    %v1940 = vunpack.c.l.s4 1934713408
    %v1941 = vunpack.c.0.s8 %v1940
    %v1942 = vlaneseq
    %v1943 = vshrl.u32 %v1942, 7
    %v1944 = vsub.s32 %v1941, %v1943
    %v1945 = vrot.slane %v1931, %v1944
    %v1946 = vcombine.low %v1913, %v1929
    %v1947 = vcombine.high %v1913, %v1929
    %v1949 = vunpack.c.l.s4 1934713408
    %v1950 = vunpack.c.0.s8 %v1949
    %v1951 = vlaneseq
    %v1952 = vshrl.u32 %v1951, 7
    %v1953 = vsub.s32 %v1950, %v1952
    %v1954 = vrot.slane %v1946, %v1953
    %v1956 = vunpack.c.l.s4 1934713408
    %v1957 = vunpack.c.0.s8 %v1956
    %v1958 = vlaneseq
    %v1959 = vshrl.u32 %v1958, 7
    %v1960 = vsub.s32 %v1957, %v1959
    %v1961 = vrot.slane %v1947, %v1960
    %v1962 = vcombine.high %v1938, 0.0
    %v1963 = vcombine.high %v1945, 0.0
    %v1964 = vcombine.high %v1954, 0.0
    %v1965 = vcombine.high %v1961, 0.0
    %v1966 = vcombine.low %v1877, %v1885
    %v1967 = vcombine.high %v1877, %v1885
    %v1969 = vunpack.c.l.s4 1983009808
    %v1970 = vunpack.c.0.s8 %v1969
    %v1971 = vlaneseq
    %v1972 = vshrl.u32 %v1971, 7
    %v1973 = vsub.s32 %v1970, %v1972
    %v1974 = vrot.slane %v1966, %v1973
    %v1976 = vunpack.c.l.s4 1983009808
    %v1977 = vunpack.c.0.s8 %v1976
    %v1978 = vlaneseq
    %v1979 = vshrl.u32 %v1978, 7
    %v1980 = vsub.s32 %v1977, %v1979
    %v1981 = vrot.slane %v1967, %v1980
    %v1982 = vcombine.low %v1881, %v1889
    %v1983 = vcombine.high %v1881, %v1889
    %v1985 = vunpack.c.l.s4 1983009808
    %v1986 = vunpack.c.0.s8 %v1985
    %v1987 = vlaneseq
    %v1988 = vshrl.u32 %v1987, 7
    %v1989 = vsub.s32 %v1986, %v1988
    %v1990 = vrot.slane %v1982, %v1989
    %v1992 = vunpack.c.l.s4 1983009808
    %v1993 = vunpack.c.0.s8 %v1992
    %v1994 = vlaneseq
    %v1995 = vshrl.u32 %v1994, 7
    %v1996 = vsub.s32 %v1993, %v1995
    %v1997 = vrot.slane %v1983, %v1996
    %v1998 = vcombine.low %v1974, %v1990
    %v1999 = vcombine.high %v1974, %v1990
    %v2001 = vunpack.c.l.s4 1934713408
    %v2002 = vunpack.c.0.s8 %v2001
    %v2003 = vlaneseq
    %v2004 = vshrl.u32 %v2003, 7
    %v2005 = vsub.s32 %v2002, %v2004
    %v2006 = vrot.slane %v1998, %v2005
    %v2008 = vunpack.c.l.s4 1934713408
    %v2009 = vunpack.c.0.s8 %v2008
    %v2010 = vlaneseq
    %v2011 = vshrl.u32 %v2010, 7
    %v2012 = vsub.s32 %v2009, %v2011
    %v2013 = vrot.slane %v1999, %v2012
    %v2014 = vcombine.low %v1981, %v1997
    %v2015 = vcombine.high %v1981, %v1997
    %v2017 = vunpack.c.l.s4 1934713408
    %v2018 = vunpack.c.0.s8 %v2017
    %v2019 = vlaneseq
    %v2020 = vshrl.u32 %v2019, 7
    %v2021 = vsub.s32 %v2018, %v2020
    %v2022 = vrot.slane %v2014, %v2021
    %v2024 = vunpack.c.l.s4 1934713408
    %v2025 = vunpack.c.0.s8 %v2024
    %v2026 = vlaneseq
    %v2027 = vshrl.u32 %v2026, 7
    %v2028 = vsub.s32 %v2025, %v2027
    %v2029 = vrot.slane %v2015, %v2028
    %v2030 = vcombine.high %v2006, 0.0
    %v2031 = vcombine.high %v2013, 0.0
    %v2032 = vcombine.high %v2022, 0.0
    %v2033 = vcombine.high %v2029, 0.0
    %2035 = vrot.lane.b32.xlu0 %v1962, 16
    %v2036 = vpop.permute.xlu0 %2035
    %2039 = vrot.lane.b32.xlu0 %v1945, 32
    %v2040 = vpop.permute.xlu0 %2039
    %2043 = vrot.lane.b32.xlu0 %v1963, 48
    %v2044 = vpop.permute.xlu0 %2043
    %2047 = vrot.lane.b32.xlu0 %v1954, 64
    %v2048 = vpop.permute.xlu0 %2047
    %2051 = vrot.lane.b32.xlu0 %v1964, 80
    %v2052 = vpop.permute.xlu0 %2051
    %2055 = vrot.lane.b32.xlu0 %v1961, 96
    %v2056 = vpop.permute.xlu0 %2055
    %2059 = vrot.lane.b32.xlu0 %v1965, 112
    %v2060 = vpop.permute.xlu0 %2059
    %2063 = vrot.lane.b32.xlu0 %v2030, 16
    %v2064 = vpop.permute.xlu0 %2063
    %2067 = vrot.lane.b32.xlu0 %v2013, 32
    %v2068 = vpop.permute.xlu0 %2067
    %2071 = vrot.lane.b32.xlu0 %v2031, 48
    %v2072 = vpop.permute.xlu0 %2071
    %2075 = vrot.lane.b32.xlu0 %v2022, 64
    %v2076 = vpop.permute.xlu0 %2075
    %2079 = vrot.lane.b32.xlu0 %v2032, 80
    %v2080 = vpop.permute.xlu0 %2079
    %2083 = vrot.lane.b32.xlu0 %v2029, 96
    %v2084 = vpop.permute.xlu0 %2083
    %2087 = vrot.lane.b32.xlu0 %v2033, 112
    %v2088 = vpop.permute.xlu0 %2087
    %v2090 = vsel %vm221, %v1938, %v2036
    %v2091 = vsel %vm223, %v2090, %v2040
    %v2092 = vsel %vm225, %v2091, %v2044
    %v2093 = vsel %vm227, %v2092, %v2048
    %v2094 = vsel %vm229, %v2093, %v2052
    %v2095 = vsel %vm231, %v2094, %v2056
    %v2096 = vsel %vm233, %v2095, %v2060
    %v2097 = vsel %vm221, %v2006, %v2064
    %v2098 = vsel %vm223, %v2097, %v2068
    %v2099 = vsel %vm225, %v2098, %v2072
    %v2100 = vsel %vm227, %v2099, %v2076
    %v2101 = vsel %vm229, %v2100, %v2080
    %v2102 = vsel %vm231, %v2101, %v2084
    %v2103 = vsel %vm233, %v2102, %v2088
    %v2106 = vrot.slane %v472, 4
    %v2107 = vrot.slane %v479, 4
    %v2112 = vrot.slane %v941, 4
    %v2113 = vrot.slane %v948, 4
    %v2118 = vrot.slane %v1401, 4
    %v2119 = vrot.slane %v1408, 4
    %v2124 = vrot.slane %v1866, 4
    %v2125 = vrot.slane %v1873, 4
    %vm2128 = vcmask 1043456
    %v2129 = vsel %vm2128, %v234, %v2106
    %v2130 = vsel %vm2128, %v241, %v2107
    %v2131 = vsel %vm2128, %v702, %v2112
    %v2132 = vsel %vm2128, %v709, %v2113
    %v2133 = vsel %vm2128, %v1171, %v2118
    %v2134 = vsel %vm2128, %v1178, %v2119
    %v2135 = vsel %vm2128, %v1636, %v2124
    %v2136 = vsel %vm2128, %v1643, %v2125
    %2138 = vset.pattern.permute.xlu0 0
    %2139 = vperm.xlu0 %2138, %v16
    %v2140 = vpop.permute.xlu0 %2139
    %vm2142 = vcmask 293888
    %v2144 = vsel %vm2142, %v15, 0
    %v2147 = vsel %vm2128, %v2096, 0
    %v2150 = vsel %vm2128, %v2103, 0
    %2152 = vmatprep.subr.mxu0 %v2130
    %2153 = vmatpush1.msra.mxu0 %v2129
    %2154 = vmatprep.subr.mxu0 %v2132
    %2155 = vmatpush1.msra.mxu0 %v2131
    %2156 = vmatprep.subr.mxu0 %v2134
    %2157 = vmatpush1.msra.mxu0 %v2133
    %2158 = vmatprep.subr.mxu0 %v2136
    %2159 = vmatpush1.msra.mxu0 %v2135
    %2160 = vmatprep.subr.mxu0 %v2150
    %2161 = vmatpush1.msra.mxu0 %v2147
    %2162 = vmatprep.subr.mxu0 0.0
    %2163 = vmatpush1.msra.mxu0 0.0
    %2164 = vmatprep.subr.mxu0 0.0
    %2165 = vmatpush1.msra.mxu0 0.0
    %2166 = vmatprep.subr.mxu0 0.0
    %2167 = vmatpush1.msra.mxu0 0.0
    %2168 = vmatprep.subr.mxu0 0.0
    %2169 = vmatpush1.msra.mxu0 0.0
    %2170 = vmatprep.subr.mxu0 0.0
    %2171 = vmatpush1.msra.mxu0 0.0
    %2172 = vmatprep.subr.mxu0 0.0
    %2173 = vmatpush1.msra.mxu0 0.0
    %2174 = vmatprep.subr.mxu0 0.0
    %2175 = vmatpush1.msra.mxu0 0.0
    %2176 = vmatprep.subr.mxu0 0.0
    %2177 = vmatpush1.msra.mxu0 0.0
    %2178 = vmatprep.subr.mxu0 0.0
    %2179 = vmatpush1.msra.mxu0 0.0
    %2180 = vmatprep.subr.mxu0 0.0
    %2181 = vmatpush1.msra.mxu0 0.0
    %2182 = vmatprep.subr.mxu0 0.0
    %2183 = vmatpush1.msra.mxu0 0.0
    %2184 = vmatprep.subr.mxu0 0.0
    %2185 = vmatpush1.msra.mxu0 0.0
    %2186 = vmatprep.subr.mxu0 0.0
    %2187 = vmatpush1.msra.mxu0 0.0
    %2188 = vmatprep.subr.mxu0 0.0
    %2189 = vmatpush1.msra.mxu0 0.0
    %2190 = vmatprep.subr.mxu0 0.0
    %2191 = vmatpush1.msra.mxu0 0.0
    %2192 = vmatprep.subr.mxu0 0.0
    %2193 = vmatpush1.msra.mxu0 0.0
    %2194 = vmatprep.subr.mxu0 0.0
    %2195 = vmatpush1.msra.mxu0 0.0
    %2196 = vmatprep.subr.mxu0 0.0
    %2197 = vmatpush1.msra.mxu0 0.0
    %2198 = vmatprep.subr.mxu0 0.0
    %2199 = vmatpush1.msra.mxu0 0.0
    %2200 = vmatprep.subr.mxu0 0.0
    %2201 = vmatpush1.msra.mxu0 0.0
    %2202 = vmatprep.subr.mxu0 0.0
    %2203 = vmatpush1.msra.mxu0 0.0
    %2204 = vmatprep.subr.mxu0 0.0
    %2205 = vmatpush1.msra.mxu0 0.0
    %2206 = vmatprep.subr.mxu0 0.0
    %2207 = vmatpush1.msra.mxu0 0.0
    %2208 = vmatprep.subr.mxu0 0.0
    %2209 = vmatpush1.msra.mxu0 0.0
    %2210 = vmatprep.subr.mxu0 0.0
    %2211 = vmatpush1.msra.mxu0 0.0
    %2212 = vmatprep.subr.mxu0 0.0
    %2213 = vmatpush1.msra.mxu0 0.0
    %2214 = vmatprep.subr.mxu0 0.0
    %2215 = vmatpush1.msra.mxu0 0.0
    %2216 = vmatprep.mubr.f32.mxu0 0.0
    %2217 = vmatmul.mubr.f32.gmra.mrb[0].mxu0 %v2144
    %v2218 = vpop.f32.mrb[0].mxu0
    %v2219 = vadd.f32 %v2140, %v2218
    %v2220 = vpop.f32.mrb[0].mxu0
    %v2221 = vadd.f32 %v2140, %v2220
    %2222 = vdwg.mxu0
    %vm2223 = vcmp.ge.f32.partialorder %v2219, 0.0
    %vm2224 = vcmp.ge.f32.partialorder %v2221, 0.0
    %v2225 = vmul.f32 %v2219, 0.2
    %v2226 = vmul.f32 %v2221, 0.2
    %v2227 = vsel %vm2223, %v2219, %v2225
    %v2228 = vsel %vm2224, %v2221, %v2226
    %2229 = vst [vmem:[#allocation2] sm:$0xff] %v2227
    %2230 = vst [vmem:[#allocation2 + $0x8] sm:$0xff] %v2228
    %s2231 = scalar_lea.vmem %s0, 96
    %v2232 = vld [vmem:[%s2231] sm:$0xff]
    %v2233 = vld [vmem:[%s2231 + $0x8] sm:$0xff]
    %v2234 = vld [vmem:[%s2231 + $0x10] sm:$0x3]
    %v2235 = vld [vmem:[%s2231 + $0x18] sm:$0xff]
    %v2236 = vld [vmem:[%s2231 + $0x20] sm:$0xff]
    %v2237 = vld [vmem:[%s2231 + $0x28] sm:$0x3]
    %v2238 = vld [vmem:[%s2231 + $0x30] sm:$0xff]
    %v2239 = vld [vmem:[%s2231 + $0x38] sm:$0xff]
    %v2240 = vld [vmem:[%s2231 + $0x40] sm:$0x3]
    %v2241 = vld [vmem:[%s2231 + $0x48] sm:$0xff]
    %v2242 = vld [vmem:[%s2231 + $0x50] sm:$0xff]
    %v2243 = vld [vmem:[%s2231 + $0x58] sm:$0x3]
    %v2244 = vcombine.low %v2232, %v2238
    %v2245 = vcombine.high %v2232, %v2238
    %v2247 = vunpack.c.l.s4 1983009808
    %v2248 = vunpack.c.0.s8 %v2247
    %v2249 = vlaneseq
    %v2250 = vshrl.u32 %v2249, 7
    %v2251 = vsub.s32 %v2248, %v2250
    %v2252 = vrot.slane %v2244, %v2251
    %v2254 = vunpack.c.l.s4 1983009808
    %v2255 = vunpack.c.0.s8 %v2254
    %v2256 = vlaneseq
    %v2257 = vshrl.u32 %v2256, 7
    %v2258 = vsub.s32 %v2255, %v2257
    %v2259 = vrot.slane %v2245, %v2258
    %v2260 = vcombine.low %v2235, %v2241
    %v2261 = vcombine.high %v2235, %v2241
    %v2263 = vunpack.c.l.s4 1983009808
    %v2264 = vunpack.c.0.s8 %v2263
    %v2265 = vlaneseq
    %v2266 = vshrl.u32 %v2265, 7
    %v2267 = vsub.s32 %v2264, %v2266
    %v2268 = vrot.slane %v2260, %v2267
    %v2270 = vunpack.c.l.s4 1983009808
    %v2271 = vunpack.c.0.s8 %v2270
    %v2272 = vlaneseq
    %v2273 = vshrl.u32 %v2272, 7
    %v2274 = vsub.s32 %v2271, %v2273
    %v2275 = vrot.slane %v2261, %v2274
    %v2276 = vcombine.low %v2252, %v2268
    %v2277 = vcombine.high %v2252, %v2268
    %v2279 = vunpack.c.l.s4 1934713408
    %v2280 = vunpack.c.0.s8 %v2279
    %v2281 = vlaneseq
    %v2282 = vshrl.u32 %v2281, 7
    %v2283 = vsub.s32 %v2280, %v2282
    %v2284 = vrot.slane %v2276, %v2283
    %v2286 = vunpack.c.l.s4 1934713408
    %v2287 = vunpack.c.0.s8 %v2286
    %v2288 = vlaneseq
    %v2289 = vshrl.u32 %v2288, 7
    %v2290 = vsub.s32 %v2287, %v2289
    %v2291 = vrot.slane %v2277, %v2290
    %v2292 = vcombine.low %v2259, %v2275
    %v2293 = vcombine.high %v2259, %v2275
    %v2295 = vunpack.c.l.s4 1934713408
    %v2296 = vunpack.c.0.s8 %v2295
    %v2297 = vlaneseq
    %v2298 = vshrl.u32 %v2297, 7
    %v2299 = vsub.s32 %v2296, %v2298
    %v2300 = vrot.slane %v2292, %v2299
    %v2302 = vunpack.c.l.s4 1934713408
    %v2303 = vunpack.c.0.s8 %v2302
    %v2304 = vlaneseq
    %v2305 = vshrl.u32 %v2304, 7
    %v2306 = vsub.s32 %v2303, %v2305
    %v2307 = vrot.slane %v2293, %v2306
    %v2308 = vcombine.high %v2284, 0.0
    %v2309 = vcombine.high %v2291, 0.0
    %v2310 = vcombine.high %v2300, 0.0
    %v2311 = vcombine.high %v2307, 0.0
    %v2312 = vcombine.low %v2233, %v2239
    %v2313 = vcombine.high %v2233, %v2239
    %v2315 = vunpack.c.l.s4 1983009808
    %v2316 = vunpack.c.0.s8 %v2315
    %v2317 = vlaneseq
    %v2318 = vshrl.u32 %v2317, 7
    %v2319 = vsub.s32 %v2316, %v2318
    %v2320 = vrot.slane %v2312, %v2319
    %v2322 = vunpack.c.l.s4 1983009808
    %v2323 = vunpack.c.0.s8 %v2322
    %v2324 = vlaneseq
    %v2325 = vshrl.u32 %v2324, 7
    %v2326 = vsub.s32 %v2323, %v2325
    %v2327 = vrot.slane %v2313, %v2326
    %v2328 = vcombine.low %v2236, %v2242
    %v2329 = vcombine.high %v2236, %v2242
    %v2331 = vunpack.c.l.s4 1983009808
    %v2332 = vunpack.c.0.s8 %v2331
    %v2333 = vlaneseq
    %v2334 = vshrl.u32 %v2333, 7
    %v2335 = vsub.s32 %v2332, %v2334
    %v2336 = vrot.slane %v2328, %v2335
    %v2338 = vunpack.c.l.s4 1983009808
    %v2339 = vunpack.c.0.s8 %v2338
    %v2340 = vlaneseq
    %v2341 = vshrl.u32 %v2340, 7
    %v2342 = vsub.s32 %v2339, %v2341
    %v2343 = vrot.slane %v2329, %v2342
    %v2344 = vcombine.low %v2320, %v2336
    %v2345 = vcombine.high %v2320, %v2336
    %v2347 = vunpack.c.l.s4 1934713408
    %v2348 = vunpack.c.0.s8 %v2347
    %v2349 = vlaneseq
    %v2350 = vshrl.u32 %v2349, 7
    %v2351 = vsub.s32 %v2348, %v2350
    %v2352 = vrot.slane %v2344, %v2351
    %v2354 = vunpack.c.l.s4 1934713408
    %v2355 = vunpack.c.0.s8 %v2354
    %v2356 = vlaneseq
    %v2357 = vshrl.u32 %v2356, 7
    %v2358 = vsub.s32 %v2355, %v2357
    %v2359 = vrot.slane %v2345, %v2358
    %v2360 = vcombine.low %v2327, %v2343
    %v2361 = vcombine.high %v2327, %v2343
    %v2363 = vunpack.c.l.s4 1934713408
    %v2364 = vunpack.c.0.s8 %v2363
    %v2365 = vlaneseq
    %v2366 = vshrl.u32 %v2365, 7
    %v2367 = vsub.s32 %v2364, %v2366
    %v2368 = vrot.slane %v2360, %v2367
    %v2370 = vunpack.c.l.s4 1934713408
    %v2371 = vunpack.c.0.s8 %v2370
    %v2372 = vlaneseq
    %v2373 = vshrl.u32 %v2372, 7
    %v2374 = vsub.s32 %v2371, %v2373
    %v2375 = vrot.slane %v2361, %v2374
    %v2376 = vcombine.high %v2352, 0.0
    %v2377 = vcombine.high %v2359, 0.0
    %v2378 = vcombine.high %v2368, 0.0
    %v2379 = vcombine.high %v2375, 0.0
    %2381 = vrot.lane.b32.xlu0 %v2308, 16
    %v2382 = vpop.permute.xlu0 %2381
    %2385 = vrot.lane.b32.xlu0 %v2291, 32
    %v2386 = vpop.permute.xlu0 %2385
    %2389 = vrot.lane.b32.xlu0 %v2309, 48
    %v2390 = vpop.permute.xlu0 %2389
    %2393 = vrot.lane.b32.xlu0 %v2300, 64
    %v2394 = vpop.permute.xlu0 %2393
    %2397 = vrot.lane.b32.xlu0 %v2310, 80
    %v2398 = vpop.permute.xlu0 %2397
    %2401 = vrot.lane.b32.xlu0 %v2307, 96
    %v2402 = vpop.permute.xlu0 %2401
    %2405 = vrot.lane.b32.xlu0 %v2311, 112
    %v2406 = vpop.permute.xlu0 %2405
    %2409 = vrot.lane.b32.xlu0 %v2376, 16
    %v2410 = vpop.permute.xlu0 %2409
    %2413 = vrot.lane.b32.xlu0 %v2359, 32
    %v2414 = vpop.permute.xlu0 %2413
    %2417 = vrot.lane.b32.xlu0 %v2377, 48
    %v2418 = vpop.permute.xlu0 %2417
    %2421 = vrot.lane.b32.xlu0 %v2368, 64
    %v2422 = vpop.permute.xlu0 %2421
    %2425 = vrot.lane.b32.xlu0 %v2378, 80
    %v2426 = vpop.permute.xlu0 %2425
    %2429 = vrot.lane.b32.xlu0 %v2375, 96
    %v2430 = vpop.permute.xlu0 %2429
    %2433 = vrot.lane.b32.xlu0 %v2379, 112
    %v2434 = vpop.permute.xlu0 %2433
    %v2436 = vsel %vm221, %v2284, %v2382
    %v2437 = vsel %vm223, %v2436, %v2386
    %v2438 = vsel %vm225, %v2437, %v2390
    %v2439 = vsel %vm227, %v2438, %v2394
    %v2440 = vsel %vm229, %v2439, %v2398
    %v2441 = vsel %vm231, %v2440, %v2402
    %v2442 = vsel %vm233, %v2441, %v2406
    %v2443 = vsel %vm221, %v2352, %v2410
    %v2444 = vsel %vm223, %v2443, %v2414
    %v2445 = vsel %vm225, %v2444, %v2418
    %v2446 = vsel %vm227, %v2445, %v2422
    %v2447 = vsel %vm229, %v2446, %v2426
    %v2448 = vsel %vm231, %v2447, %v2430
    %v2449 = vsel %vm233, %v2448, %v2434
    %2458 = vrot.lane.b32.xlu0 %v2232, 127
    %v2459 = vpop.permute.xlu0 %2458
    %2460 = vrot.lane.b32.xlu0 %v2233, 127
    %v2461 = vpop.permute.xlu0 %2460
    %2462 = vrot.lane.b32.xlu0 %v2235, 127
    %v2463 = vpop.permute.xlu0 %2462
    %2464 = vrot.lane.b32.xlu0 %v2236, 127
    %v2465 = vpop.permute.xlu0 %2464
    %2466 = vrot.lane.b32.xlu0 %v2238, 127
    %v2467 = vpop.permute.xlu0 %2466
    %2468 = vrot.lane.b32.xlu0 %v2239, 127
    %v2469 = vpop.permute.xlu0 %2468
    %2470 = vrot.lane.b32.xlu0 %v2241, 127
    %v2471 = vpop.permute.xlu0 %2470
    %2472 = vrot.lane.b32.xlu0 %v2242, 127
    %v2473 = vpop.permute.xlu0 %2472
    %v2482 = vcombine.low %v2459, %v2467
    %v2483 = vcombine.high %v2459, %v2467
    %v2485 = vunpack.c.l.s4 1983009808
    %v2486 = vunpack.c.0.s8 %v2485
    %v2487 = vlaneseq
    %v2488 = vshrl.u32 %v2487, 7
    %v2489 = vsub.s32 %v2486, %v2488
    %v2490 = vrot.slane %v2482, %v2489
    %v2492 = vunpack.c.l.s4 1983009808
    %v2493 = vunpack.c.0.s8 %v2492
    %v2494 = vlaneseq
    %v2495 = vshrl.u32 %v2494, 7
    %v2496 = vsub.s32 %v2493, %v2495
    %v2497 = vrot.slane %v2483, %v2496
    %v2498 = vcombine.low %v2463, %v2471
    %v2499 = vcombine.high %v2463, %v2471
    %v2501 = vunpack.c.l.s4 1983009808
    %v2502 = vunpack.c.0.s8 %v2501
    %v2503 = vlaneseq
    %v2504 = vshrl.u32 %v2503, 7
    %v2505 = vsub.s32 %v2502, %v2504
    %v2506 = vrot.slane %v2498, %v2505
    %v2508 = vunpack.c.l.s4 1983009808
    %v2509 = vunpack.c.0.s8 %v2508
    %v2510 = vlaneseq
    %v2511 = vshrl.u32 %v2510, 7
    %v2512 = vsub.s32 %v2509, %v2511
    %v2513 = vrot.slane %v2499, %v2512
    %v2514 = vcombine.low %v2490, %v2506
    %v2515 = vcombine.high %v2490, %v2506
    %v2517 = vunpack.c.l.s4 1934713408
    %v2518 = vunpack.c.0.s8 %v2517
    %v2519 = vlaneseq
    %v2520 = vshrl.u32 %v2519, 7
    %v2521 = vsub.s32 %v2518, %v2520
    %v2522 = vrot.slane %v2514, %v2521
    %v2524 = vunpack.c.l.s4 1934713408
    %v2525 = vunpack.c.0.s8 %v2524
    %v2526 = vlaneseq
    %v2527 = vshrl.u32 %v2526, 7
    %v2528 = vsub.s32 %v2525, %v2527
    %v2529 = vrot.slane %v2515, %v2528
    %v2530 = vcombine.low %v2497, %v2513
    %v2531 = vcombine.high %v2497, %v2513
    %v2533 = vunpack.c.l.s4 1934713408
    %v2534 = vunpack.c.0.s8 %v2533
    %v2535 = vlaneseq
    %v2536 = vshrl.u32 %v2535, 7
    %v2537 = vsub.s32 %v2534, %v2536
    %v2538 = vrot.slane %v2530, %v2537
    %v2540 = vunpack.c.l.s4 1934713408
    %v2541 = vunpack.c.0.s8 %v2540
    %v2542 = vlaneseq
    %v2543 = vshrl.u32 %v2542, 7
    %v2544 = vsub.s32 %v2541, %v2543
    %v2545 = vrot.slane %v2531, %v2544
    %v2546 = vcombine.high %v2522, 0.0
    %v2547 = vcombine.high %v2529, 0.0
    %v2548 = vcombine.high %v2538, 0.0
    %v2549 = vcombine.high %v2545, 0.0
    %v2550 = vcombine.low %v2461, %v2469
    %v2551 = vcombine.high %v2461, %v2469
    %v2553 = vunpack.c.l.s4 1983009808
    %v2554 = vunpack.c.0.s8 %v2553
    %v2555 = vlaneseq
    %v2556 = vshrl.u32 %v2555, 7
    %v2557 = vsub.s32 %v2554, %v2556
    %v2558 = vrot.slane %v2550, %v2557
    %v2560 = vunpack.c.l.s4 1983009808
    %v2561 = vunpack.c.0.s8 %v2560
    %v2562 = vlaneseq
    %v2563 = vshrl.u32 %v2562, 7
    %v2564 = vsub.s32 %v2561, %v2563
    %v2565 = vrot.slane %v2551, %v2564
    %v2566 = vcombine.low %v2465, %v2473
    %v2567 = vcombine.high %v2465, %v2473
    %v2569 = vunpack.c.l.s4 1983009808
    %v2570 = vunpack.c.0.s8 %v2569
    %v2571 = vlaneseq
    %v2572 = vshrl.u32 %v2571, 7
    %v2573 = vsub.s32 %v2570, %v2572
    %v2574 = vrot.slane %v2566, %v2573
    %v2576 = vunpack.c.l.s4 1983009808
    %v2577 = vunpack.c.0.s8 %v2576
    %v2578 = vlaneseq
    %v2579 = vshrl.u32 %v2578, 7
    %v2580 = vsub.s32 %v2577, %v2579
    %v2581 = vrot.slane %v2567, %v2580
    %v2582 = vcombine.low %v2558, %v2574
    %v2583 = vcombine.high %v2558, %v2574
    %v2585 = vunpack.c.l.s4 1934713408
    %v2586 = vunpack.c.0.s8 %v2585
    %v2587 = vlaneseq
    %v2588 = vshrl.u32 %v2587, 7
    %v2589 = vsub.s32 %v2586, %v2588
    %v2590 = vrot.slane %v2582, %v2589
    %v2592 = vunpack.c.l.s4 1934713408
    %v2593 = vunpack.c.0.s8 %v2592
    %v2594 = vlaneseq
    %v2595 = vshrl.u32 %v2594, 7
    %v2596 = vsub.s32 %v2593, %v2595
    %v2597 = vrot.slane %v2583, %v2596
    %v2598 = vcombine.low %v2565, %v2581
    %v2599 = vcombine.high %v2565, %v2581
    %v2601 = vunpack.c.l.s4 1934713408
    %v2602 = vunpack.c.0.s8 %v2601
    %v2603 = vlaneseq
    %v2604 = vshrl.u32 %v2603, 7
    %v2605 = vsub.s32 %v2602, %v2604
    %v2606 = vrot.slane %v2598, %v2605
    %v2608 = vunpack.c.l.s4 1934713408
    %v2609 = vunpack.c.0.s8 %v2608
    %v2610 = vlaneseq
    %v2611 = vshrl.u32 %v2610, 7
    %v2612 = vsub.s32 %v2609, %v2611
    %v2613 = vrot.slane %v2599, %v2612
    %v2614 = vcombine.high %v2590, 0.0
    %v2615 = vcombine.high %v2597, 0.0
    %v2616 = vcombine.high %v2606, 0.0
    %v2617 = vcombine.high %v2613, 0.0
    %2619 = vrot.lane.b32.xlu0 %v2546, 16
    %v2620 = vpop.permute.xlu0 %2619
    %2623 = vrot.lane.b32.xlu0 %v2529, 32
    %v2624 = vpop.permute.xlu0 %2623
    %2627 = vrot.lane.b32.xlu0 %v2547, 48
    %v2628 = vpop.permute.xlu0 %2627
    %2631 = vrot.lane.b32.xlu0 %v2538, 64
    %v2632 = vpop.permute.xlu0 %2631
    %2635 = vrot.lane.b32.xlu0 %v2548, 80
    %v2636 = vpop.permute.xlu0 %2635
    %2639 = vrot.lane.b32.xlu0 %v2545, 96
    %v2640 = vpop.permute.xlu0 %2639
    %2643 = vrot.lane.b32.xlu0 %v2549, 112
    %v2644 = vpop.permute.xlu0 %2643
    %2647 = vrot.lane.b32.xlu0 %v2614, 16
    %v2648 = vpop.permute.xlu0 %2647
    %2651 = vrot.lane.b32.xlu0 %v2597, 32
    %v2652 = vpop.permute.xlu0 %2651
    %2655 = vrot.lane.b32.xlu0 %v2615, 48
    %v2656 = vpop.permute.xlu0 %2655
    %2659 = vrot.lane.b32.xlu0 %v2606, 64
    %v2660 = vpop.permute.xlu0 %2659
    %2663 = vrot.lane.b32.xlu0 %v2616, 80
    %v2664 = vpop.permute.xlu0 %2663
    %2667 = vrot.lane.b32.xlu0 %v2613, 96
    %v2668 = vpop.permute.xlu0 %2667
    %2671 = vrot.lane.b32.xlu0 %v2617, 112
    %v2672 = vpop.permute.xlu0 %2671
    %v2674 = vsel %vm221, %v2522, %v2620
    %v2675 = vsel %vm223, %v2674, %v2624
    %v2676 = vsel %vm225, %v2675, %v2628
    %v2677 = vsel %vm227, %v2676, %v2632
    %v2678 = vsel %vm229, %v2677, %v2636
    %v2679 = vsel %vm231, %v2678, %v2640
    %v2680 = vsel %vm233, %v2679, %v2644
    %v2681 = vsel %vm221, %v2590, %v2648
    %v2682 = vsel %vm223, %v2681, %v2652
    %v2683 = vsel %vm225, %v2682, %v2656
    %v2684 = vsel %vm227, %v2683, %v2660
    %v2685 = vsel %vm229, %v2684, %v2664
    %v2686 = vsel %vm231, %v2685, %v2668
    %v2687 = vsel %vm233, %v2686, %v2672
    %2688 = vrot.lane.b32.xlu0 %v2232, 126
    %v2689 = vpop.permute.xlu0 %2688
    %2690 = vrot.lane.b32.xlu0 %v2233, 126
    %v2691 = vpop.permute.xlu0 %2690
    %2692 = vrot.lane.b32.xlu0 %v2235, 126
    %v2693 = vpop.permute.xlu0 %2692
    %2694 = vrot.lane.b32.xlu0 %v2236, 126
    %v2695 = vpop.permute.xlu0 %2694
    %2696 = vrot.lane.b32.xlu0 %v2238, 126
    %v2697 = vpop.permute.xlu0 %2696
    %2698 = vrot.lane.b32.xlu0 %v2239, 126
    %v2699 = vpop.permute.xlu0 %2698
    %2700 = vrot.lane.b32.xlu0 %v2241, 126
    %v2701 = vpop.permute.xlu0 %2700
    %2702 = vrot.lane.b32.xlu0 %v2242, 126
    %v2703 = vpop.permute.xlu0 %2702
    %v2712 = vcombine.low %v2689, %v2697
    %v2713 = vcombine.high %v2689, %v2697
    %v2715 = vunpack.c.l.s4 1983009808
    %v2716 = vunpack.c.0.s8 %v2715
    %v2717 = vlaneseq
    %v2718 = vshrl.u32 %v2717, 7
    %v2719 = vsub.s32 %v2716, %v2718
    %v2720 = vrot.slane %v2712, %v2719
    %v2722 = vunpack.c.l.s4 1983009808
    %v2723 = vunpack.c.0.s8 %v2722
    %v2724 = vlaneseq
    %v2725 = vshrl.u32 %v2724, 7
    %v2726 = vsub.s32 %v2723, %v2725
    %v2727 = vrot.slane %v2713, %v2726
    %v2728 = vcombine.low %v2693, %v2701
    %v2729 = vcombine.high %v2693, %v2701
    %v2731 = vunpack.c.l.s4 1983009808
    %v2732 = vunpack.c.0.s8 %v2731
    %v2733 = vlaneseq
    %v2734 = vshrl.u32 %v2733, 7
    %v2735 = vsub.s32 %v2732, %v2734
    %v2736 = vrot.slane %v2728, %v2735
    %v2738 = vunpack.c.l.s4 1983009808
    %v2739 = vunpack.c.0.s8 %v2738
    %v2740 = vlaneseq
    %v2741 = vshrl.u32 %v2740, 7
    %v2742 = vsub.s32 %v2739, %v2741
    %v2743 = vrot.slane %v2729, %v2742
    %v2744 = vcombine.low %v2720, %v2736
    %v2745 = vcombine.high %v2720, %v2736
    %v2747 = vunpack.c.l.s4 1934713408
    %v2748 = vunpack.c.0.s8 %v2747
    %v2749 = vlaneseq
    %v2750 = vshrl.u32 %v2749, 7
    %v2751 = vsub.s32 %v2748, %v2750
    %v2752 = vrot.slane %v2744, %v2751
    %v2754 = vunpack.c.l.s4 1934713408
    %v2755 = vunpack.c.0.s8 %v2754
    %v2756 = vlaneseq
    %v2757 = vshrl.u32 %v2756, 7
    %v2758 = vsub.s32 %v2755, %v2757
    %v2759 = vrot.slane %v2745, %v2758
    %v2760 = vcombine.low %v2727, %v2743
    %v2761 = vcombine.high %v2727, %v2743
    %v2763 = vunpack.c.l.s4 1934713408
    %v2764 = vunpack.c.0.s8 %v2763
    %v2765 = vlaneseq
    %v2766 = vshrl.u32 %v2765, 7
    %v2767 = vsub.s32 %v2764, %v2766
    %v2768 = vrot.slane %v2760, %v2767
    %v2770 = vunpack.c.l.s4 1934713408
    %v2771 = vunpack.c.0.s8 %v2770
    %v2772 = vlaneseq
    %v2773 = vshrl.u32 %v2772, 7
    %v2774 = vsub.s32 %v2771, %v2773
    %v2775 = vrot.slane %v2761, %v2774
    %v2776 = vcombine.high %v2752, 0.0
    %v2777 = vcombine.high %v2759, 0.0
    %v2778 = vcombine.high %v2768, 0.0
    %v2779 = vcombine.high %v2775, 0.0
    %v2780 = vcombine.low %v2691, %v2699
    %v2781 = vcombine.high %v2691, %v2699
    %v2783 = vunpack.c.l.s4 1983009808
    %v2784 = vunpack.c.0.s8 %v2783
    %v2785 = vlaneseq
    %v2786 = vshrl.u32 %v2785, 7
    %v2787 = vsub.s32 %v2784, %v2786
    %v2788 = vrot.slane %v2780, %v2787
    %v2790 = vunpack.c.l.s4 1983009808
    %v2791 = vunpack.c.0.s8 %v2790
    %v2792 = vlaneseq
    %v2793 = vshrl.u32 %v2792, 7
    %v2794 = vsub.s32 %v2791, %v2793
    %v2795 = vrot.slane %v2781, %v2794
    %v2796 = vcombine.low %v2695, %v2703
    %v2797 = vcombine.high %v2695, %v2703
    %v2799 = vunpack.c.l.s4 1983009808
    %v2800 = vunpack.c.0.s8 %v2799
    %v2801 = vlaneseq
    %v2802 = vshrl.u32 %v2801, 7
    %v2803 = vsub.s32 %v2800, %v2802
    %v2804 = vrot.slane %v2796, %v2803
    %v2806 = vunpack.c.l.s4 1983009808
    %v2807 = vunpack.c.0.s8 %v2806
    %v2808 = vlaneseq
    %v2809 = vshrl.u32 %v2808, 7
    %v2810 = vsub.s32 %v2807, %v2809
    %v2811 = vrot.slane %v2797, %v2810
    %v2812 = vcombine.low %v2788, %v2804
    %v2813 = vcombine.high %v2788, %v2804
    %v2815 = vunpack.c.l.s4 1934713408
    %v2816 = vunpack.c.0.s8 %v2815
    %v2817 = vlaneseq
    %v2818 = vshrl.u32 %v2817, 7
    %v2819 = vsub.s32 %v2816, %v2818
    %v2820 = vrot.slane %v2812, %v2819
    %v2822 = vunpack.c.l.s4 1934713408
    %v2823 = vunpack.c.0.s8 %v2822
    %v2824 = vlaneseq
    %v2825 = vshrl.u32 %v2824, 7
    %v2826 = vsub.s32 %v2823, %v2825
    %v2827 = vrot.slane %v2813, %v2826
    %v2828 = vcombine.low %v2795, %v2811
    %v2829 = vcombine.high %v2795, %v2811
    %v2831 = vunpack.c.l.s4 1934713408
    %v2832 = vunpack.c.0.s8 %v2831
    %v2833 = vlaneseq
    %v2834 = vshrl.u32 %v2833, 7
    %v2835 = vsub.s32 %v2832, %v2834
    %v2836 = vrot.slane %v2828, %v2835
    %v2838 = vunpack.c.l.s4 1934713408
    %v2839 = vunpack.c.0.s8 %v2838
    %v2840 = vlaneseq
    %v2841 = vshrl.u32 %v2840, 7
    %v2842 = vsub.s32 %v2839, %v2841
    %v2843 = vrot.slane %v2829, %v2842
    %v2844 = vcombine.high %v2820, 0.0
    %v2845 = vcombine.high %v2827, 0.0
    %v2846 = vcombine.high %v2836, 0.0
    %v2847 = vcombine.high %v2843, 0.0
    %2849 = vrot.lane.b32.xlu0 %v2776, 16
    %v2850 = vpop.permute.xlu0 %2849
    %2853 = vrot.lane.b32.xlu0 %v2759, 32
    %v2854 = vpop.permute.xlu0 %2853
    %2857 = vrot.lane.b32.xlu0 %v2777, 48
    %v2858 = vpop.permute.xlu0 %2857
    %2861 = vrot.lane.b32.xlu0 %v2768, 64
    %v2862 = vpop.permute.xlu0 %2861
    %2865 = vrot.lane.b32.xlu0 %v2778, 80
    %v2866 = vpop.permute.xlu0 %2865
    %2869 = vrot.lane.b32.xlu0 %v2775, 96
    %v2870 = vpop.permute.xlu0 %2869
    %2873 = vrot.lane.b32.xlu0 %v2779, 112
    %v2874 = vpop.permute.xlu0 %2873
    %2877 = vrot.lane.b32.xlu0 %v2844, 16
    %v2878 = vpop.permute.xlu0 %2877
    %2881 = vrot.lane.b32.xlu0 %v2827, 32
    %v2882 = vpop.permute.xlu0 %2881
    %2885 = vrot.lane.b32.xlu0 %v2845, 48
    %v2886 = vpop.permute.xlu0 %2885
    %2889 = vrot.lane.b32.xlu0 %v2836, 64
    %v2890 = vpop.permute.xlu0 %2889
    %2893 = vrot.lane.b32.xlu0 %v2846, 80
    %v2894 = vpop.permute.xlu0 %2893
    %2897 = vrot.lane.b32.xlu0 %v2843, 96
    %v2898 = vpop.permute.xlu0 %2897
    %2901 = vrot.lane.b32.xlu0 %v2847, 112
    %v2902 = vpop.permute.xlu0 %2901
    %v2904 = vsel %vm221, %v2752, %v2850
    %v2905 = vsel %vm223, %v2904, %v2854
    %v2906 = vsel %vm225, %v2905, %v2858
    %v2907 = vsel %vm227, %v2906, %v2862
    %v2908 = vsel %vm229, %v2907, %v2866
    %v2909 = vsel %vm231, %v2908, %v2870
    %v2910 = vsel %vm233, %v2909, %v2874
    %v2911 = vsel %vm221, %v2820, %v2878
    %v2912 = vsel %vm223, %v2911, %v2882
    %v2913 = vsel %vm225, %v2912, %v2886
    %v2914 = vsel %vm227, %v2913, %v2890
    %v2915 = vsel %vm229, %v2914, %v2894
    %v2916 = vsel %vm231, %v2915, %v2898
    %v2917 = vsel %vm233, %v2916, %v2902
    %v2922 = vrot.slane %v2232, 1
    %v2923 = vrot.slane %v2233, 1
    %v2924 = vsel %vm714, %v2922, %v2923
    %v2925 = vrot.slane %v2234, 1
    %v2926 = vsel %vm714, %v2923, %v2925
    %v2927 = vrot.slane %v2235, 1
    %v2928 = vrot.slane %v2236, 1
    %v2929 = vsel %vm714, %v2927, %v2928
    %v2930 = vrot.slane %v2237, 1
    %v2931 = vsel %vm714, %v2928, %v2930
    %v2932 = vrot.slane %v2238, 1
    %v2933 = vrot.slane %v2239, 1
    %v2934 = vsel %vm714, %v2932, %v2933
    %v2935 = vrot.slane %v2240, 1
    %v2936 = vsel %vm714, %v2933, %v2935
    %v2937 = vrot.slane %v2241, 1
    %v2938 = vrot.slane %v2242, 1
    %v2939 = vsel %vm714, %v2937, %v2938
    %v2940 = vrot.slane %v2243, 1
    %v2941 = vsel %vm714, %v2938, %v2940
    %v2950 = vcombine.low %v2924, %v2934
    %v2951 = vcombine.high %v2924, %v2934
    %v2953 = vunpack.c.l.s4 1983009808
    %v2954 = vunpack.c.0.s8 %v2953
    %v2955 = vlaneseq
    %v2956 = vshrl.u32 %v2955, 7
    %v2957 = vsub.s32 %v2954, %v2956
    %v2958 = vrot.slane %v2950, %v2957
    %v2960 = vunpack.c.l.s4 1983009808
    %v2961 = vunpack.c.0.s8 %v2960
    %v2962 = vlaneseq
    %v2963 = vshrl.u32 %v2962, 7
    %v2964 = vsub.s32 %v2961, %v2963
    %v2965 = vrot.slane %v2951, %v2964
    %v2966 = vcombine.low %v2929, %v2939
    %v2967 = vcombine.high %v2929, %v2939
    %v2969 = vunpack.c.l.s4 1983009808
    %v2970 = vunpack.c.0.s8 %v2969
    %v2971 = vlaneseq
    %v2972 = vshrl.u32 %v2971, 7
    %v2973 = vsub.s32 %v2970, %v2972
    %v2974 = vrot.slane %v2966, %v2973
    %v2976 = vunpack.c.l.s4 1983009808
    %v2977 = vunpack.c.0.s8 %v2976
    %v2978 = vlaneseq
    %v2979 = vshrl.u32 %v2978, 7
    %v2980 = vsub.s32 %v2977, %v2979
    %v2981 = vrot.slane %v2967, %v2980
    %v2982 = vcombine.low %v2958, %v2974
    %v2983 = vcombine.high %v2958, %v2974
    %v2985 = vunpack.c.l.s4 1934713408
    %v2986 = vunpack.c.0.s8 %v2985
    %v2987 = vlaneseq
    %v2988 = vshrl.u32 %v2987, 7
    %v2989 = vsub.s32 %v2986, %v2988
    %v2990 = vrot.slane %v2982, %v2989
    %v2992 = vunpack.c.l.s4 1934713408
    %v2993 = vunpack.c.0.s8 %v2992
    %v2994 = vlaneseq
    %v2995 = vshrl.u32 %v2994, 7
    %v2996 = vsub.s32 %v2993, %v2995
    %v2997 = vrot.slane %v2983, %v2996
    %v2998 = vcombine.low %v2965, %v2981
    %v2999 = vcombine.high %v2965, %v2981
    %v3001 = vunpack.c.l.s4 1934713408
    %v3002 = vunpack.c.0.s8 %v3001
    %v3003 = vlaneseq
    %v3004 = vshrl.u32 %v3003, 7
    %v3005 = vsub.s32 %v3002, %v3004
    %v3006 = vrot.slane %v2998, %v3005
    %v3008 = vunpack.c.l.s4 1934713408
    %v3009 = vunpack.c.0.s8 %v3008
    %v3010 = vlaneseq
    %v3011 = vshrl.u32 %v3010, 7
    %v3012 = vsub.s32 %v3009, %v3011
    %v3013 = vrot.slane %v2999, %v3012
    %v3014 = vcombine.high %v2990, 0.0
    %v3015 = vcombine.high %v2997, 0.0
    %v3016 = vcombine.high %v3006, 0.0
    %v3017 = vcombine.high %v3013, 0.0
    %v3018 = vcombine.low %v2926, %v2936
    %v3019 = vcombine.high %v2926, %v2936
    %v3021 = vunpack.c.l.s4 1983009808
    %v3022 = vunpack.c.0.s8 %v3021
    %v3023 = vlaneseq
    %v3024 = vshrl.u32 %v3023, 7
    %v3025 = vsub.s32 %v3022, %v3024
    %v3026 = vrot.slane %v3018, %v3025
    %v3028 = vunpack.c.l.s4 1983009808
    %v3029 = vunpack.c.0.s8 %v3028
    %v3030 = vlaneseq
    %v3031 = vshrl.u32 %v3030, 7
    %v3032 = vsub.s32 %v3029, %v3031
    %v3033 = vrot.slane %v3019, %v3032
    %v3034 = vcombine.low %v2931, %v2941
    %v3035 = vcombine.high %v2931, %v2941
    %v3037 = vunpack.c.l.s4 1983009808
    %v3038 = vunpack.c.0.s8 %v3037
    %v3039 = vlaneseq
    %v3040 = vshrl.u32 %v3039, 7
    %v3041 = vsub.s32 %v3038, %v3040
    %v3042 = vrot.slane %v3034, %v3041
    %v3044 = vunpack.c.l.s4 1983009808
    %v3045 = vunpack.c.0.s8 %v3044
    %v3046 = vlaneseq
    %v3047 = vshrl.u32 %v3046, 7
    %v3048 = vsub.s32 %v3045, %v3047
    %v3049 = vrot.slane %v3035, %v3048
    %v3050 = vcombine.low %v3026, %v3042
    %v3051 = vcombine.high %v3026, %v3042
    %v3053 = vunpack.c.l.s4 1934713408
    %v3054 = vunpack.c.0.s8 %v3053
    %v3055 = vlaneseq
    %v3056 = vshrl.u32 %v3055, 7
    %v3057 = vsub.s32 %v3054, %v3056
    %v3058 = vrot.slane %v3050, %v3057
    %v3060 = vunpack.c.l.s4 1934713408
    %v3061 = vunpack.c.0.s8 %v3060
    %v3062 = vlaneseq
    %v3063 = vshrl.u32 %v3062, 7
    %v3064 = vsub.s32 %v3061, %v3063
    %v3065 = vrot.slane %v3051, %v3064
    %v3066 = vcombine.low %v3033, %v3049
    %v3067 = vcombine.high %v3033, %v3049
    %v3069 = vunpack.c.l.s4 1934713408
    %v3070 = vunpack.c.0.s8 %v3069
    %v3071 = vlaneseq
    %v3072 = vshrl.u32 %v3071, 7
    %v3073 = vsub.s32 %v3070, %v3072
    %v3074 = vrot.slane %v3066, %v3073
    %v3076 = vunpack.c.l.s4 1934713408
    %v3077 = vunpack.c.0.s8 %v3076
    %v3078 = vlaneseq
    %v3079 = vshrl.u32 %v3078, 7
    %v3080 = vsub.s32 %v3077, %v3079
    %v3081 = vrot.slane %v3067, %v3080
    %v3082 = vcombine.high %v3058, 0.0
    %v3083 = vcombine.high %v3065, 0.0
    %v3084 = vcombine.high %v3074, 0.0
    %v3085 = vcombine.high %v3081, 0.0
    %3087 = vrot.lane.b32.xlu0 %v3014, 16
    %v3088 = vpop.permute.xlu0 %3087
    %3091 = vrot.lane.b32.xlu0 %v2997, 32
    %v3092 = vpop.permute.xlu0 %3091
    %3095 = vrot.lane.b32.xlu0 %v3015, 48
    %v3096 = vpop.permute.xlu0 %3095
    %3099 = vrot.lane.b32.xlu0 %v3006, 64
    %v3100 = vpop.permute.xlu0 %3099
    %3103 = vrot.lane.b32.xlu0 %v3016, 80
    %v3104 = vpop.permute.xlu0 %3103
    %3107 = vrot.lane.b32.xlu0 %v3013, 96
    %v3108 = vpop.permute.xlu0 %3107
    %3111 = vrot.lane.b32.xlu0 %v3017, 112
    %v3112 = vpop.permute.xlu0 %3111
    %3115 = vrot.lane.b32.xlu0 %v3082, 16
    %v3116 = vpop.permute.xlu0 %3115
    %3119 = vrot.lane.b32.xlu0 %v3065, 32
    %v3120 = vpop.permute.xlu0 %3119
    %3123 = vrot.lane.b32.xlu0 %v3083, 48
    %v3124 = vpop.permute.xlu0 %3123
    %3127 = vrot.lane.b32.xlu0 %v3074, 64
    %v3128 = vpop.permute.xlu0 %3127
    %3131 = vrot.lane.b32.xlu0 %v3084, 80
    %v3132 = vpop.permute.xlu0 %3131
    %3135 = vrot.lane.b32.xlu0 %v3081, 96
    %v3136 = vpop.permute.xlu0 %3135
    %3139 = vrot.lane.b32.xlu0 %v3085, 112
    %v3140 = vpop.permute.xlu0 %3139
    %v3142 = vsel %vm221, %v2990, %v3088
    %v3143 = vsel %vm223, %v3142, %v3092
    %v3144 = vsel %vm225, %v3143, %v3096
    %v3145 = vsel %vm227, %v3144, %v3100
    %v3146 = vsel %vm229, %v3145, %v3104
    %v3147 = vsel %vm231, %v3146, %v3108
    %v3148 = vsel %vm233, %v3147, %v3112
    %v3149 = vsel %vm221, %v3058, %v3116
    %v3150 = vsel %vm223, %v3149, %v3120
    %v3151 = vsel %vm225, %v3150, %v3124
    %v3152 = vsel %vm227, %v3151, %v3128
    %v3153 = vsel %vm229, %v3152, %v3132
    %v3154 = vsel %vm231, %v3153, %v3136
    %v3155 = vsel %vm233, %v3154, %v3140
    %3156 = vrot.lane.b32.xlu0 %v2924, 127
    %v3157 = vpop.permute.xlu0 %3156
    %3158 = vrot.lane.b32.xlu0 %v2926, 127
    %v3159 = vpop.permute.xlu0 %3158
    %3160 = vrot.lane.b32.xlu0 %v2929, 127
    %v3161 = vpop.permute.xlu0 %3160
    %3162 = vrot.lane.b32.xlu0 %v2931, 127
    %v3163 = vpop.permute.xlu0 %3162
    %3164 = vrot.lane.b32.xlu0 %v2934, 127
    %v3165 = vpop.permute.xlu0 %3164
    %3166 = vrot.lane.b32.xlu0 %v2936, 127
    %v3167 = vpop.permute.xlu0 %3166
    %3168 = vrot.lane.b32.xlu0 %v2939, 127
    %v3169 = vpop.permute.xlu0 %3168
    %3170 = vrot.lane.b32.xlu0 %v2941, 127
    %v3171 = vpop.permute.xlu0 %3170
    %v3180 = vcombine.low %v3157, %v3165
    %v3181 = vcombine.high %v3157, %v3165
    %v3183 = vunpack.c.l.s4 1983009808
    %v3184 = vunpack.c.0.s8 %v3183
    %v3185 = vlaneseq
    %v3186 = vshrl.u32 %v3185, 7
    %v3187 = vsub.s32 %v3184, %v3186
    %v3188 = vrot.slane %v3180, %v3187
    %v3190 = vunpack.c.l.s4 1983009808
    %v3191 = vunpack.c.0.s8 %v3190
    %v3192 = vlaneseq
    %v3193 = vshrl.u32 %v3192, 7
    %v3194 = vsub.s32 %v3191, %v3193
    %v3195 = vrot.slane %v3181, %v3194
    %v3196 = vcombine.low %v3161, %v3169
    %v3197 = vcombine.high %v3161, %v3169
    %v3199 = vunpack.c.l.s4 1983009808
    %v3200 = vunpack.c.0.s8 %v3199
    %v3201 = vlaneseq
    %v3202 = vshrl.u32 %v3201, 7
    %v3203 = vsub.s32 %v3200, %v3202
    %v3204 = vrot.slane %v3196, %v3203
    %v3206 = vunpack.c.l.s4 1983009808
    %v3207 = vunpack.c.0.s8 %v3206
    %v3208 = vlaneseq
    %v3209 = vshrl.u32 %v3208, 7
    %v3210 = vsub.s32 %v3207, %v3209
    %v3211 = vrot.slane %v3197, %v3210
    %v3212 = vcombine.low %v3188, %v3204
    %v3213 = vcombine.high %v3188, %v3204
    %v3215 = vunpack.c.l.s4 1934713408
    %v3216 = vunpack.c.0.s8 %v3215
    %v3217 = vlaneseq
    %v3218 = vshrl.u32 %v3217, 7
    %v3219 = vsub.s32 %v3216, %v3218
    %v3220 = vrot.slane %v3212, %v3219
    %v3222 = vunpack.c.l.s4 1934713408
    %v3223 = vunpack.c.0.s8 %v3222
    %v3224 = vlaneseq
    %v3225 = vshrl.u32 %v3224, 7
    %v3226 = vsub.s32 %v3223, %v3225
    %v3227 = vrot.slane %v3213, %v3226
    %v3228 = vcombine.low %v3195, %v3211
    %v3229 = vcombine.high %v3195, %v3211
    %v3231 = vunpack.c.l.s4 1934713408
    %v3232 = vunpack.c.0.s8 %v3231
    %v3233 = vlaneseq
    %v3234 = vshrl.u32 %v3233, 7
    %v3235 = vsub.s32 %v3232, %v3234
    %v3236 = vrot.slane %v3228, %v3235
    %v3238 = vunpack.c.l.s4 1934713408
    %v3239 = vunpack.c.0.s8 %v3238
    %v3240 = vlaneseq
    %v3241 = vshrl.u32 %v3240, 7
    %v3242 = vsub.s32 %v3239, %v3241
    %v3243 = vrot.slane %v3229, %v3242
    %v3244 = vcombine.high %v3220, 0.0
    %v3245 = vcombine.high %v3227, 0.0
    %v3246 = vcombine.high %v3236, 0.0
    %v3247 = vcombine.high %v3243, 0.0
    %v3248 = vcombine.low %v3159, %v3167
    %v3249 = vcombine.high %v3159, %v3167
    %v3251 = vunpack.c.l.s4 1983009808
    %v3252 = vunpack.c.0.s8 %v3251
    %v3253 = vlaneseq
    %v3254 = vshrl.u32 %v3253, 7
    %v3255 = vsub.s32 %v3252, %v3254
    %v3256 = vrot.slane %v3248, %v3255
    %v3258 = vunpack.c.l.s4 1983009808
    %v3259 = vunpack.c.0.s8 %v3258
    %v3260 = vlaneseq
    %v3261 = vshrl.u32 %v3260, 7
    %v3262 = vsub.s32 %v3259, %v3261
    %v3263 = vrot.slane %v3249, %v3262
    %v3264 = vcombine.low %v3163, %v3171
    %v3265 = vcombine.high %v3163, %v3171
    %v3267 = vunpack.c.l.s4 1983009808
    %v3268 = vunpack.c.0.s8 %v3267
    %v3269 = vlaneseq
    %v3270 = vshrl.u32 %v3269, 7
    %v3271 = vsub.s32 %v3268, %v3270
    %v3272 = vrot.slane %v3264, %v3271
    %v3274 = vunpack.c.l.s4 1983009808
    %v3275 = vunpack.c.0.s8 %v3274
    %v3276 = vlaneseq
    %v3277 = vshrl.u32 %v3276, 7
    %v3278 = vsub.s32 %v3275, %v3277
    %v3279 = vrot.slane %v3265, %v3278
    %v3280 = vcombine.low %v3256, %v3272
    %v3281 = vcombine.high %v3256, %v3272
    %v3283 = vunpack.c.l.s4 1934713408
    %v3284 = vunpack.c.0.s8 %v3283
    %v3285 = vlaneseq
    %v3286 = vshrl.u32 %v3285, 7
    %v3287 = vsub.s32 %v3284, %v3286
    %v3288 = vrot.slane %v3280, %v3287
    %v3290 = vunpack.c.l.s4 1934713408
    %v3291 = vunpack.c.0.s8 %v3290
    %v3292 = vlaneseq
    %v3293 = vshrl.u32 %v3292, 7
    %v3294 = vsub.s32 %v3291, %v3293
    %v3295 = vrot.slane %v3281, %v3294
    %v3296 = vcombine.low %v3263, %v3279
    %v3297 = vcombine.high %v3263, %v3279
    %v3299 = vunpack.c.l.s4 1934713408
    %v3300 = vunpack.c.0.s8 %v3299
    %v3301 = vlaneseq
    %v3302 = vshrl.u32 %v3301, 7
    %v3303 = vsub.s32 %v3300, %v3302
    %v3304 = vrot.slane %v3296, %v3303
    %v3306 = vunpack.c.l.s4 1934713408
    %v3307 = vunpack.c.0.s8 %v3306
    %v3308 = vlaneseq
    %v3309 = vshrl.u32 %v3308, 7
    %v3310 = vsub.s32 %v3307, %v3309
    %v3311 = vrot.slane %v3297, %v3310
    %v3312 = vcombine.high %v3288, 0.0
    %v3313 = vcombine.high %v3295, 0.0
    %v3314 = vcombine.high %v3304, 0.0
    %v3315 = vcombine.high %v3311, 0.0
    %3317 = vrot.lane.b32.xlu0 %v3244, 16
    %v3318 = vpop.permute.xlu0 %3317
    %3321 = vrot.lane.b32.xlu0 %v3227, 32
    %v3322 = vpop.permute.xlu0 %3321
    %3325 = vrot.lane.b32.xlu0 %v3245, 48
    %v3326 = vpop.permute.xlu0 %3325
    %3329 = vrot.lane.b32.xlu0 %v3236, 64
    %v3330 = vpop.permute.xlu0 %3329
    %3333 = vrot.lane.b32.xlu0 %v3246, 80
    %v3334 = vpop.permute.xlu0 %3333
    %3337 = vrot.lane.b32.xlu0 %v3243, 96
    %v3338 = vpop.permute.xlu0 %3337
    %3341 = vrot.lane.b32.xlu0 %v3247, 112
    %v3342 = vpop.permute.xlu0 %3341
    %3345 = vrot.lane.b32.xlu0 %v3312, 16
    %v3346 = vpop.permute.xlu0 %3345
    %3349 = vrot.lane.b32.xlu0 %v3295, 32
    %v3350 = vpop.permute.xlu0 %3349
    %3353 = vrot.lane.b32.xlu0 %v3313, 48
    %v3354 = vpop.permute.xlu0 %3353
    %3357 = vrot.lane.b32.xlu0 %v3304, 64
    %v3358 = vpop.permute.xlu0 %3357
    %3361 = vrot.lane.b32.xlu0 %v3314, 80
    %v3362 = vpop.permute.xlu0 %3361
    %3365 = vrot.lane.b32.xlu0 %v3311, 96
    %v3366 = vpop.permute.xlu0 %3365
    %3369 = vrot.lane.b32.xlu0 %v3315, 112
    %v3370 = vpop.permute.xlu0 %3369
    %v3372 = vsel %vm221, %v3220, %v3318
    %v3373 = vsel %vm223, %v3372, %v3322
    %v3374 = vsel %vm225, %v3373, %v3326
    %v3375 = vsel %vm227, %v3374, %v3330
    %v3376 = vsel %vm229, %v3375, %v3334
    %v3377 = vsel %vm231, %v3376, %v3338
    %v3378 = vsel %vm233, %v3377, %v3342
    %v3379 = vsel %vm221, %v3288, %v3346
    %v3380 = vsel %vm223, %v3379, %v3350
    %v3381 = vsel %vm225, %v3380, %v3354
    %v3382 = vsel %vm227, %v3381, %v3358
    %v3383 = vsel %vm229, %v3382, %v3362
    %v3384 = vsel %vm231, %v3383, %v3366
    %v3385 = vsel %vm233, %v3384, %v3370
    %3386 = vrot.lane.b32.xlu0 %v2924, 126
    %v3387 = vpop.permute.xlu0 %3386
    %3388 = vrot.lane.b32.xlu0 %v2926, 126
    %v3389 = vpop.permute.xlu0 %3388
    %3390 = vrot.lane.b32.xlu0 %v2929, 126
    %v3391 = vpop.permute.xlu0 %3390
    %3392 = vrot.lane.b32.xlu0 %v2931, 126
    %v3393 = vpop.permute.xlu0 %3392
    %3394 = vrot.lane.b32.xlu0 %v2934, 126
    %v3395 = vpop.permute.xlu0 %3394
    %3396 = vrot.lane.b32.xlu0 %v2936, 126
    %v3397 = vpop.permute.xlu0 %3396
    %3398 = vrot.lane.b32.xlu0 %v2939, 126
    %v3399 = vpop.permute.xlu0 %3398
    %3400 = vrot.lane.b32.xlu0 %v2941, 126
    %v3401 = vpop.permute.xlu0 %3400
    %v3410 = vcombine.low %v3387, %v3395
    %v3411 = vcombine.high %v3387, %v3395
    %v3413 = vunpack.c.l.s4 1983009808
    %v3414 = vunpack.c.0.s8 %v3413
    %v3415 = vlaneseq
    %v3416 = vshrl.u32 %v3415, 7
    %v3417 = vsub.s32 %v3414, %v3416
    %v3418 = vrot.slane %v3410, %v3417
    %v3420 = vunpack.c.l.s4 1983009808
    %v3421 = vunpack.c.0.s8 %v3420
    %v3422 = vlaneseq
    %v3423 = vshrl.u32 %v3422, 7
    %v3424 = vsub.s32 %v3421, %v3423
    %v3425 = vrot.slane %v3411, %v3424
    %v3426 = vcombine.low %v3391, %v3399
    %v3427 = vcombine.high %v3391, %v3399
    %v3429 = vunpack.c.l.s4 1983009808
    %v3430 = vunpack.c.0.s8 %v3429
    %v3431 = vlaneseq
    %v3432 = vshrl.u32 %v3431, 7
    %v3433 = vsub.s32 %v3430, %v3432
    %v3434 = vrot.slane %v3426, %v3433
    %v3436 = vunpack.c.l.s4 1983009808
    %v3437 = vunpack.c.0.s8 %v3436
    %v3438 = vlaneseq
    %v3439 = vshrl.u32 %v3438, 7
    %v3440 = vsub.s32 %v3437, %v3439
    %v3441 = vrot.slane %v3427, %v3440
    %v3442 = vcombine.low %v3418, %v3434
    %v3443 = vcombine.high %v3418, %v3434
    %v3445 = vunpack.c.l.s4 1934713408
    %v3446 = vunpack.c.0.s8 %v3445
    %v3447 = vlaneseq
    %v3448 = vshrl.u32 %v3447, 7
    %v3449 = vsub.s32 %v3446, %v3448
    %v3450 = vrot.slane %v3442, %v3449
    %v3452 = vunpack.c.l.s4 1934713408
    %v3453 = vunpack.c.0.s8 %v3452
    %v3454 = vlaneseq
    %v3455 = vshrl.u32 %v3454, 7
    %v3456 = vsub.s32 %v3453, %v3455
    %v3457 = vrot.slane %v3443, %v3456
    %v3458 = vcombine.low %v3425, %v3441
    %v3459 = vcombine.high %v3425, %v3441
    %v3461 = vunpack.c.l.s4 1934713408
    %v3462 = vunpack.c.0.s8 %v3461
    %v3463 = vlaneseq
    %v3464 = vshrl.u32 %v3463, 7
    %v3465 = vsub.s32 %v3462, %v3464
    %v3466 = vrot.slane %v3458, %v3465
    %v3468 = vunpack.c.l.s4 1934713408
    %v3469 = vunpack.c.0.s8 %v3468
    %v3470 = vlaneseq
    %v3471 = vshrl.u32 %v3470, 7
    %v3472 = vsub.s32 %v3469, %v3471
    %v3473 = vrot.slane %v3459, %v3472
    %v3474 = vcombine.high %v3450, 0.0
    %v3475 = vcombine.high %v3457, 0.0
    %v3476 = vcombine.high %v3466, 0.0
    %v3477 = vcombine.high %v3473, 0.0
    %v3478 = vcombine.low %v3389, %v3397
    %v3479 = vcombine.high %v3389, %v3397
    %v3481 = vunpack.c.l.s4 1983009808
    %v3482 = vunpack.c.0.s8 %v3481
    %v3483 = vlaneseq
    %v3484 = vshrl.u32 %v3483, 7
    %v3485 = vsub.s32 %v3482, %v3484
    %v3486 = vrot.slane %v3478, %v3485
    %v3488 = vunpack.c.l.s4 1983009808
    %v3489 = vunpack.c.0.s8 %v3488
    %v3490 = vlaneseq
    %v3491 = vshrl.u32 %v3490, 7
    %v3492 = vsub.s32 %v3489, %v3491
    %v3493 = vrot.slane %v3479, %v3492
    %v3494 = vcombine.low %v3393, %v3401
    %v3495 = vcombine.high %v3393, %v3401
    %v3497 = vunpack.c.l.s4 1983009808
    %v3498 = vunpack.c.0.s8 %v3497
    %v3499 = vlaneseq
    %v3500 = vshrl.u32 %v3499, 7
    %v3501 = vsub.s32 %v3498, %v3500
    %v3502 = vrot.slane %v3494, %v3501
    %v3504 = vunpack.c.l.s4 1983009808
    %v3505 = vunpack.c.0.s8 %v3504
    %v3506 = vlaneseq
    %v3507 = vshrl.u32 %v3506, 7
    %v3508 = vsub.s32 %v3505, %v3507
    %v3509 = vrot.slane %v3495, %v3508
    %v3510 = vcombine.low %v3486, %v3502
    %v3511 = vcombine.high %v3486, %v3502
    %v3513 = vunpack.c.l.s4 1934713408
    %v3514 = vunpack.c.0.s8 %v3513
    %v3515 = vlaneseq
    %v3516 = vshrl.u32 %v3515, 7
    %v3517 = vsub.s32 %v3514, %v3516
    %v3518 = vrot.slane %v3510, %v3517
    %v3520 = vunpack.c.l.s4 1934713408
    %v3521 = vunpack.c.0.s8 %v3520
    %v3522 = vlaneseq
    %v3523 = vshrl.u32 %v3522, 7
    %v3524 = vsub.s32 %v3521, %v3523
    %v3525 = vrot.slane %v3511, %v3524
    %v3526 = vcombine.low %v3493, %v3509
    %v3527 = vcombine.high %v3493, %v3509
    %v3529 = vunpack.c.l.s4 1934713408
    %v3530 = vunpack.c.0.s8 %v3529
    %v3531 = vlaneseq
    %v3532 = vshrl.u32 %v3531, 7
    %v3533 = vsub.s32 %v3530, %v3532
    %v3534 = vrot.slane %v3526, %v3533
    %v3536 = vunpack.c.l.s4 1934713408
    %v3537 = vunpack.c.0.s8 %v3536
    %v3538 = vlaneseq
    %v3539 = vshrl.u32 %v3538, 7
    %v3540 = vsub.s32 %v3537, %v3539
    %v3541 = vrot.slane %v3527, %v3540
    %v3542 = vcombine.high %v3518, 0.0
    %v3543 = vcombine.high %v3525, 0.0
    %v3544 = vcombine.high %v3534, 0.0
    %v3545 = vcombine.high %v3541, 0.0
    %3547 = vrot.lane.b32.xlu0 %v3474, 16
    %v3548 = vpop.permute.xlu0 %3547
    %3551 = vrot.lane.b32.xlu0 %v3457, 32
    %v3552 = vpop.permute.xlu0 %3551
    %3555 = vrot.lane.b32.xlu0 %v3475, 48
    %v3556 = vpop.permute.xlu0 %3555
    %3559 = vrot.lane.b32.xlu0 %v3466, 64
    %v3560 = vpop.permute.xlu0 %3559
    %3563 = vrot.lane.b32.xlu0 %v3476, 80
    %v3564 = vpop.permute.xlu0 %3563
    %3567 = vrot.lane.b32.xlu0 %v3473, 96
    %v3568 = vpop.permute.xlu0 %3567
    %3571 = vrot.lane.b32.xlu0 %v3477, 112
    %v3572 = vpop.permute.xlu0 %3571
    %3575 = vrot.lane.b32.xlu0 %v3542, 16
    %v3576 = vpop.permute.xlu0 %3575
    %3579 = vrot.lane.b32.xlu0 %v3525, 32
    %v3580 = vpop.permute.xlu0 %3579
    %3583 = vrot.lane.b32.xlu0 %v3543, 48
    %v3584 = vpop.permute.xlu0 %3583
    %3587 = vrot.lane.b32.xlu0 %v3534, 64
    %v3588 = vpop.permute.xlu0 %3587
    %3591 = vrot.lane.b32.xlu0 %v3544, 80
    %v3592 = vpop.permute.xlu0 %3591
    %3595 = vrot.lane.b32.xlu0 %v3541, 96
    %v3596 = vpop.permute.xlu0 %3595
    %3599 = vrot.lane.b32.xlu0 %v3545, 112
    %v3600 = vpop.permute.xlu0 %3599
    %v3602 = vsel %vm221, %v3450, %v3548
    %v3603 = vsel %vm223, %v3602, %v3552
    %v3604 = vsel %vm225, %v3603, %v3556
    %v3605 = vsel %vm227, %v3604, %v3560
    %v3606 = vsel %vm229, %v3605, %v3564
    %v3607 = vsel %vm231, %v3606, %v3568
    %v3608 = vsel %vm233, %v3607, %v3572
    %v3609 = vsel %vm221, %v3518, %v3576
    %v3610 = vsel %vm223, %v3609, %v3580
    %v3611 = vsel %vm225, %v3610, %v3584
    %v3612 = vsel %vm227, %v3611, %v3588
    %v3613 = vsel %vm229, %v3612, %v3592
    %v3614 = vsel %vm231, %v3613, %v3596
    %v3615 = vsel %vm233, %v3614, %v3600
    %v3616 = vrot.slane %v2232, 2
    %v3617 = vrot.slane %v2233, 2
    %v3618 = vsel %vm1409, %v3616, %v3617
    %v3619 = vrot.slane %v2234, 2
    %v3620 = vsel %vm1409, %v3617, %v3619
    %v3621 = vrot.slane %v2235, 2
    %v3622 = vrot.slane %v2236, 2
    %v3623 = vsel %vm1409, %v3621, %v3622
    %v3624 = vrot.slane %v2237, 2
    %v3625 = vsel %vm1409, %v3622, %v3624
    %v3626 = vrot.slane %v2238, 2
    %v3627 = vrot.slane %v2239, 2
    %v3628 = vsel %vm1409, %v3626, %v3627
    %v3629 = vrot.slane %v2240, 2
    %v3630 = vsel %vm1409, %v3627, %v3629
    %v3631 = vrot.slane %v2241, 2
    %v3632 = vrot.slane %v2242, 2
    %v3633 = vsel %vm1409, %v3631, %v3632
    %v3634 = vrot.slane %v2243, 2
    %v3635 = vsel %vm1409, %v3632, %v3634
    %v3644 = vcombine.low %v3618, %v3628
    %v3645 = vcombine.high %v3618, %v3628
    %v3647 = vunpack.c.l.s4 1983009808
    %v3648 = vunpack.c.0.s8 %v3647
    %v3649 = vlaneseq
    %v3650 = vshrl.u32 %v3649, 7
    %v3651 = vsub.s32 %v3648, %v3650
    %v3652 = vrot.slane %v3644, %v3651
    %v3654 = vunpack.c.l.s4 1983009808
    %v3655 = vunpack.c.0.s8 %v3654
    %v3656 = vlaneseq
    %v3657 = vshrl.u32 %v3656, 7
    %v3658 = vsub.s32 %v3655, %v3657
    %v3659 = vrot.slane %v3645, %v3658
    %v3660 = vcombine.low %v3623, %v3633
    %v3661 = vcombine.high %v3623, %v3633
    %v3663 = vunpack.c.l.s4 1983009808
    %v3664 = vunpack.c.0.s8 %v3663
    %v3665 = vlaneseq
    %v3666 = vshrl.u32 %v3665, 7
    %v3667 = vsub.s32 %v3664, %v3666
    %v3668 = vrot.slane %v3660, %v3667
    %v3670 = vunpack.c.l.s4 1983009808
    %v3671 = vunpack.c.0.s8 %v3670
    %v3672 = vlaneseq
    %v3673 = vshrl.u32 %v3672, 7
    %v3674 = vsub.s32 %v3671, %v3673
    %v3675 = vrot.slane %v3661, %v3674
    %v3676 = vcombine.low %v3652, %v3668
    %v3677 = vcombine.high %v3652, %v3668
    %v3679 = vunpack.c.l.s4 1934713408
    %v3680 = vunpack.c.0.s8 %v3679
    %v3681 = vlaneseq
    %v3682 = vshrl.u32 %v3681, 7
    %v3683 = vsub.s32 %v3680, %v3682
    %v3684 = vrot.slane %v3676, %v3683
    %v3686 = vunpack.c.l.s4 1934713408
    %v3687 = vunpack.c.0.s8 %v3686
    %v3688 = vlaneseq
    %v3689 = vshrl.u32 %v3688, 7
    %v3690 = vsub.s32 %v3687, %v3689
    %v3691 = vrot.slane %v3677, %v3690
    %v3692 = vcombine.low %v3659, %v3675
    %v3693 = vcombine.high %v3659, %v3675
    %v3695 = vunpack.c.l.s4 1934713408
    %v3696 = vunpack.c.0.s8 %v3695
    %v3697 = vlaneseq
    %v3698 = vshrl.u32 %v3697, 7
    %v3699 = vsub.s32 %v3696, %v3698
    %v3700 = vrot.slane %v3692, %v3699
    %v3702 = vunpack.c.l.s4 1934713408
    %v3703 = vunpack.c.0.s8 %v3702
    %v3704 = vlaneseq
    %v3705 = vshrl.u32 %v3704, 7
    %v3706 = vsub.s32 %v3703, %v3705
    %v3707 = vrot.slane %v3693, %v3706
    %v3708 = vcombine.high %v3684, 0.0
    %v3709 = vcombine.high %v3691, 0.0
    %v3710 = vcombine.high %v3700, 0.0
    %v3711 = vcombine.high %v3707, 0.0
    %v3712 = vcombine.low %v3620, %v3630
    %v3713 = vcombine.high %v3620, %v3630
    %v3715 = vunpack.c.l.s4 1983009808
    %v3716 = vunpack.c.0.s8 %v3715
    %v3717 = vlaneseq
    %v3718 = vshrl.u32 %v3717, 7
    %v3719 = vsub.s32 %v3716, %v3718
    %v3720 = vrot.slane %v3712, %v3719
    %v3722 = vunpack.c.l.s4 1983009808
    %v3723 = vunpack.c.0.s8 %v3722
    %v3724 = vlaneseq
    %v3725 = vshrl.u32 %v3724, 7
    %v3726 = vsub.s32 %v3723, %v3725
    %v3727 = vrot.slane %v3713, %v3726
    %v3728 = vcombine.low %v3625, %v3635
    %v3729 = vcombine.high %v3625, %v3635
    %v3731 = vunpack.c.l.s4 1983009808
    %v3732 = vunpack.c.0.s8 %v3731
    %v3733 = vlaneseq
    %v3734 = vshrl.u32 %v3733, 7
    %v3735 = vsub.s32 %v3732, %v3734
    %v3736 = vrot.slane %v3728, %v3735
    %v3738 = vunpack.c.l.s4 1983009808
    %v3739 = vunpack.c.0.s8 %v3738
    %v3740 = vlaneseq
    %v3741 = vshrl.u32 %v3740, 7
    %v3742 = vsub.s32 %v3739, %v3741
    %v3743 = vrot.slane %v3729, %v3742
    %v3744 = vcombine.low %v3720, %v3736
    %v3745 = vcombine.high %v3720, %v3736
    %v3747 = vunpack.c.l.s4 1934713408
    %v3748 = vunpack.c.0.s8 %v3747
    %v3749 = vlaneseq
    %v3750 = vshrl.u32 %v3749, 7
    %v3751 = vsub.s32 %v3748, %v3750
    %v3752 = vrot.slane %v3744, %v3751
    %v3754 = vunpack.c.l.s4 1934713408
    %v3755 = vunpack.c.0.s8 %v3754
    %v3756 = vlaneseq
    %v3757 = vshrl.u32 %v3756, 7
    %v3758 = vsub.s32 %v3755, %v3757
    %v3759 = vrot.slane %v3745, %v3758
    %v3760 = vcombine.low %v3727, %v3743
    %v3761 = vcombine.high %v3727, %v3743
    %v3763 = vunpack.c.l.s4 1934713408
    %v3764 = vunpack.c.0.s8 %v3763
    %v3765 = vlaneseq
    %v3766 = vshrl.u32 %v3765, 7
    %v3767 = vsub.s32 %v3764, %v3766
    %v3768 = vrot.slane %v3760, %v3767
    %v3770 = vunpack.c.l.s4 1934713408
    %v3771 = vunpack.c.0.s8 %v3770
    %v3772 = vlaneseq
    %v3773 = vshrl.u32 %v3772, 7
    %v3774 = vsub.s32 %v3771, %v3773
    %v3775 = vrot.slane %v3761, %v3774
    %v3776 = vcombine.high %v3752, 0.0
    %v3777 = vcombine.high %v3759, 0.0
    %v3778 = vcombine.high %v3768, 0.0
    %v3779 = vcombine.high %v3775, 0.0
    %3781 = vrot.lane.b32.xlu0 %v3708, 16
    %v3782 = vpop.permute.xlu0 %3781
    %3785 = vrot.lane.b32.xlu0 %v3691, 32
    %v3786 = vpop.permute.xlu0 %3785
    %3789 = vrot.lane.b32.xlu0 %v3709, 48
    %v3790 = vpop.permute.xlu0 %3789
    %3793 = vrot.lane.b32.xlu0 %v3700, 64
    %v3794 = vpop.permute.xlu0 %3793
    %3797 = vrot.lane.b32.xlu0 %v3710, 80
    %v3798 = vpop.permute.xlu0 %3797
    %3801 = vrot.lane.b32.xlu0 %v3707, 96
    %v3802 = vpop.permute.xlu0 %3801
    %3805 = vrot.lane.b32.xlu0 %v3711, 112
    %v3806 = vpop.permute.xlu0 %3805
    %3809 = vrot.lane.b32.xlu0 %v3776, 16
    %v3810 = vpop.permute.xlu0 %3809
    %3813 = vrot.lane.b32.xlu0 %v3759, 32
    %v3814 = vpop.permute.xlu0 %3813
    %3817 = vrot.lane.b32.xlu0 %v3777, 48
    %v3818 = vpop.permute.xlu0 %3817
    %3821 = vrot.lane.b32.xlu0 %v3768, 64
    %v3822 = vpop.permute.xlu0 %3821
    %3825 = vrot.lane.b32.xlu0 %v3778, 80
    %v3826 = vpop.permute.xlu0 %3825
    %3829 = vrot.lane.b32.xlu0 %v3775, 96
    %v3830 = vpop.permute.xlu0 %3829
    %3833 = vrot.lane.b32.xlu0 %v3779, 112
    %v3834 = vpop.permute.xlu0 %3833
    %v3836 = vsel %vm221, %v3684, %v3782
    %v3837 = vsel %vm223, %v3836, %v3786
    %v3838 = vsel %vm225, %v3837, %v3790
    %v3839 = vsel %vm227, %v3838, %v3794
    %v3840 = vsel %vm229, %v3839, %v3798
    %v3841 = vsel %vm231, %v3840, %v3802
    %v3842 = vsel %vm233, %v3841, %v3806
    %v3843 = vsel %vm221, %v3752, %v3810
    %v3844 = vsel %vm223, %v3843, %v3814
    %v3845 = vsel %vm225, %v3844, %v3818
    %v3846 = vsel %vm227, %v3845, %v3822
    %v3847 = vsel %vm229, %v3846, %v3826
    %v3848 = vsel %vm231, %v3847, %v3830
    %v3849 = vsel %vm233, %v3848, %v3834
    %3850 = vrot.lane.b32.xlu0 %v3618, 127
    %v3851 = vpop.permute.xlu0 %3850
    %3852 = vrot.lane.b32.xlu0 %v3620, 127
    %v3853 = vpop.permute.xlu0 %3852
    %3854 = vrot.lane.b32.xlu0 %v3623, 127
    %v3855 = vpop.permute.xlu0 %3854
    %3856 = vrot.lane.b32.xlu0 %v3625, 127
    %v3857 = vpop.permute.xlu0 %3856
    %3858 = vrot.lane.b32.xlu0 %v3628, 127
    %v3859 = vpop.permute.xlu0 %3858
    %3860 = vrot.lane.b32.xlu0 %v3630, 127
    %v3861 = vpop.permute.xlu0 %3860
    %3862 = vrot.lane.b32.xlu0 %v3633, 127
    %v3863 = vpop.permute.xlu0 %3862
    %3864 = vrot.lane.b32.xlu0 %v3635, 127
    %v3865 = vpop.permute.xlu0 %3864
    %v3874 = vcombine.low %v3851, %v3859
    %v3875 = vcombine.high %v3851, %v3859
    %v3877 = vunpack.c.l.s4 1983009808
    %v3878 = vunpack.c.0.s8 %v3877
    %v3879 = vlaneseq
    %v3880 = vshrl.u32 %v3879, 7
    %v3881 = vsub.s32 %v3878, %v3880
    %v3882 = vrot.slane %v3874, %v3881
    %v3884 = vunpack.c.l.s4 1983009808
    %v3885 = vunpack.c.0.s8 %v3884
    %v3886 = vlaneseq
    %v3887 = vshrl.u32 %v3886, 7
    %v3888 = vsub.s32 %v3885, %v3887
    %v3889 = vrot.slane %v3875, %v3888
    %v3890 = vcombine.low %v3855, %v3863
    %v3891 = vcombine.high %v3855, %v3863
    %v3893 = vunpack.c.l.s4 1983009808
    %v3894 = vunpack.c.0.s8 %v3893
    %v3895 = vlaneseq
    %v3896 = vshrl.u32 %v3895, 7
    %v3897 = vsub.s32 %v3894, %v3896
    %v3898 = vrot.slane %v3890, %v3897
    %v3900 = vunpack.c.l.s4 1983009808
    %v3901 = vunpack.c.0.s8 %v3900
    %v3902 = vlaneseq
    %v3903 = vshrl.u32 %v3902, 7
    %v3904 = vsub.s32 %v3901, %v3903
    %v3905 = vrot.slane %v3891, %v3904
    %v3906 = vcombine.low %v3882, %v3898
    %v3907 = vcombine.high %v3882, %v3898
    %v3909 = vunpack.c.l.s4 1934713408
    %v3910 = vunpack.c.0.s8 %v3909
    %v3911 = vlaneseq
    %v3912 = vshrl.u32 %v3911, 7
    %v3913 = vsub.s32 %v3910, %v3912
    %v3914 = vrot.slane %v3906, %v3913
    %v3916 = vunpack.c.l.s4 1934713408
    %v3917 = vunpack.c.0.s8 %v3916
    %v3918 = vlaneseq
    %v3919 = vshrl.u32 %v3918, 7
    %v3920 = vsub.s32 %v3917, %v3919
    %v3921 = vrot.slane %v3907, %v3920
    %v3922 = vcombine.low %v3889, %v3905
    %v3923 = vcombine.high %v3889, %v3905
    %v3925 = vunpack.c.l.s4 1934713408
    %v3926 = vunpack.c.0.s8 %v3925
    %v3927 = vlaneseq
    %v3928 = vshrl.u32 %v3927, 7
    %v3929 = vsub.s32 %v3926, %v3928
    %v3930 = vrot.slane %v3922, %v3929
    %v3932 = vunpack.c.l.s4 1934713408
    %v3933 = vunpack.c.0.s8 %v3932
    %v3934 = vlaneseq
    %v3935 = vshrl.u32 %v3934, 7
    %v3936 = vsub.s32 %v3933, %v3935
    %v3937 = vrot.slane %v3923, %v3936
    %v3938 = vcombine.high %v3914, 0.0
    %v3939 = vcombine.high %v3921, 0.0
    %v3940 = vcombine.high %v3930, 0.0
    %v3941 = vcombine.high %v3937, 0.0
    %v3942 = vcombine.low %v3853, %v3861
    %v3943 = vcombine.high %v3853, %v3861
    %v3945 = vunpack.c.l.s4 1983009808
    %v3946 = vunpack.c.0.s8 %v3945
    %v3947 = vlaneseq
    %v3948 = vshrl.u32 %v3947, 7
    %v3949 = vsub.s32 %v3946, %v3948
    %v3950 = vrot.slane %v3942, %v3949
    %v3952 = vunpack.c.l.s4 1983009808
    %v3953 = vunpack.c.0.s8 %v3952
    %v3954 = vlaneseq
    %v3955 = vshrl.u32 %v3954, 7
    %v3956 = vsub.s32 %v3953, %v3955
    %v3957 = vrot.slane %v3943, %v3956
    %v3958 = vcombine.low %v3857, %v3865
    %v3959 = vcombine.high %v3857, %v3865
    %v3961 = vunpack.c.l.s4 1983009808
    %v3962 = vunpack.c.0.s8 %v3961
    %v3963 = vlaneseq
    %v3964 = vshrl.u32 %v3963, 7
    %v3965 = vsub.s32 %v3962, %v3964
    %v3966 = vrot.slane %v3958, %v3965
    %v3968 = vunpack.c.l.s4 1983009808
    %v3969 = vunpack.c.0.s8 %v3968
    %v3970 = vlaneseq
    %v3971 = vshrl.u32 %v3970, 7
    %v3972 = vsub.s32 %v3969, %v3971
    %v3973 = vrot.slane %v3959, %v3972
    %v3974 = vcombine.low %v3950, %v3966
    %v3975 = vcombine.high %v3950, %v3966
    %v3977 = vunpack.c.l.s4 1934713408
    %v3978 = vunpack.c.0.s8 %v3977
    %v3979 = vlaneseq
    %v3980 = vshrl.u32 %v3979, 7
    %v3981 = vsub.s32 %v3978, %v3980
    %v3982 = vrot.slane %v3974, %v3981
    %v3984 = vunpack.c.l.s4 1934713408
    %v3985 = vunpack.c.0.s8 %v3984
    %v3986 = vlaneseq
    %v3987 = vshrl.u32 %v3986, 7
    %v3988 = vsub.s32 %v3985, %v3987
    %v3989 = vrot.slane %v3975, %v3988
    %v3990 = vcombine.low %v3957, %v3973
    %v3991 = vcombine.high %v3957, %v3973
    %v3993 = vunpack.c.l.s4 1934713408
    %v3994 = vunpack.c.0.s8 %v3993
    %v3995 = vlaneseq
    %v3996 = vshrl.u32 %v3995, 7
    %v3997 = vsub.s32 %v3994, %v3996
    %v3998 = vrot.slane %v3990, %v3997
    %v4000 = vunpack.c.l.s4 1934713408
    %v4001 = vunpack.c.0.s8 %v4000
    %v4002 = vlaneseq
    %v4003 = vshrl.u32 %v4002, 7
    %v4004 = vsub.s32 %v4001, %v4003
    %v4005 = vrot.slane %v3991, %v4004
    %v4006 = vcombine.high %v3982, 0.0
    %v4007 = vcombine.high %v3989, 0.0
    %v4008 = vcombine.high %v3998, 0.0
    %v4009 = vcombine.high %v4005, 0.0
    %4011 = vrot.lane.b32.xlu0 %v3938, 16
    %v4012 = vpop.permute.xlu0 %4011
    %4015 = vrot.lane.b32.xlu0 %v3921, 32
    %v4016 = vpop.permute.xlu0 %4015
    %4019 = vrot.lane.b32.xlu0 %v3939, 48
    %v4020 = vpop.permute.xlu0 %4019
    %4023 = vrot.lane.b32.xlu0 %v3930, 64
    %v4024 = vpop.permute.xlu0 %4023
    %4027 = vrot.lane.b32.xlu0 %v3940, 80
    %v4028 = vpop.permute.xlu0 %4027
    %4031 = vrot.lane.b32.xlu0 %v3937, 96
    %v4032 = vpop.permute.xlu0 %4031
    %4035 = vrot.lane.b32.xlu0 %v3941, 112
    %v4036 = vpop.permute.xlu0 %4035
    %4039 = vrot.lane.b32.xlu0 %v4006, 16
    %v4040 = vpop.permute.xlu0 %4039
    %4043 = vrot.lane.b32.xlu0 %v3989, 32
    %v4044 = vpop.permute.xlu0 %4043
    %4047 = vrot.lane.b32.xlu0 %v4007, 48
    %v4048 = vpop.permute.xlu0 %4047
    %4051 = vrot.lane.b32.xlu0 %v3998, 64
    %v4052 = vpop.permute.xlu0 %4051
    %4055 = vrot.lane.b32.xlu0 %v4008, 80
    %v4056 = vpop.permute.xlu0 %4055
    %4059 = vrot.lane.b32.xlu0 %v4005, 96
    %v4060 = vpop.permute.xlu0 %4059
    %4063 = vrot.lane.b32.xlu0 %v4009, 112
    %v4064 = vpop.permute.xlu0 %4063
    %v4066 = vsel %vm221, %v3914, %v4012
    %v4067 = vsel %vm223, %v4066, %v4016
    %v4068 = vsel %vm225, %v4067, %v4020
    %v4069 = vsel %vm227, %v4068, %v4024
    %v4070 = vsel %vm229, %v4069, %v4028
    %v4071 = vsel %vm231, %v4070, %v4032
    %v4072 = vsel %vm233, %v4071, %v4036
    %v4073 = vsel %vm221, %v3982, %v4040
    %v4074 = vsel %vm223, %v4073, %v4044
    %v4075 = vsel %vm225, %v4074, %v4048
    %v4076 = vsel %vm227, %v4075, %v4052
    %v4077 = vsel %vm229, %v4076, %v4056
    %v4078 = vsel %vm231, %v4077, %v4060
    %v4079 = vsel %vm233, %v4078, %v4064
    %4080 = vrot.lane.b32.xlu0 %v3618, 126
    %v4081 = vpop.permute.xlu0 %4080
    %4082 = vrot.lane.b32.xlu0 %v3620, 126
    %v4083 = vpop.permute.xlu0 %4082
    %4084 = vrot.lane.b32.xlu0 %v3623, 126
    %v4085 = vpop.permute.xlu0 %4084
    %4086 = vrot.lane.b32.xlu0 %v3625, 126
    %v4087 = vpop.permute.xlu0 %4086
    %4088 = vrot.lane.b32.xlu0 %v3628, 126
    %v4089 = vpop.permute.xlu0 %4088
    %4090 = vrot.lane.b32.xlu0 %v3630, 126
    %v4091 = vpop.permute.xlu0 %4090
    %4092 = vrot.lane.b32.xlu0 %v3633, 126
    %v4093 = vpop.permute.xlu0 %4092
    %4094 = vrot.lane.b32.xlu0 %v3635, 126
    %v4095 = vpop.permute.xlu0 %4094
    %v4104 = vcombine.low %v4081, %v4089
    %v4105 = vcombine.high %v4081, %v4089
    %v4107 = vunpack.c.l.s4 1983009808
    %v4108 = vunpack.c.0.s8 %v4107
    %v4109 = vlaneseq
    %v4110 = vshrl.u32 %v4109, 7
    %v4111 = vsub.s32 %v4108, %v4110
    %v4112 = vrot.slane %v4104, %v4111
    %v4114 = vunpack.c.l.s4 1983009808
    %v4115 = vunpack.c.0.s8 %v4114
    %v4116 = vlaneseq
    %v4117 = vshrl.u32 %v4116, 7
    %v4118 = vsub.s32 %v4115, %v4117
    %v4119 = vrot.slane %v4105, %v4118
    %v4120 = vcombine.low %v4085, %v4093
    %v4121 = vcombine.high %v4085, %v4093
    %v4123 = vunpack.c.l.s4 1983009808
    %v4124 = vunpack.c.0.s8 %v4123
    %v4125 = vlaneseq
    %v4126 = vshrl.u32 %v4125, 7
    %v4127 = vsub.s32 %v4124, %v4126
    %v4128 = vrot.slane %v4120, %v4127
    %v4130 = vunpack.c.l.s4 1983009808
    %v4131 = vunpack.c.0.s8 %v4130
    %v4132 = vlaneseq
    %v4133 = vshrl.u32 %v4132, 7
    %v4134 = vsub.s32 %v4131, %v4133
    %v4135 = vrot.slane %v4121, %v4134
    %v4136 = vcombine.low %v4112, %v4128
    %v4137 = vcombine.high %v4112, %v4128
    %v4139 = vunpack.c.l.s4 1934713408
    %v4140 = vunpack.c.0.s8 %v4139
    %v4141 = vlaneseq
    %v4142 = vshrl.u32 %v4141, 7
    %v4143 = vsub.s32 %v4140, %v4142
    %v4144 = vrot.slane %v4136, %v4143
    %v4146 = vunpack.c.l.s4 1934713408
    %v4147 = vunpack.c.0.s8 %v4146
    %v4148 = vlaneseq
    %v4149 = vshrl.u32 %v4148, 7
    %v4150 = vsub.s32 %v4147, %v4149
    %v4151 = vrot.slane %v4137, %v4150
    %v4152 = vcombine.low %v4119, %v4135
    %v4153 = vcombine.high %v4119, %v4135
    %v4155 = vunpack.c.l.s4 1934713408
    %v4156 = vunpack.c.0.s8 %v4155
    %v4157 = vlaneseq
    %v4158 = vshrl.u32 %v4157, 7
    %v4159 = vsub.s32 %v4156, %v4158
    %v4160 = vrot.slane %v4152, %v4159
    %v4162 = vunpack.c.l.s4 1934713408
    %v4163 = vunpack.c.0.s8 %v4162
    %v4164 = vlaneseq
    %v4165 = vshrl.u32 %v4164, 7
    %v4166 = vsub.s32 %v4163, %v4165
    %v4167 = vrot.slane %v4153, %v4166
    %v4168 = vcombine.high %v4144, 0.0
    %v4169 = vcombine.high %v4151, 0.0
    %v4170 = vcombine.high %v4160, 0.0
    %v4171 = vcombine.high %v4167, 0.0
    %v4172 = vcombine.low %v4083, %v4091
    %v4173 = vcombine.high %v4083, %v4091
    %v4175 = vunpack.c.l.s4 1983009808
    %v4176 = vunpack.c.0.s8 %v4175
    %v4177 = vlaneseq
    %v4178 = vshrl.u32 %v4177, 7
    %v4179 = vsub.s32 %v4176, %v4178
    %v4180 = vrot.slane %v4172, %v4179
    %v4182 = vunpack.c.l.s4 1983009808
    %v4183 = vunpack.c.0.s8 %v4182
    %v4184 = vlaneseq
    %v4185 = vshrl.u32 %v4184, 7
    %v4186 = vsub.s32 %v4183, %v4185
    %v4187 = vrot.slane %v4173, %v4186
    %v4188 = vcombine.low %v4087, %v4095
    %v4189 = vcombine.high %v4087, %v4095
    %v4191 = vunpack.c.l.s4 1983009808
    %v4192 = vunpack.c.0.s8 %v4191
    %v4193 = vlaneseq
    %v4194 = vshrl.u32 %v4193, 7
    %v4195 = vsub.s32 %v4192, %v4194
    %v4196 = vrot.slane %v4188, %v4195
    %v4198 = vunpack.c.l.s4 1983009808
    %v4199 = vunpack.c.0.s8 %v4198
    %v4200 = vlaneseq
    %v4201 = vshrl.u32 %v4200, 7
    %v4202 = vsub.s32 %v4199, %v4201
    %v4203 = vrot.slane %v4189, %v4202
    %v4204 = vcombine.low %v4180, %v4196
    %v4205 = vcombine.high %v4180, %v4196
    %v4207 = vunpack.c.l.s4 1934713408
    %v4208 = vunpack.c.0.s8 %v4207
    %v4209 = vlaneseq
    %v4210 = vshrl.u32 %v4209, 7
    %v4211 = vsub.s32 %v4208, %v4210
    %v4212 = vrot.slane %v4204, %v4211
    %v4214 = vunpack.c.l.s4 1934713408
    %v4215 = vunpack.c.0.s8 %v4214
    %v4216 = vlaneseq
    %v4217 = vshrl.u32 %v4216, 7
    %v4218 = vsub.s32 %v4215, %v4217
    %v4219 = vrot.slane %v4205, %v4218
    %v4220 = vcombine.low %v4187, %v4203
    %v4221 = vcombine.high %v4187, %v4203
    %v4223 = vunpack.c.l.s4 1934713408
    %v4224 = vunpack.c.0.s8 %v4223
    %v4225 = vlaneseq
    %v4226 = vshrl.u32 %v4225, 7
    %v4227 = vsub.s32 %v4224, %v4226
    %v4228 = vrot.slane %v4220, %v4227
    %v4230 = vunpack.c.l.s4 1934713408
    %v4231 = vunpack.c.0.s8 %v4230
    %v4232 = vlaneseq
    %v4233 = vshrl.u32 %v4232, 7
    %v4234 = vsub.s32 %v4231, %v4233
    %v4235 = vrot.slane %v4221, %v4234
    %v4236 = vcombine.high %v4212, 0.0
    %v4237 = vcombine.high %v4219, 0.0
    %v4238 = vcombine.high %v4228, 0.0
    %v4239 = vcombine.high %v4235, 0.0
    %4241 = vrot.lane.b32.xlu0 %v4168, 16
    %v4242 = vpop.permute.xlu0 %4241
    %4245 = vrot.lane.b32.xlu0 %v4151, 32
    %v4246 = vpop.permute.xlu0 %4245
    %4249 = vrot.lane.b32.xlu0 %v4169, 48
    %v4250 = vpop.permute.xlu0 %4249
    %4253 = vrot.lane.b32.xlu0 %v4160, 64
    %v4254 = vpop.permute.xlu0 %4253
    %4257 = vrot.lane.b32.xlu0 %v4170, 80
    %v4258 = vpop.permute.xlu0 %4257
    %4261 = vrot.lane.b32.xlu0 %v4167, 96
    %v4262 = vpop.permute.xlu0 %4261
    %4265 = vrot.lane.b32.xlu0 %v4171, 112
    %v4266 = vpop.permute.xlu0 %4265
    %4269 = vrot.lane.b32.xlu0 %v4236, 16
    %v4270 = vpop.permute.xlu0 %4269
    %4273 = vrot.lane.b32.xlu0 %v4219, 32
    %v4274 = vpop.permute.xlu0 %4273
    %4277 = vrot.lane.b32.xlu0 %v4237, 48
    %v4278 = vpop.permute.xlu0 %4277
    %4281 = vrot.lane.b32.xlu0 %v4228, 64
    %v4282 = vpop.permute.xlu0 %4281
    %4285 = vrot.lane.b32.xlu0 %v4238, 80
    %v4286 = vpop.permute.xlu0 %4285
    %4289 = vrot.lane.b32.xlu0 %v4235, 96
    %v4290 = vpop.permute.xlu0 %4289
    %4293 = vrot.lane.b32.xlu0 %v4239, 112
    %v4294 = vpop.permute.xlu0 %4293
    %v4296 = vsel %vm221, %v4144, %v4242
    %v4297 = vsel %vm223, %v4296, %v4246
    %v4298 = vsel %vm225, %v4297, %v4250
    %v4299 = vsel %vm227, %v4298, %v4254
    %v4300 = vsel %vm229, %v4299, %v4258
    %v4301 = vsel %vm231, %v4300, %v4262
    %v4302 = vsel %vm233, %v4301, %v4266
    %v4303 = vsel %vm221, %v4212, %v4270
    %v4304 = vsel %vm223, %v4303, %v4274
    %v4305 = vsel %vm225, %v4304, %v4278
    %v4306 = vsel %vm227, %v4305, %v4282
    %v4307 = vsel %vm229, %v4306, %v4286
    %v4308 = vsel %vm231, %v4307, %v4290
    %v4309 = vsel %vm233, %v4308, %v4294
    %v4312 = vrot.slane %v2680, 4
    %v4313 = vrot.slane %v2687, 4
    %v4318 = vrot.slane %v3148, 4
    %v4319 = vrot.slane %v3155, 4
    %v4324 = vrot.slane %v3608, 4
    %v4325 = vrot.slane %v3615, 4
    %v4330 = vrot.slane %v4072, 4
    %v4331 = vrot.slane %v4079, 4
    %v4334 = vsel %vm2128, %v2442, %v4312
    %v4335 = vsel %vm2128, %v2449, %v4313
    %v4336 = vsel %vm2128, %v2910, %v4318
    %v4337 = vsel %vm2128, %v2917, %v4319
    %v4338 = vsel %vm2128, %v3378, %v4324
    %v4339 = vsel %vm2128, %v3385, %v4325
    %v4340 = vsel %vm2128, %v3842, %v4330
    %v4341 = vsel %vm2128, %v3849, %v4331
    %v4343 = vsel %vm2128, %v4302, 0
    %v4346 = vsel %vm2128, %v4309, 0
    %4348 = vmatprep.subr.mxu0 %v4335
    %4349 = vmatpush1.msra.mxu0 %v4334
    %4350 = vmatprep.subr.mxu0 %v4337
    %4351 = vmatpush1.msra.mxu0 %v4336
    %4352 = vmatprep.subr.mxu0 %v4339
    %4353 = vmatpush1.msra.mxu0 %v4338
    %4354 = vmatprep.subr.mxu0 %v4341
    %4355 = vmatpush1.msra.mxu0 %v4340
    %4356 = vmatprep.subr.mxu0 %v4346
    %4357 = vmatpush1.msra.mxu0 %v4343
    %4358 = vmatprep.subr.mxu0 0.0
    %4359 = vmatpush1.msra.mxu0 0.0
    %4360 = vmatprep.subr.mxu0 0.0
    %4361 = vmatpush1.msra.mxu0 0.0
    %4362 = vmatprep.subr.mxu0 0.0
    %4363 = vmatpush1.msra.mxu0 0.0
    %4364 = vmatprep.subr.mxu0 0.0
    %4365 = vmatpush1.msra.mxu0 0.0
    %4366 = vmatprep.subr.mxu0 0.0
    %4367 = vmatpush1.msra.mxu0 0.0
    %4368 = vmatprep.subr.mxu0 0.0
    %4369 = vmatpush1.msra.mxu0 0.0
    %4370 = vmatprep.subr.mxu0 0.0
    %4371 = vmatpush1.msra.mxu0 0.0
    %4372 = vmatprep.subr.mxu0 0.0
    %4373 = vmatpush1.msra.mxu0 0.0
    %4374 = vmatprep.subr.mxu0 0.0
    %4375 = vmatpush1.msra.mxu0 0.0
    %4376 = vmatprep.subr.mxu0 0.0
    %4377 = vmatpush1.msra.mxu0 0.0
    %4378 = vmatprep.subr.mxu0 0.0
    %4379 = vmatpush1.msra.mxu0 0.0
    %4380 = vmatprep.subr.mxu0 0.0
    %4381 = vmatpush1.msra.mxu0 0.0
    %4382 = vmatprep.subr.mxu0 0.0
    %4383 = vmatpush1.msra.mxu0 0.0
    %4384 = vmatprep.subr.mxu0 0.0
    %4385 = vmatpush1.msra.mxu0 0.0
    %4386 = vmatprep.subr.mxu0 0.0
    %4387 = vmatpush1.msra.mxu0 0.0
    %4388 = vmatprep.subr.mxu0 0.0
    %4389 = vmatpush1.msra.mxu0 0.0
    %4390 = vmatprep.subr.mxu0 0.0
    %4391 = vmatpush1.msra.mxu0 0.0
    %4392 = vmatprep.subr.mxu0 0.0
    %4393 = vmatpush1.msra.mxu0 0.0
    %4394 = vmatprep.subr.mxu0 0.0
    %4395 = vmatpush1.msra.mxu0 0.0
    %4396 = vmatprep.subr.mxu0 0.0
    %4397 = vmatpush1.msra.mxu0 0.0
    %4398 = vmatprep.subr.mxu0 0.0
    %4399 = vmatpush1.msra.mxu0 0.0
    %4400 = vmatprep.subr.mxu0 0.0
    %4401 = vmatpush1.msra.mxu0 0.0
    %4402 = vmatprep.subr.mxu0 0.0
    %4403 = vmatpush1.msra.mxu0 0.0
    %4404 = vmatprep.subr.mxu0 0.0
    %4405 = vmatpush1.msra.mxu0 0.0
    %4406 = vmatprep.subr.mxu0 0.0
    %4407 = vmatpush1.msra.mxu0 0.0
    %4408 = vmatprep.subr.mxu0 0.0
    %4409 = vmatpush1.msra.mxu0 0.0
    %4410 = vmatprep.subr.mxu0 0.0
    %4411 = vmatpush1.msra.mxu0 0.0
    %4412 = vmatprep.mubr.f32.mxu0 0.0
    %4413 = vmatmul.mubr.f32.gmra.mrb[0].mxu0 %v2144
    %v4414 = vpop.f32.mrb[0].mxu0
    %v4415 = vadd.f32 %v2140, %v4414
    %v4416 = vpop.f32.mrb[0].mxu0
    %v4417 = vadd.f32 %v2140, %v4416
    %4418 = vdwg.mxu0
    %vm4419 = vcmp.ge.f32.partialorder %v4415, 0.0
    %vm4420 = vcmp.ge.f32.partialorder %v4417, 0.0
    %v4421 = vmul.f32 %v4415, 0.2
    %v4422 = vmul.f32 %v4417, 0.2
    %v4423 = vsel %vm4419, %v4415, %v4421
    %v4424 = vsel %vm4420, %v4417, %v4422
    %s4425 = scalar_lea.vmem [#allocation2], 16
    %4426 = vst [vmem:[%s4425] sm:$0xff] %v4423
    %4427 = vst [vmem:[%s4425 + $0x8] sm:$0xff] %v4424
    // Predicated region
    $region14: #{tpu_custom_call.1} parent=1 // pred_check
      _
    $region15: #{tpu_custom_call.1} parent=1 // pred_check_branch
      %4429 = sbr.rel (0) target = $region17
    $region16: #{tpu_custom_call.1} parent=1 // pred_region
      %s4431 = ssub.s32 512, 512
      %4432 = vsyncadd [#allocation3], %s4431
      %s4433 = sshll.u32 [#allocation2], 4
      %s4434 = int_to_ptr.vmem [resolvable:$true] %s4433
      %4439 = dma.vmem_to_hbm [thread:$0]  %s4434, 512, %s3, [#allocation3], 256, 256, 16
    $region17: #{tpu_custom_call.1} parent=1 // pred_fallthru
      _
    // Predicated region
    $region18: #{tpu_custom_call.1} parent=1 // pred_check
      _
    $region19: #{tpu_custom_call.1} parent=1 // pred_check_branch
      %4441 = sbr.rel (0) target = $region21
    $region20: #{tpu_custom_call.1} parent=1 // pred_region
      %4442 = dma.done [#allocation3], 512
    $region21: #{tpu_custom_call.1} parent=1 // pred_fallthru
      _
    %4443 = vsyncpa [#allocation3], 1

</llo_original>
